<compile_context>
chip_gen: v5e
topology: v5e:2x2
jax: 0.10.0
libtpu: 0.0.40
codegen_flags: <defaults>
</compile_context>

<pallas_src>
import jax
import jax.numpy as jnp
from jax.experimental import pallas as pl
from jax.experimental.pallas import tpu as pltpu


# ----------------------------------------------------------------------------- #
# Single fused kernel: conv+ReLU -> Linear+ReLU -> LSTM recurrence -> fc
# ----------------------------------------------------------------------------- #
def _captioning_kernel(patches_ref, wbd_ref, cb_ref, encw_ref, eb_ref,
                       emb_ref, wih_ref, gb_ref, whh_ref, fcw_ref, fcb_ref,
                       out_ref, hseq_ref):
    """Shapes (all blocks == full arrays, grid-less call):
      patches: (B*OH, OW*Kpad) f32   im2col rows, one row per (b, oh)
      wbd:     (OW*Kpad, OW*Cout) bf16   block-diagonal conv filter
      cb:      (1, OW*Cout) f32          conv bias tiled over OW
      encw:    (OH, OW*Cout, H) bf16     encoder weight, NHWC-permuted, split by oh
      eb:      (1, H) f32
      emb:     (T*B, E) f32              time-major embedded captions
      wih:     (E, 4H) bf16              W_ih^T
      gb:      (1, 4H) f32               b_ih + b_hh
      whh:     (H, 4H) bf16              W_hh^T
      fcw:     (H, V) bf16               W_fc^T
      fcb:     (1, V) f32
      out:     (B, T, V) f32
      hseq (scratch): (B, T, H) f32
    """
    B, T, V = out_ref.shape
    OH = encw_ref.shape[0]
    H = encw_ref.shape[2]
    f32, bf16 = jnp.float32, jnp.bfloat16

    # --- encoder: Conv2d(3,16,k3,s2,p1) + ReLU as one lane-dense matmul -------
    conv = jnp.dot(patches_ref[...].astype(bf16), wbd_ref[...],
                   preferred_element_type=f32)                  # (B*OH, OW*Cout)
    conv = jnp.maximum(conv + cb_ref[...], 0.0)
    conv = conv.reshape(B, OH, conv.shape[-1])                  # split leading dim (free)

    # --- encoder: Linear(Cout*OH*OW, H) + ReLU, accumulated over OH -----------
    feat = jnp.zeros((B, H), f32)
    for oh in range(OH):                                        # static trip count
        feat = feat + jnp.dot(conv[:, oh, :].astype(bf16), encw_ref[oh],
                              preferred_element_type=f32)
    feat = jnp.maximum(feat + eb_ref[...], 0.0)                 # (B, H) == h0

    # --- hoisted LSTM input projection for ALL timesteps (one MXU push) -------
    xg = jnp.dot(emb_ref[...].astype(bf16), wih_ref[...],
                 preferred_element_type=f32) + gb_ref[...]      # (T*B, 4H), t-major

    # --- recurrence: h/c live in vregs, W_hh re-read per step (low vreg use) --
    h = feat
    c = jnp.zeros_like(h)
    for t in range(T):
        gates = xg[t * B:(t + 1) * B, :] + jnp.dot(
            h.astype(bf16), whh_ref[...], preferred_element_type=f32)
        i_g = jax.nn.sigmoid(gates[:, 0 * H:1 * H])
        f_g = jax.nn.sigmoid(gates[:, 1 * H:2 * H])
        g_g = jnp.tanh(gates[:, 2 * H:3 * H])
        o_g = jax.nn.sigmoid(gates[:, 3 * H:4 * H])
        c = f_g * c + i_g * g_g
        h = o_g * jnp.tanh(c)
        hseq_ref[:, t, :] = h          # stage into (B,T,H) scratch -> (b,t) order

    # --- batched final fc: one (B*T,H)@(H,V) matmul, dense (B,T,V) store ------
    h_bt = hseq_ref[...].reshape(B * T, H)
    logits = jnp.dot(h_bt.astype(bf16), fcw_ref[...],
                     preferred_element_type=f32) + fcb_ref[...]
    out_ref[...] = logits.reshape(B, T, V)


# ----------------------------------------------------------------------------- #
# One-time weight re-layout (reused across forward calls)
# ----------------------------------------------------------------------------- #
def prepare_params(params, *, OH, OW):
    f32, bf16 = jnp.float32, jnp.bfloat16
    conv_w, conv_b = params["conv_w"], params["conv_b"]
    Cout, Cin, KH, KW = conv_w.shape
    K = Cin * KH * KW
    Kpad = ((K + 7) // 8) * 8                                   # 27 -> 32

    # (kh, kw, c) patch order, padded contraction, block-diagonal over OW so the
    # conv matmul emits (B*OH, OW*Cout) directly in NHWC-flatten order.
    wc = conv_w.transpose(2, 3, 1, 0).reshape(K, Cout)
    wc = jnp.pad(wc, ((0, Kpad - K), (0, 0)))
    wbd = jnp.kron(jnp.eye(OW, dtype=f32), wc).astype(bf16)     # (OW*Kpad, OW*Cout)
    cbias = jnp.tile(conv_b, OW).reshape(1, OW * Cout).astype(f32)

    hidden = params["enc_b"].shape[0]
    # PyTorch flattens the conv output as (c, oh, ow); permute the encoder weight
    # to the kernel's (oh, ow, c) layout and split by oh for the accumulation.
    encw = (params["enc_w"].reshape(hidden, Cout, OH, OW)
            .transpose(2, 3, 1, 0).reshape(OH, OW * Cout, hidden).astype(bf16))
    encb = params["enc_b"].reshape(1, hidden).astype(f32)

    H4 = params["lstm_b_ih"].shape[0]
    vocab = params["fc_b"].shape[0]
    return {
        "wbd": wbd, "cbias": cbias, "encw": encw, "encb": encb,
        "emb_w": params["emb_w"].astype(f32),
        "wih_t": params["lstm_w_ih"].T.astype(bf16),            # (E, 4H)
        "gate_b": (params["lstm_b_ih"] + params["lstm_b_hh"]).reshape(1, H4).astype(f32),
        "whh_t": params["lstm_w_hh"].T.astype(bf16),            # (H, 4H)
        "fcw_t": params["fc_w"].T.astype(bf16),                 # (H, V)
        "fcb": params["fc_b"].reshape(1, vocab).astype(f32),
    }


# ----------------------------------------------------------------------------- #
# Full model forward (mirrors ImageCaptioningModel.forward)
# ----------------------------------------------------------------------------- #
def image_captioning_forward(images, captions, prep):
    B, Cin, Himg, Wimg = images.shape
    T = captions.shape[1]
    OH = (Himg + 2 - 3) // 2 + 1
    OW = (Wimg + 2 - 3) // 2 + 1
    Kpad = prep["wbd"].shape[0] // OW
    H = prep["encb"].shape[-1]
    V = prep["fcb"].shape[-1]

    # im2col (XLA glue): patches row (b, oh) holds the OW patches of that output
    # row concatenated, each zero-padded from 9*Cin to Kpad entries.
    x = jnp.transpose(images, (0, 2, 3, 1))                     # NHWC
    xp = jnp.pad(x, ((0, 0), (1, 1), (1, 1), (0, 0)))
    cols = [xp[:, i:i + 2 * OH:2, j:j + 2 * OW:2, :]
            for i in range(3) for j in range(3)]                # each (B, OH, OW, Cin)
    patches = jnp.stack(cols, axis=3).reshape(B, OH, OW, 9 * Cin)   # (kh,kw,c) order
    patches = jnp.pad(patches, ((0, 0), (0, 0), (0, 0), (0, Kpad - 9 * Cin)))
    patches = patches.reshape(B * OH, OW * Kpad)

    # Embedding lookup, time-major, pre-flattened so the kernel needs no
    # sublane-compacting reshape.
    emb = prep["emb_w"][captions.T].reshape(T * B, -1)          # (T*B, E)

    return pl.pallas_call(
        _captioning_kernel,
        out_shape=jax.ShapeDtypeStruct((B, T, V), jnp.float32),
        scratch_shapes=[pltpu.VMEM((B, T, H), jnp.float32)],
    )(patches, prep["wbd"], prep["cbias"], prep["encw"], prep["encb"],
      emb, prep["wih_t"], prep["gate_b"], prep["whh_t"],
      prep["fcw_t"], prep["fcb"])


# ----------------------------------------------------------------------------- #
# Pure-JAX f32 reference for validation
# ----------------------------------------------------------------------------- #
def reference_forward(images, captions, params):
    conv = jax.lax.conv_general_dilated(
        images, params["conv_w"], window_strides=(2, 2), padding=((1, 1), (1, 1)),
        dimension_numbers=("NCHW", "OIHW", "NCHW"))
    conv = jnp.maximum(conv + params["conv_b"][None, :, None, None], 0.0)
    flat = conv.reshape(conv.shape[0], -1)
    features = jnp.maximum(flat @ params["enc_w"].T + params["enc_b"], 0.0)

    emb = params["emb_w"][captions]                             # (B, T, E)
    H = features.shape[-1]

    def step(carry, x_t):
        h, c = carry
        gates = (x_t @ params["lstm_w_ih"].T + params["lstm_b_ih"]
                 + h @ params["lstm_w_hh"].T + params["lstm_b_hh"])
        i = jax.nn.sigmoid(gates[:, 0 * H:1 * H])
        f = jax.nn.sigmoid(gates[:, 1 * H:2 * H])
        g = jnp.tanh(gates[:, 2 * H:3 * H])
        o = jax.nn.sigmoid(gates[:, 3 * H:4 * H])
        c_new = f * c + i * g
        h_new = o * jnp.tanh(c_new)
        return (h_new, c_new), h_new

    x_tbe = jnp.transpose(emb, (1, 0, 2))
    (_, _), h_seq = jax.lax.scan(step, (features, jnp.zeros_like(features)), x_tbe)
    h_seq = jnp.transpose(h_seq, (1, 0, 2))                     # (B, T, H)
    return h_seq @ params["fc_w"].T + params["fc_b"]


# ----------------------------------------------------------------------------- #
if __name__ == "__main__":
    # Small shapes consistent with the module's structure.
    B, Cin, Himg, Wimg = 2, 3, 16, 16
    Cout, OH, OW = 16, 8, 8
    hidden_dim = 128
    embedding_dim = 128
    vocab_size = 256
    T = 8

    key = jax.random.PRNGKey(0)
    ks = jax.random.split(key, 12)
    scale = 0.05
    params = {
        "conv_w": scale * jax.random.normal(ks[0], (Cout, Cin, 3, 3), jnp.float32),
        "conv_b": scale * jax.random.normal(ks[1], (Cout,), jnp.float32),
        "enc_w": scale * jax.random.normal(ks[2], (hidden_dim, Cout * OH * OW), jnp.float32),
        "enc_b": scale * jax.random.normal(ks[3], (hidden_dim,), jnp.float32),
        "emb_w": scale * jax.random.normal(ks[4], (vocab_size, embedding_dim), jnp.float32),
        "lstm_w_ih": scale * jax.random.normal(ks[5], (4 * hidden_dim, embedding_dim), jnp.float32),
        "lstm_w_hh": scale * jax.random.normal(ks[6], (4 * hidden_dim, hidden_dim), jnp.float32),
        "lstm_b_ih": scale * jax.random.normal(ks[7], (4 * hidden_dim,), jnp.float32),
        "lstm_b_hh": scale * jax.random.normal(ks[8], (4 * hidden_dim,), jnp.float32),
        "fc_w": scale * jax.random.normal(ks[9], (vocab_size, hidden_dim), jnp.float32),
        "fc_b": scale * jax.random.normal(ks[10], (vocab_size,), jnp.float32),
    }

    images = jax.random.normal(ks[11], (B, Cin, Himg, Wimg), jnp.float32)
    captions = jax.random.randint(jax.random.PRNGKey(1), (B, T), 0, vocab_size, jnp.int32)

    prep = prepare_params(params, OH=OH, OW=OW)        # one-time weight re-layout
    out = jax.jit(image_captioning_forward)(images, captions, prep)
    out = jax.block_until_ready(out)

    ref = reference_forward(images, captions, params)
    assert out.shape == (B, T, vocab_size), out.shape
    assert bool(jnp.all(jnp.isfinite(out)))
    # bf16 MXU operands (f32 accumulation) -> slightly wider tolerance than pure f32.
    assert bool(jnp.allclose(out, ref, rtol=2e-2, atol=2e-2)), \
        f"max abs diff {float(jnp.max(jnp.abs(out - ref)))}"

    print("KERNEL_OK")
</pallas_src>

<mosaic_0001>
module attributes {stable_mosaic.version = 11 : i64} {
  func.func @_captioning_kernel(%arg0: memref<16x256xf32, #tpu.memory_space<vmem>>, %arg1: memref<256x128xbf16, #tpu.memory_space<vmem>>, %arg2: memref<1x128xf32, #tpu.memory_space<vmem>>, %arg3: memref<8x128x128xbf16, #tpu.memory_space<vmem>>, %arg4: memref<1x128xf32, #tpu.memory_space<vmem>>, %arg5: memref<16x128xf32, #tpu.memory_space<vmem>>, %arg6: memref<128x512xbf16, #tpu.memory_space<vmem>>, %arg7: memref<1x512xf32, #tpu.memory_space<vmem>>, %arg8: memref<128x512xbf16, #tpu.memory_space<vmem>>, %arg9: memref<128x256xbf16, #tpu.memory_space<vmem>>, %arg10: memref<1x256xf32, #tpu.memory_space<vmem>>, %arg11: memref<2x8x256xf32, #tpu.memory_space<vmem>>, %arg12: memref<2x8x128xf32, #tpu.memory_space<vmem>>) attributes {dimension_semantics = [], scalar_prefetch = 0 : i64, scratch_operands = 1 : i64, tpu.core_type = #tpu.core_type<tc>} {
    %c0 = arith.constant 0 : index
    %c0_0 = arith.constant 0 : index
    %0 = vector.load %arg0[%c0, %c0_0] : memref<16x256xf32, #tpu.memory_space<vmem>>, vector<16x256xf32>
    %1 = arith.truncf %0 : vector<16x256xf32> to vector<16x256xbf16>
    %c0_1 = arith.constant 0 : index
    %c0_2 = arith.constant 0 : index
    %2 = vector.load %arg1[%c0_1, %c0_2] : memref<256x128xbf16, #tpu.memory_space<vmem>>, vector<256x128xbf16>
    %cst = arith.constant dense<0.000000e+00> : vector<16x128xf32>
    %3 = tpu.matmul %1, %2, %cst {dimension_numbers = #tpu.dot_dimension_numbers<[1], [0], [0], [1], [0, 0, 1, 1], [], []>} : vector<16x256xbf16>, vector<256x128xbf16>, vector<16x128xf32> -> vector<16x128xf32>
    %c0_3 = arith.constant 0 : index
    %c0_4 = arith.constant 0 : index
    %4 = vector.load %arg2[%c0_3, %c0_4] : memref<1x128xf32, #tpu.memory_space<vmem>>, vector<1x128xf32>
    %5 = vector.broadcast %4 : vector<1x128xf32> to vector<16x128xf32>
    %6 = arith.addf %3, %5 : vector<16x128xf32>
    %cst_5 = arith.constant 0.000000e+00 : f32
    %7 = vector.broadcast %cst_5 : f32 to vector<16x128xf32>
    %8 = arith.maximumf %6, %7 : vector<16x128xf32>
    %9 = vector.shape_cast %8 : vector<16x128xf32> to vector<2x8x128xf32>
    %cst_6 = arith.constant 0.000000e+00 : f32
    %10 = vector.broadcast %cst_6 : f32 to vector<2x128xf32>
    %11 = vector.extract_strided_slice %9 {offsets = [0, 0, 0], sizes = [2, 1, 128], strides = [1, 1, 1]} : vector<2x8x128xf32> to vector<2x1x128xf32>
    %12 = vector.shape_cast %11 : vector<2x1x128xf32> to vector<2x128xf32>
    %13 = arith.truncf %12 : vector<2x128xf32> to vector<2x128xbf16>
    %c0_7 = arith.constant 0 : index
    %c0_8 = arith.constant 0 : index
    %c0_9 = arith.constant 0 : index
    %14 = vector.load %arg3[%c0_7, %c0_8, %c0_9] : memref<8x128x128xbf16, #tpu.memory_space<vmem>>, vector<1x128x128xbf16>
    %15 = vector.shape_cast %14 : vector<1x128x128xbf16> to vector<128x128xbf16>
    %cst_10 = arith.constant dense<0.000000e+00> : vector<2x128xf32>
    %16 = tpu.matmul %13, %15, %cst_10 {dimension_numbers = #tpu.dot_dimension_numbers<[1], [0], [0], [1], [0, 0, 1, 1], [], []>} : vector<2x128xbf16>, vector<128x128xbf16>, vector<2x128xf32> -> vector<2x128xf32>
    %17 = arith.addf %10, %16 : vector<2x128xf32>
    %18 = vector.extract_strided_slice %9 {offsets = [0, 1, 0], sizes = [2, 1, 128], strides = [1, 1, 1]} : vector<2x8x128xf32> to vector<2x1x128xf32>
    %19 = vector.shape_cast %18 : vector<2x1x128xf32> to vector<2x128xf32>
    %20 = arith.truncf %19 : vector<2x128xf32> to vector<2x128xbf16>
    %c1 = arith.constant 1 : index
    %c0_11 = arith.constant 0 : index
    %c0_12 = arith.constant 0 : index
    %21 = vector.load %arg3[%c1, %c0_11, %c0_12] : memref<8x128x128xbf16, #tpu.memory_space<vmem>>, vector<1x128x128xbf16>
    %22 = vector.shape_cast %21 : vector<1x128x128xbf16> to vector<128x128xbf16>
    %cst_13 = arith.constant dense<0.000000e+00> : vector<2x128xf32>
    %23 = tpu.matmul %20, %22, %cst_13 {dimension_numbers = #tpu.dot_dimension_numbers<[1], [0], [0], [1], [0, 0, 1, 1], [], []>} : vector<2x128xbf16>, vector<128x128xbf16>, vector<2x128xf32> -> vector<2x128xf32>
    %24 = arith.addf %17, %23 : vector<2x128xf32>
    %25 = vector.extract_strided_slice %9 {offsets = [0, 2, 0], sizes = [2, 1, 128], strides = [1, 1, 1]} : vector<2x8x128xf32> to vector<2x1x128xf32>
    %26 = vector.shape_cast %25 : vector<2x1x128xf32> to vector<2x128xf32>
    %27 = arith.truncf %26 : vector<2x128xf32> to vector<2x128xbf16>
    %c2 = arith.constant 2 : index
    %c0_14 = arith.constant 0 : index
    %c0_15 = arith.constant 0 : index
    %28 = vector.load %arg3[%c2, %c0_14, %c0_15] : memref<8x128x128xbf16, #tpu.memory_space<vmem>>, vector<1x128x128xbf16>
    %29 = vector.shape_cast %28 : vector<1x128x128xbf16> to vector<128x128xbf16>
    %cst_16 = arith.constant dense<0.000000e+00> : vector<2x128xf32>
    %30 = tpu.matmul %27, %29, %cst_16 {dimension_numbers = #tpu.dot_dimension_numbers<[1], [0], [0], [1], [0, 0, 1, 1], [], []>} : vector<2x128xbf16>, vector<128x128xbf16>, vector<2x128xf32> -> vector<2x128xf32>
    %31 = arith.addf %24, %30 : vector<2x128xf32>
    %32 = vector.extract_strided_slice %9 {offsets = [0, 3, 0], sizes = [2, 1, 128], strides = [1, 1, 1]} : vector<2x8x128xf32> to vector<2x1x128xf32>
    %33 = vector.shape_cast %32 : vector<2x1x128xf32> to vector<2x128xf32>
    %34 = arith.truncf %33 : vector<2x128xf32> to vector<2x128xbf16>
    %c3 = arith.constant 3 : index
    %c0_17 = arith.constant 0 : index
    %c0_18 = arith.constant 0 : index
    %35 = vector.load %arg3[%c3, %c0_17, %c0_18] : memref<8x128x128xbf16, #tpu.memory_space<vmem>>, vector<1x128x128xbf16>
    %36 = vector.shape_cast %35 : vector<1x128x128xbf16> to vector<128x128xbf16>
    %cst_19 = arith.constant dense<0.000000e+00> : vector<2x128xf32>
    %37 = tpu.matmul %34, %36, %cst_19 {dimension_numbers = #tpu.dot_dimension_numbers<[1], [0], [0], [1], [0, 0, 1, 1], [], []>} : vector<2x128xbf16>, vector<128x128xbf16>, vector<2x128xf32> -> vector<2x128xf32>
    %38 = arith.addf %31, %37 : vector<2x128xf32>
    %39 = vector.extract_strided_slice %9 {offsets = [0, 4, 0], sizes = [2, 1, 128], strides = [1, 1, 1]} : vector<2x8x128xf32> to vector<2x1x128xf32>
    %40 = vector.shape_cast %39 : vector<2x1x128xf32> to vector<2x128xf32>
    %41 = arith.truncf %40 : vector<2x128xf32> to vector<2x128xbf16>
    %c4 = arith.constant 4 : index
    %c0_20 = arith.constant 0 : index
    %c0_21 = arith.constant 0 : index
    %42 = vector.load %arg3[%c4, %c0_20, %c0_21] : memref<8x128x128xbf16, #tpu.memory_space<vmem>>, vector<1x128x128xbf16>
    %43 = vector.shape_cast %42 : vector<1x128x128xbf16> to vector<128x128xbf16>
    %cst_22 = arith.constant dense<0.000000e+00> : vector<2x128xf32>
    %44 = tpu.matmul %41, %43, %cst_22 {dimension_numbers = #tpu.dot_dimension_numbers<[1], [0], [0], [1], [0, 0, 1, 1], [], []>} : vector<2x128xbf16>, vector<128x128xbf16>, vector<2x128xf32> -> vector<2x128xf32>
    %45 = arith.addf %38, %44 : vector<2x128xf32>
    %46 = vector.extract_strided_slice %9 {offsets = [0, 5, 0], sizes = [2, 1, 128], strides = [1, 1, 1]} : vector<2x8x128xf32> to vector<2x1x128xf32>
    %47 = vector.shape_cast %46 : vector<2x1x128xf32> to vector<2x128xf32>
    %48 = arith.truncf %47 : vector<2x128xf32> to vector<2x128xbf16>
    %c5 = arith.constant 5 : index
    %c0_23 = arith.constant 0 : index
    %c0_24 = arith.constant 0 : index
    %49 = vector.load %arg3[%c5, %c0_23, %c0_24] : memref<8x128x128xbf16, #tpu.memory_space<vmem>>, vector<1x128x128xbf16>
    %50 = vector.shape_cast %49 : vector<1x128x128xbf16> to vector<128x128xbf16>
    %cst_25 = arith.constant dense<0.000000e+00> : vector<2x128xf32>
    %51 = tpu.matmul %48, %50, %cst_25 {dimension_numbers = #tpu.dot_dimension_numbers<[1], [0], [0], [1], [0, 0, 1, 1], [], []>} : vector<2x128xbf16>, vector<128x128xbf16>, vector<2x128xf32> -> vector<2x128xf32>
    %52 = arith.addf %45, %51 : vector<2x128xf32>
    %53 = vector.extract_strided_slice %9 {offsets = [0, 6, 0], sizes = [2, 1, 128], strides = [1, 1, 1]} : vector<2x8x128xf32> to vector<2x1x128xf32>
    %54 = vector.shape_cast %53 : vector<2x1x128xf32> to vector<2x128xf32>
    %55 = arith.truncf %54 : vector<2x128xf32> to vector<2x128xbf16>
    %c6 = arith.constant 6 : index
    %c0_26 = arith.constant 0 : index
    %c0_27 = arith.constant 0 : index
    %56 = vector.load %arg3[%c6, %c0_26, %c0_27] : memref<8x128x128xbf16, #tpu.memory_space<vmem>>, vector<1x128x128xbf16>
    %57 = vector.shape_cast %56 : vector<1x128x128xbf16> to vector<128x128xbf16>
    %cst_28 = arith.constant dense<0.000000e+00> : vector<2x128xf32>
    %58 = tpu.matmul %55, %57, %cst_28 {dimension_numbers = #tpu.dot_dimension_numbers<[1], [0], [0], [1], [0, 0, 1, 1], [], []>} : vector<2x128xbf16>, vector<128x128xbf16>, vector<2x128xf32> -> vector<2x128xf32>
    %59 = arith.addf %52, %58 : vector<2x128xf32>
    %60 = vector.extract_strided_slice %9 {offsets = [0, 7, 0], sizes = [2, 1, 128], strides = [1, 1, 1]} : vector<2x8x128xf32> to vector<2x1x128xf32>
    %61 = vector.shape_cast %60 : vector<2x1x128xf32> to vector<2x128xf32>
    %62 = arith.truncf %61 : vector<2x128xf32> to vector<2x128xbf16>
    %c7 = arith.constant 7 : index
    %c0_29 = arith.constant 0 : index
    %c0_30 = arith.constant 0 : index
    %63 = vector.load %arg3[%c7, %c0_29, %c0_30] : memref<8x128x128xbf16, #tpu.memory_space<vmem>>, vector<1x128x128xbf16>
    %64 = vector.shape_cast %63 : vector<1x128x128xbf16> to vector<128x128xbf16>
    %cst_31 = arith.constant dense<0.000000e+00> : vector<2x128xf32>
    %65 = tpu.matmul %62, %64, %cst_31 {dimension_numbers = #tpu.dot_dimension_numbers<[1], [0], [0], [1], [0, 0, 1, 1], [], []>} : vector<2x128xbf16>, vector<128x128xbf16>, vector<2x128xf32> -> vector<2x128xf32>
    %66 = arith.addf %59, %65 : vector<2x128xf32>
    %c0_32 = arith.constant 0 : index
    %c0_33 = arith.constant 0 : index
    %67 = vector.load %arg4[%c0_32, %c0_33] : memref<1x128xf32, #tpu.memory_space<vmem>>, vector<1x128xf32>
    %68 = vector.broadcast %67 : vector<1x128xf32> to vector<2x128xf32>
    %69 = arith.addf %66, %68 : vector<2x128xf32>
    %cst_34 = arith.constant 0.000000e+00 : f32
    %70 = vector.broadcast %cst_34 : f32 to vector<2x128xf32>
    %71 = arith.maximumf %69, %70 : vector<2x128xf32>
    %c0_35 = arith.constant 0 : index
    %c0_36 = arith.constant 0 : index
    %72 = vector.load %arg5[%c0_35, %c0_36] : memref<16x128xf32, #tpu.memory_space<vmem>>, vector<16x128xf32>
    %73 = arith.truncf %72 : vector<16x128xf32> to vector<16x128xbf16>
    %c0_37 = arith.constant 0 : index
    %c0_38 = arith.constant 0 : index
    %74 = vector.load %arg6[%c0_37, %c0_38] : memref<128x512xbf16, #tpu.memory_space<vmem>>, vector<128x512xbf16>
    %cst_39 = arith.constant dense<0.000000e+00> : vector<16x512xf32>
    %75 = tpu.matmul %73, %74, %cst_39 {dimension_numbers = #tpu.dot_dimension_numbers<[1], [0], [0], [1], [0, 0, 1, 1], [], []>} : vector<16x128xbf16>, vector<128x512xbf16>, vector<16x512xf32> -> vector<16x512xf32>
    %c0_40 = arith.constant 0 : index
    %c0_41 = arith.constant 0 : index
    %76 = vector.load %arg7[%c0_40, %c0_41] : memref<1x512xf32, #tpu.memory_space<vmem>>, vector<1x512xf32>
    %77 = vector.broadcast %76 : vector<1x512xf32> to vector<16x512xf32>
    %78 = arith.addf %75, %77 : vector<16x512xf32>
    %cst_42 = arith.constant 0.000000e+00 : f32
    %79 = vector.broadcast %cst_42 : f32 to vector<2x128xf32>
    %80 = vector.extract_strided_slice %78 {offsets = [0, 0], sizes = [2, 512], strides = [1, 1]} : vector<16x512xf32> to vector<2x512xf32>
    %81 = arith.truncf %71 : vector<2x128xf32> to vector<2x128xbf16>
    %c0_43 = arith.constant 0 : index
    %c0_44 = arith.constant 0 : index
    %82 = vector.load %arg8[%c0_43, %c0_44] : memref<128x512xbf16, #tpu.memory_space<vmem>>, vector<128x512xbf16>
    %cst_45 = arith.constant dense<0.000000e+00> : vector<2x512xf32>
    %83 = tpu.matmul %81, %82, %cst_45 {dimension_numbers = #tpu.dot_dimension_numbers<[1], [0], [0], [1], [0, 0, 1, 1], [], []>} : vector<2x128xbf16>, vector<128x512xbf16>, vector<2x512xf32> -> vector<2x512xf32>
    %84 = arith.addf %80, %83 : vector<2x512xf32>
    %85 = vector.extract_strided_slice %84 {offsets = [0, 0], sizes = [2, 128], strides = [1, 1]} : vector<2x512xf32> to vector<2x128xf32>
    %86 = arith.negf %85 : vector<2x128xf32>
    %87 = math.exp %86 : vector<2x128xf32>
    %cst_46 = arith.constant 1.000000e+00 : f32
    %88 = vector.broadcast %cst_46 : f32 to vector<2x128xf32>
    %89 = arith.addf %88, %87 : vector<2x128xf32>
    %90 = arith.divf %88, %89 : vector<2x128xf32>
    %91 = vector.extract_strided_slice %84 {offsets = [0, 128], sizes = [2, 128], strides = [1, 1]} : vector<2x512xf32> to vector<2x128xf32>
    %92 = arith.negf %91 : vector<2x128xf32>
    %93 = math.exp %92 : vector<2x128xf32>
    %cst_47 = arith.constant 1.000000e+00 : f32
    %94 = vector.broadcast %cst_47 : f32 to vector<2x128xf32>
    %95 = arith.addf %94, %93 : vector<2x128xf32>
    %96 = arith.divf %94, %95 : vector<2x128xf32>
    %97 = vector.extract_strided_slice %84 {offsets = [0, 256], sizes = [2, 128], strides = [1, 1]} : vector<2x512xf32> to vector<2x128xf32>
    %98 = math.tanh %97 : vector<2x128xf32>
    %99 = vector.extract_strided_slice %84 {offsets = [0, 384], sizes = [2, 128], strides = [1, 1]} : vector<2x512xf32> to vector<2x128xf32>
    %100 = arith.negf %99 : vector<2x128xf32>
    %101 = math.exp %100 : vector<2x128xf32>
    %cst_48 = arith.constant 1.000000e+00 : f32
    %102 = vector.broadcast %cst_48 : f32 to vector<2x128xf32>
    %103 = arith.addf %102, %101 : vector<2x128xf32>
    %104 = arith.divf %102, %103 : vector<2x128xf32>
    %105 = arith.mulf %96, %79 : vector<2x128xf32>
    %106 = arith.mulf %90, %98 : vector<2x128xf32>
    %107 = arith.addf %105, %106 : vector<2x128xf32>
    %108 = math.tanh %107 : vector<2x128xf32>
    %109 = arith.mulf %104, %108 : vector<2x128xf32>
    %c0_49 = arith.constant 0 : index
    %c0_50 = arith.constant 0 : index
    %c0_51 = arith.constant 0 : index
    %110 = vector.load %arg12[%c0_49, %c0_50, %c0_51] : memref<2x8x128xf32, #tpu.memory_space<vmem>>, vector<2x1x128xf32>
    %111 = vector.shape_cast %110 : vector<2x1x128xf32> to vector<2x128xf32>
    %112 = vector.shape_cast %109 : vector<2x128xf32> to vector<2x1x128xf32>
    tpu.vector_store %arg12[%c0_49, %c0_50, %c0_51], %112 {strides = array<i32>} : memref<2x8x128xf32, #tpu.memory_space<vmem>>, vector<2x1x128xf32>,
    %113 = vector.extract_strided_slice %78 {offsets = [2, 0], sizes = [2, 512], strides = [1, 1]} : vector<16x512xf32> to vector<2x512xf32>
    %114 = arith.truncf %109 : vector<2x128xf32> to vector<2x128xbf16>
    %c0_52 = arith.constant 0 : index
    %c0_53 = arith.constant 0 : index
    %115 = vector.load %arg8[%c0_52, %c0_53] : memref<128x512xbf16, #tpu.memory_space<vmem>>, vector<128x512xbf16>
    %cst_54 = arith.constant dense<0.000000e+00> : vector<2x512xf32>
    %116 = tpu.matmul %114, %115, %cst_54 {dimension_numbers = #tpu.dot_dimension_numbers<[1], [0], [0], [1], [0, 0, 1, 1], [], []>} : vector<2x128xbf16>, vector<128x512xbf16>, vector<2x512xf32> -> vector<2x512xf32>
    %117 = arith.addf %113, %116 : vector<2x512xf32>
    %118 = vector.extract_strided_slice %117 {offsets = [0, 0], sizes = [2, 128], strides = [1, 1]} : vector<2x512xf32> to vector<2x128xf32>
    %119 = arith.negf %118 : vector<2x128xf32>
    %120 = math.exp %119 : vector<2x128xf32>
    %cst_55 = arith.constant 1.000000e+00 : f32
    %121 = vector.broadcast %cst_55 : f32 to vector<2x128xf32>
    %122 = arith.addf %121, %120 : vector<2x128xf32>
    %123 = arith.divf %121, %122 : vector<2x128xf32>
    %124 = vector.extract_strided_slice %117 {offsets = [0, 128], sizes = [2, 128], strides = [1, 1]} : vector<2x512xf32> to vector<2x128xf32>
    %125 = arith.negf %124 : vector<2x128xf32>
    %126 = math.exp %125 : vector<2x128xf32>
    %cst_56 = arith.constant 1.000000e+00 : f32
    %127 = vector.broadcast %cst_56 : f32 to vector<2x128xf32>
    %128 = arith.addf %127, %126 : vector<2x128xf32>
    %129 = arith.divf %127, %128 : vector<2x128xf32>
    %130 = vector.extract_strided_slice %117 {offsets = [0, 256], sizes = [2, 128], strides = [1, 1]} : vector<2x512xf32> to vector<2x128xf32>
    %131 = math.tanh %130 : vector<2x128xf32>
    %132 = vector.extract_strided_slice %117 {offsets = [0, 384], sizes = [2, 128], strides = [1, 1]} : vector<2x512xf32> to vector<2x128xf32>
    %133 = arith.negf %132 : vector<2x128xf32>
    %134 = math.exp %133 : vector<2x128xf32>
    %cst_57 = arith.constant 1.000000e+00 : f32
    %135 = vector.broadcast %cst_57 : f32 to vector<2x128xf32>
    %136 = arith.addf %135, %134 : vector<2x128xf32>
    %137 = arith.divf %135, %136 : vector<2x128xf32>
    %138 = arith.mulf %129, %107 : vector<2x128xf32>
    %139 = arith.mulf %123, %131 : vector<2x128xf32>
    %140 = arith.addf %138, %139 : vector<2x128xf32>
    %141 = math.tanh %140 : vector<2x128xf32>
    %142 = arith.mulf %137, %141 : vector<2x128xf32>
    %c0_58 = arith.constant 0 : index
    %c1_59 = arith.constant 1 : index
    %c0_60 = arith.constant 0 : index
    %143 = vector.load %arg12[%c0_58, %c1_59, %c0_60] : memref<2x8x128xf32, #tpu.memory_space<vmem>>, vector<2x1x128xf32>
    %144 = vector.shape_cast %143 : vector<2x1x128xf32> to vector<2x128xf32>
    %145 = vector.shape_cast %142 : vector<2x128xf32> to vector<2x1x128xf32>
    tpu.vector_store %arg12[%c0_58, %c1_59, %c0_60], %145 {strides = array<i32>} : memref<2x8x128xf32, #tpu.memory_space<vmem>>, vector<2x1x128xf32>,
    %146 = vector.extract_strided_slice %78 {offsets = [4, 0], sizes = [2, 512], strides = [1, 1]} : vector<16x512xf32> to vector<2x512xf32>
    %147 = arith.truncf %142 : vector<2x128xf32> to vector<2x128xbf16>
    %c0_61 = arith.constant 0 : index
    %c0_62 = arith.constant 0 : index
    %148 = vector.load %arg8[%c0_61, %c0_62] : memref<128x512xbf16, #tpu.memory_space<vmem>>, vector<128x512xbf16>
    %cst_63 = arith.constant dense<0.000000e+00> : vector<2x512xf32>
    %149 = tpu.matmul %147, %148, %cst_63 {dimension_numbers = #tpu.dot_dimension_numbers<[1], [0], [0], [1], [0, 0, 1, 1], [], []>} : vector<2x128xbf16>, vector<128x512xbf16>, vector<2x512xf32> -> vector<2x512xf32>
    %150 = arith.addf %146, %149 : vector<2x512xf32>
    %151 = vector.extract_strided_slice %150 {offsets = [0, 0], sizes = [2, 128], strides = [1, 1]} : vector<2x512xf32> to vector<2x128xf32>
    %152 = arith.negf %151 : vector<2x128xf32>
    %153 = math.exp %152 : vector<2x128xf32>
    %cst_64 = arith.constant 1.000000e+00 : f32
    %154 = vector.broadcast %cst_64 : f32 to vector<2x128xf32>
    %155 = arith.addf %154, %153 : vector<2x128xf32>
    %156 = arith.divf %154, %155 : vector<2x128xf32>
    %157 = vector.extract_strided_slice %150 {offsets = [0, 128], sizes = [2, 128], strides = [1, 1]} : vector<2x512xf32> to vector<2x128xf32>
    %158 = arith.negf %157 : vector<2x128xf32>
    %159 = math.exp %158 : vector<2x128xf32>
    %cst_65 = arith.constant 1.000000e+00 : f32
    %160 = vector.broadcast %cst_65 : f32 to vector<2x128xf32>
    %161 = arith.addf %160, %159 : vector<2x128xf32>
    %162 = arith.divf %160, %161 : vector<2x128xf32>
    %163 = vector.extract_strided_slice %150 {offsets = [0, 256], sizes = [2, 128], strides = [1, 1]} : vector<2x512xf32> to vector<2x128xf32>
    %164 = math.tanh %163 : vector<2x128xf32>
    %165 = vector.extract_strided_slice %150 {offsets = [0, 384], sizes = [2, 128], strides = [1, 1]} : vector<2x512xf32> to vector<2x128xf32>
    %166 = arith.negf %165 : vector<2x128xf32>
    %167 = math.exp %166 : vector<2x128xf32>
    %cst_66 = arith.constant 1.000000e+00 : f32
    %168 = vector.broadcast %cst_66 : f32 to vector<2x128xf32>
    %169 = arith.addf %168, %167 : vector<2x128xf32>
    %170 = arith.divf %168, %169 : vector<2x128xf32>
    %171 = arith.mulf %162, %140 : vector<2x128xf32>
    %172 = arith.mulf %156, %164 : vector<2x128xf32>
    %173 = arith.addf %171, %172 : vector<2x128xf32>
    %174 = math.tanh %173 : vector<2x128xf32>
    %175 = arith.mulf %170, %174 : vector<2x128xf32>
    %c0_67 = arith.constant 0 : index
    %c2_68 = arith.constant 2 : index
    %c0_69 = arith.constant 0 : index
    %176 = vector.load %arg12[%c0_67, %c2_68, %c0_69] : memref<2x8x128xf32, #tpu.memory_space<vmem>>, vector<2x1x128xf32>
    %177 = vector.shape_cast %176 : vector<2x1x128xf32> to vector<2x128xf32>
    %178 = vector.shape_cast %175 : vector<2x128xf32> to vector<2x1x128xf32>
    tpu.vector_store %arg12[%c0_67, %c2_68, %c0_69], %178 {strides = array<i32>} : memref<2x8x128xf32, #tpu.memory_space<vmem>>, vector<2x1x128xf32>,
    %179 = vector.extract_strided_slice %78 {offsets = [6, 0], sizes = [2, 512], strides = [1, 1]} : vector<16x512xf32> to vector<2x512xf32>
    %180 = arith.truncf %175 : vector<2x128xf32> to vector<2x128xbf16>
    %c0_70 = arith.constant 0 : index
    %c0_71 = arith.constant 0 : index
    %181 = vector.load %arg8[%c0_70, %c0_71] : memref<128x512xbf16, #tpu.memory_space<vmem>>, vector<128x512xbf16>
    %cst_72 = arith.constant dense<0.000000e+00> : vector<2x512xf32>
    %182 = tpu.matmul %180, %181, %cst_72 {dimension_numbers = #tpu.dot_dimension_numbers<[1], [0], [0], [1], [0, 0, 1, 1], [], []>} : vector<2x128xbf16>, vector<128x512xbf16>, vector<2x512xf32> -> vector<2x512xf32>
    %183 = arith.addf %179, %182 : vector<2x512xf32>
    %184 = vector.extract_strided_slice %183 {offsets = [0, 0], sizes = [2, 128], strides = [1, 1]} : vector<2x512xf32> to vector<2x128xf32>
    %185 = arith.negf %184 : vector<2x128xf32>
    %186 = math.exp %185 : vector<2x128xf32>
    %cst_73 = arith.constant 1.000000e+00 : f32
    %187 = vector.broadcast %cst_73 : f32 to vector<2x128xf32>
    %188 = arith.addf %187, %186 : vector<2x128xf32>
    %189 = arith.divf %187, %188 : vector<2x128xf32>
    %190 = vector.extract_strided_slice %183 {offsets = [0, 128], sizes = [2, 128], strides = [1, 1]} : vector<2x512xf32> to vector<2x128xf32>
    %191 = arith.negf %190 : vector<2x128xf32>
    %192 = math.exp %191 : vector<2x128xf32>
    %cst_74 = arith.constant 1.000000e+00 : f32
    %193 = vector.broadcast %cst_74 : f32 to vector<2x128xf32>
    %194 = arith.addf %193, %192 : vector<2x128xf32>
    %195 = arith.divf %193, %194 : vector<2x128xf32>
    %196 = vector.extract_strided_slice %183 {offsets = [0, 256], sizes = [2, 128], strides = [1, 1]} : vector<2x512xf32> to vector<2x128xf32>
    %197 = math.tanh %196 : vector<2x128xf32>
    %198 = vector.extract_strided_slice %183 {offsets = [0, 384], sizes = [2, 128], strides = [1, 1]} : vector<2x512xf32> to vector<2x128xf32>
    %199 = arith.negf %198 : vector<2x128xf32>
    %200 = math.exp %199 : vector<2x128xf32>
    %cst_75 = arith.constant 1.000000e+00 : f32
    %201 = vector.broadcast %cst_75 : f32 to vector<2x128xf32>
    %202 = arith.addf %201, %200 : vector<2x128xf32>
    %203 = arith.divf %201, %202 : vector<2x128xf32>
    %204 = arith.mulf %195, %173 : vector<2x128xf32>
    %205 = arith.mulf %189, %197 : vector<2x128xf32>
    %206 = arith.addf %204, %205 : vector<2x128xf32>
    %207 = math.tanh %206 : vector<2x128xf32>
    %208 = arith.mulf %203, %207 : vector<2x128xf32>
    %c0_76 = arith.constant 0 : index
    %c3_77 = arith.constant 3 : index
    %c0_78 = arith.constant 0 : index
    %209 = vector.load %arg12[%c0_76, %c3_77, %c0_78] : memref<2x8x128xf32, #tpu.memory_space<vmem>>, vector<2x1x128xf32>
    %210 = vector.shape_cast %209 : vector<2x1x128xf32> to vector<2x128xf32>
    %211 = vector.shape_cast %208 : vector<2x128xf32> to vector<2x1x128xf32>
    tpu.vector_store %arg12[%c0_76, %c3_77, %c0_78], %211 {strides = array<i32>} : memref<2x8x128xf32, #tpu.memory_space<vmem>>, vector<2x1x128xf32>,
    %212 = vector.extract_strided_slice %78 {offsets = [8, 0], sizes = [2, 512], strides = [1, 1]} : vector<16x512xf32> to vector<2x512xf32>
    %213 = arith.truncf %208 : vector<2x128xf32> to vector<2x128xbf16>
    %c0_79 = arith.constant 0 : index
    %c0_80 = arith.constant 0 : index
    %214 = vector.load %arg8[%c0_79, %c0_80] : memref<128x512xbf16, #tpu.memory_space<vmem>>, vector<128x512xbf16>
    %cst_81 = arith.constant dense<0.000000e+00> : vector<2x512xf32>
    %215 = tpu.matmul %213, %214, %cst_81 {dimension_numbers = #tpu.dot_dimension_numbers<[1], [0], [0], [1], [0, 0, 1, 1], [], []>} : vector<2x128xbf16>, vector<128x512xbf16>, vector<2x512xf32> -> vector<2x512xf32>
    %216 = arith.addf %212, %215 : vector<2x512xf32>
    %217 = vector.extract_strided_slice %216 {offsets = [0, 0], sizes = [2, 128], strides = [1, 1]} : vector<2x512xf32> to vector<2x128xf32>
    %218 = arith.negf %217 : vector<2x128xf32>
    %219 = math.exp %218 : vector<2x128xf32>
    %cst_82 = arith.constant 1.000000e+00 : f32
    %220 = vector.broadcast %cst_82 : f32 to vector<2x128xf32>
    %221 = arith.addf %220, %219 : vector<2x128xf32>
    %222 = arith.divf %220, %221 : vector<2x128xf32>
    %223 = vector.extract_strided_slice %216 {offsets = [0, 128], sizes = [2, 128], strides = [1, 1]} : vector<2x512xf32> to vector<2x128xf32>
    %224 = arith.negf %223 : vector<2x128xf32>
    %225 = math.exp %224 : vector<2x128xf32>
    %cst_83 = arith.constant 1.000000e+00 : f32
    %226 = vector.broadcast %cst_83 : f32 to vector<2x128xf32>
    %227 = arith.addf %226, %225 : vector<2x128xf32>
    %228 = arith.divf %226, %227 : vector<2x128xf32>
    %229 = vector.extract_strided_slice %216 {offsets = [0, 256], sizes = [2, 128], strides = [1, 1]} : vector<2x512xf32> to vector<2x128xf32>
    %230 = math.tanh %229 : vector<2x128xf32>
    %231 = vector.extract_strided_slice %216 {offsets = [0, 384], sizes = [2, 128], strides = [1, 1]} : vector<2x512xf32> to vector<2x128xf32>
    %232 = arith.negf %231 : vector<2x128xf32>
    %233 = math.exp %232 : vector<2x128xf32>
    %cst_84 = arith.constant 1.000000e+00 : f32
    %234 = vector.broadcast %cst_84 : f32 to vector<2x128xf32>
    %235 = arith.addf %234, %233 : vector<2x128xf32>
    %236 = arith.divf %234, %235 : vector<2x128xf32>
    %237 = arith.mulf %228, %206 : vector<2x128xf32>
    %238 = arith.mulf %222, %230 : vector<2x128xf32>
    %239 = arith.addf %237, %238 : vector<2x128xf32>
    %240 = math.tanh %239 : vector<2x128xf32>
    %241 = arith.mulf %236, %240 : vector<2x128xf32>
    %c0_85 = arith.constant 0 : index
    %c4_86 = arith.constant 4 : index
    %c0_87 = arith.constant 0 : index
    %242 = vector.load %arg12[%c0_85, %c4_86, %c0_87] : memref<2x8x128xf32, #tpu.memory_space<vmem>>, vector<2x1x128xf32>
    %243 = vector.shape_cast %242 : vector<2x1x128xf32> to vector<2x128xf32>
    %244 = vector.shape_cast %241 : vector<2x128xf32> to vector<2x1x128xf32>
    tpu.vector_store %arg12[%c0_85, %c4_86, %c0_87], %244 {strides = array<i32>} : memref<2x8x128xf32, #tpu.memory_space<vmem>>, vector<2x1x128xf32>,
    %245 = vector.extract_strided_slice %78 {offsets = [10, 0], sizes = [2, 512], strides = [1, 1]} : vector<16x512xf32> to vector<2x512xf32>
    %246 = arith.truncf %241 : vector<2x128xf32> to vector<2x128xbf16>
    %c0_88 = arith.constant 0 : index
    %c0_89 = arith.constant 0 : index
    %247 = vector.load %arg8[%c0_88, %c0_89] : memref<128x512xbf16, #tpu.memory_space<vmem>>, vector<128x512xbf16>
    %cst_90 = arith.constant dense<0.000000e+00> : vector<2x512xf32>
    %248 = tpu.matmul %246, %247, %cst_90 {dimension_numbers = #tpu.dot_dimension_numbers<[1], [0], [0], [1], [0, 0, 1, 1], [], []>} : vector<2x128xbf16>, vector<128x512xbf16>, vector<2x512xf32> -> vector<2x512xf32>
    %249 = arith.addf %245, %248 : vector<2x512xf32>
    %250 = vector.extract_strided_slice %249 {offsets = [0, 0], sizes = [2, 128], strides = [1, 1]} : vector<2x512xf32> to vector<2x128xf32>
    %251 = arith.negf %250 : vector<2x128xf32>
    %252 = math.exp %251 : vector<2x128xf32>
    %cst_91 = arith.constant 1.000000e+00 : f32
    %253 = vector.broadcast %cst_91 : f32 to vector<2x128xf32>
    %254 = arith.addf %253, %252 : vector<2x128xf32>
    %255 = arith.divf %253, %254 : vector<2x128xf32>
    %256 = vector.extract_strided_slice %249 {offsets = [0, 128], sizes = [2, 128], strides = [1, 1]} : vector<2x512xf32> to vector<2x128xf32>
    %257 = arith.negf %256 : vector<2x128xf32>
    %258 = math.exp %257 : vector<2x128xf32>
    %cst_92 = arith.constant 1.000000e+00 : f32
    %259 = vector.broadcast %cst_92 : f32 to vector<2x128xf32>
    %260 = arith.addf %259, %258 : vector<2x128xf32>
    %261 = arith.divf %259, %260 : vector<2x128xf32>
    %262 = vector.extract_strided_slice %249 {offsets = [0, 256], sizes = [2, 128], strides = [1, 1]} : vector<2x512xf32> to vector<2x128xf32>
    %263 = math.tanh %262 : vector<2x128xf32>
    %264 = vector.extract_strided_slice %249 {offsets = [0, 384], sizes = [2, 128], strides = [1, 1]} : vector<2x512xf32> to vector<2x128xf32>
    %265 = arith.negf %264 : vector<2x128xf32>
    %266 = math.exp %265 : vector<2x128xf32>
    %cst_93 = arith.constant 1.000000e+00 : f32
    %267 = vector.broadcast %cst_93 : f32 to vector<2x128xf32>
    %268 = arith.addf %267, %266 : vector<2x128xf32>
    %269 = arith.divf %267, %268 : vector<2x128xf32>
    %270 = arith.mulf %261, %239 : vector<2x128xf32>
    %271 = arith.mulf %255, %263 : vector<2x128xf32>
    %272 = arith.addf %270, %271 : vector<2x128xf32>
    %273 = math.tanh %272 : vector<2x128xf32>
    %274 = arith.mulf %269, %273 : vector<2x128xf32>
    %c0_94 = arith.constant 0 : index
    %c5_95 = arith.constant 5 : index
    %c0_96 = arith.constant 0 : index
    %275 = vector.load %arg12[%c0_94, %c5_95, %c0_96] : memref<2x8x128xf32, #tpu.memory_space<vmem>>, vector<2x1x128xf32>
    %276 = vector.shape_cast %275 : vector<2x1x128xf32> to vector<2x128xf32>
    %277 = vector.shape_cast %274 : vector<2x128xf32> to vector<2x1x128xf32>
    tpu.vector_store %arg12[%c0_94, %c5_95, %c0_96], %277 {strides = array<i32>} : memref<2x8x128xf32, #tpu.memory_space<vmem>>, vector<2x1x128xf32>,
    %278 = vector.extract_strided_slice %78 {offsets = [12, 0], sizes = [2, 512], strides = [1, 1]} : vector<16x512xf32> to vector<2x512xf32>
    %279 = arith.truncf %274 : vector<2x128xf32> to vector<2x128xbf16>
    %c0_97 = arith.constant 0 : index
    %c0_98 = arith.constant 0 : index
    %280 = vector.load %arg8[%c0_97, %c0_98] : memref<128x512xbf16, #tpu.memory_space<vmem>>, vector<128x512xbf16>
    %cst_99 = arith.constant dense<0.000000e+00> : vector<2x512xf32>
    %281 = tpu.matmul %279, %280, %cst_99 {dimension_numbers = #tpu.dot_dimension_numbers<[1], [0], [0], [1], [0, 0, 1, 1], [], []>} : vector<2x128xbf16>, vector<128x512xbf16>, vector<2x512xf32> -> vector<2x512xf32>
    %282 = arith.addf %278, %281 : vector<2x512xf32>
    %283 = vector.extract_strided_slice %282 {offsets = [0, 0], sizes = [2, 128], strides = [1, 1]} : vector<2x512xf32> to vector<2x128xf32>
    %284 = arith.negf %283 : vector<2x128xf32>
    %285 = math.exp %284 : vector<2x128xf32>
    %cst_100 = arith.constant 1.000000e+00 : f32
    %286 = vector.broadcast %cst_100 : f32 to vector<2x128xf32>
    %287 = arith.addf %286, %285 : vector<2x128xf32>
    %288 = arith.divf %286, %287 : vector<2x128xf32>
    %289 = vector.extract_strided_slice %282 {offsets = [0, 128], sizes = [2, 128], strides = [1, 1]} : vector<2x512xf32> to vector<2x128xf32>
    %290 = arith.negf %289 : vector<2x128xf32>
    %291 = math.exp %290 : vector<2x128xf32>
    %cst_101 = arith.constant 1.000000e+00 : f32
    %292 = vector.broadcast %cst_101 : f32 to vector<2x128xf32>
    %293 = arith.addf %292, %291 : vector<2x128xf32>
    %294 = arith.divf %292, %293 : vector<2x128xf32>
    %295 = vector.extract_strided_slice %282 {offsets = [0, 256], sizes = [2, 128], strides = [1, 1]} : vector<2x512xf32> to vector<2x128xf32>
    %296 = math.tanh %295 : vector<2x128xf32>
    %297 = vector.extract_strided_slice %282 {offsets = [0, 384], sizes = [2, 128], strides = [1, 1]} : vector<2x512xf32> to vector<2x128xf32>
    %298 = arith.negf %297 : vector<2x128xf32>
    %299 = math.exp %298 : vector<2x128xf32>
    %cst_102 = arith.constant 1.000000e+00 : f32
    %300 = vector.broadcast %cst_102 : f32 to vector<2x128xf32>
    %301 = arith.addf %300, %299 : vector<2x128xf32>
    %302 = arith.divf %300, %301 : vector<2x128xf32>
    %303 = arith.mulf %294, %272 : vector<2x128xf32>
    %304 = arith.mulf %288, %296 : vector<2x128xf32>
    %305 = arith.addf %303, %304 : vector<2x128xf32>
    %306 = math.tanh %305 : vector<2x128xf32>
    %307 = arith.mulf %302, %306 : vector<2x128xf32>
    %c0_103 = arith.constant 0 : index
    %c6_104 = arith.constant 6 : index
    %c0_105 = arith.constant 0 : index
    %308 = vector.load %arg12[%c0_103, %c6_104, %c0_105] : memref<2x8x128xf32, #tpu.memory_space<vmem>>, vector<2x1x128xf32>
    %309 = vector.shape_cast %308 : vector<2x1x128xf32> to vector<2x128xf32>
    %310 = vector.shape_cast %307 : vector<2x128xf32> to vector<2x1x128xf32>
    tpu.vector_store %arg12[%c0_103, %c6_104, %c0_105], %310 {strides = array<i32>} : memref<2x8x128xf32, #tpu.memory_space<vmem>>, vector<2x1x128xf32>,
    %311 = vector.extract_strided_slice %78 {offsets = [14, 0], sizes = [2, 512], strides = [1, 1]} : vector<16x512xf32> to vector<2x512xf32>
    %312 = arith.truncf %307 : vector<2x128xf32> to vector<2x128xbf16>
    %c0_106 = arith.constant 0 : index
    %c0_107 = arith.constant 0 : index
    %313 = vector.load %arg8[%c0_106, %c0_107] : memref<128x512xbf16, #tpu.memory_space<vmem>>, vector<128x512xbf16>
    %cst_108 = arith.constant dense<0.000000e+00> : vector<2x512xf32>
    %314 = tpu.matmul %312, %313, %cst_108 {dimension_numbers = #tpu.dot_dimension_numbers<[1], [0], [0], [1], [0, 0, 1, 1], [], []>} : vector<2x128xbf16>, vector<128x512xbf16>, vector<2x512xf32> -> vector<2x512xf32>
    %315 = arith.addf %311, %314 : vector<2x512xf32>
    %316 = vector.extract_strided_slice %315 {offsets = [0, 0], sizes = [2, 128], strides = [1, 1]} : vector<2x512xf32> to vector<2x128xf32>
    %317 = arith.negf %316 : vector<2x128xf32>
    %318 = math.exp %317 : vector<2x128xf32>
    %cst_109 = arith.constant 1.000000e+00 : f32
    %319 = vector.broadcast %cst_109 : f32 to vector<2x128xf32>
    %320 = arith.addf %319, %318 : vector<2x128xf32>
    %321 = arith.divf %319, %320 : vector<2x128xf32>
    %322 = vector.extract_strided_slice %315 {offsets = [0, 128], sizes = [2, 128], strides = [1, 1]} : vector<2x512xf32> to vector<2x128xf32>
    %323 = arith.negf %322 : vector<2x128xf32>
    %324 = math.exp %323 : vector<2x128xf32>
    %cst_110 = arith.constant 1.000000e+00 : f32
    %325 = vector.broadcast %cst_110 : f32 to vector<2x128xf32>
    %326 = arith.addf %325, %324 : vector<2x128xf32>
    %327 = arith.divf %325, %326 : vector<2x128xf32>
    %328 = vector.extract_strided_slice %315 {offsets = [0, 256], sizes = [2, 128], strides = [1, 1]} : vector<2x512xf32> to vector<2x128xf32>
    %329 = math.tanh %328 : vector<2x128xf32>
    %330 = vector.extract_strided_slice %315 {offsets = [0, 384], sizes = [2, 128], strides = [1, 1]} : vector<2x512xf32> to vector<2x128xf32>
    %331 = arith.negf %330 : vector<2x128xf32>
    %332 = math.exp %331 : vector<2x128xf32>
    %cst_111 = arith.constant 1.000000e+00 : f32
    %333 = vector.broadcast %cst_111 : f32 to vector<2x128xf32>
    %334 = arith.addf %333, %332 : vector<2x128xf32>
    %335 = arith.divf %333, %334 : vector<2x128xf32>
    %336 = arith.mulf %327, %305 : vector<2x128xf32>
    %337 = arith.mulf %321, %329 : vector<2x128xf32>
    %338 = arith.addf %336, %337 : vector<2x128xf32>
    %339 = math.tanh %338 : vector<2x128xf32>
    %340 = arith.mulf %335, %339 : vector<2x128xf32>
    %c0_112 = arith.constant 0 : index
    %c7_113 = arith.constant 7 : index
    %c0_114 = arith.constant 0 : index
    %341 = vector.load %arg12[%c0_112, %c7_113, %c0_114] : memref<2x8x128xf32, #tpu.memory_space<vmem>>, vector<2x1x128xf32>
    %342 = vector.shape_cast %341 : vector<2x1x128xf32> to vector<2x128xf32>
    %343 = vector.shape_cast %340 : vector<2x128xf32> to vector<2x1x128xf32>
    tpu.vector_store %arg12[%c0_112, %c7_113, %c0_114], %343 {strides = array<i32>} : memref<2x8x128xf32, #tpu.memory_space<vmem>>, vector<2x1x128xf32>,
    %c0_115 = arith.constant 0 : index
    %c0_116 = arith.constant 0 : index
    %c0_117 = arith.constant 0 : index
    %344 = vector.load %arg12[%c0_115, %c0_116, %c0_117] : memref<2x8x128xf32, #tpu.memory_space<vmem>>, vector<2x8x128xf32>
    %345 = vector.shape_cast %344 : vector<2x8x128xf32> to vector<16x128xf32>
    %346 = arith.truncf %345 : vector<16x128xf32> to vector<16x128xbf16>
    %c0_118 = arith.constant 0 : index
    %c0_119 = arith.constant 0 : index
    %347 = vector.load %arg9[%c0_118, %c0_119] : memref<128x256xbf16, #tpu.memory_space<vmem>>, vector<128x256xbf16>
    %cst_120 = arith.constant dense<0.000000e+00> : vector<16x256xf32>
    %348 = tpu.matmul %346, %347, %cst_120 {dimension_numbers = #tpu.dot_dimension_numbers<[1], [0], [0], [1], [0, 0, 1, 1], [], []>} : vector<16x128xbf16>, vector<128x256xbf16>, vector<16x256xf32> -> vector<16x256xf32>
    %c0_121 = arith.constant 0 : index
    %c0_122 = arith.constant 0 : index
    %349 = vector.load %arg10[%c0_121, %c0_122] : memref<1x256xf32, #tpu.memory_space<vmem>>, vector<1x256xf32>
    %350 = vector.broadcast %349 : vector<1x256xf32> to vector<16x256xf32>
    %351 = arith.addf %348, %350 : vector<16x256xf32>
    %352 = vector.shape_cast %351 : vector<16x256xf32> to vector<2x8x256xf32>
    %c0_123 = arith.constant 0 : index
    %c0_124 = arith.constant 0 : index
    %c0_125 = arith.constant 0 : index
    %353 = vector.load %arg11[%c0_123, %c0_124, %c0_125] : memref<2x8x256xf32, #tpu.memory_space<vmem>>, vector<2x8x256xf32>
    tpu.vector_store %arg11[%c0_123, %c0_124, %c0_125], %352 {strides = array<i32>} : memref<2x8x256xf32, #tpu.memory_space<vmem>>, vector<2x8x256xf32>,
    return
  }
}

</mosaic_0001>

<llo_original>
// kernel: image_captioning_forward.1
$region0: #{image_captioning_forward.1}
  #allocation0 [shape = 'u32[]', space=smem, size = 0x4, offset = 0x4, fixed_abs, tag = 'smem constant byte address 0x4 - core index']
  #allocation1 [shape = 'u32[72,128]{1,0:T(1,128)}', space=vmem, size = 0x9000, scoped, tag = 'internal scratch']
  #allocation2 [shape = 'f32[2,8,128]{2,1,0:T(8,128)}', space=vmem, size = 0x2000, scoped, tag = 'scratch operand']
  %s0 = inlined_call_operand.vmem [shape: f32[16,256], index: 0, kind: input, shape index: {}]
  %s1 = inlined_call_operand.vmem [shape: bf16[256,128], index: 1, kind: input, shape index: {}]
  %s2 = inlined_call_operand.vmem [shape: f32[1,128], index: 2, kind: input, shape index: {}]
  %s3 = inlined_call_operand.vmem [shape: bf16[8,128,128], index: 3, kind: input, shape index: {}]
  %s4 = inlined_call_operand.vmem [shape: f32[1,128], index: 4, kind: input, shape index: {}]
  %s5 = inlined_call_operand.vmem [shape: f32[16,128], index: 5, kind: input, shape index: {}]
  %s6 = inlined_call_operand.vmem [shape: bf16[128,512], index: 6, kind: input, shape index: {}]
  %s7 = inlined_call_operand.vmem [shape: f32[1,512], index: 7, kind: input, shape index: {}]
  %s8 = inlined_call_operand.vmem [shape: bf16[128,512], index: 8, kind: input, shape index: {}]
  %s9 = inlined_call_operand.vmem [shape: bf16[128,256], index: 9, kind: input, shape index: {}]
  %s10 = inlined_call_operand.vmem [shape: f32[1,256], index: 10, kind: input, shape index: {}]
  %s11 = inlined_call_operand.hbm [shape: f32[2,8,256], index: 11, kind: output, shape index: {}]
  %s12 = sld [smem:[#allocation0]]
  $region54: #{image_captioning_forward.1} parent=0
    _
  %s14 = ssub.s32 1, %s12
  %s15 = scalar_select 0, %s14, %s12
  $region1: #{image_captioning_forward.1} parent=0
    #allocation3 [shape = 'u8[16384]{0}', space=vmem, size = 0x4000, scoped, tag = 'output window, operand 0, single buffered']
    #allocation4 [shape = 's32[1]{0}', space=sflag, size = 0x4, scoped, tag = 'scoped memory for image_captioning_forward.1']
    %16 = vsyncpa [#allocation4], 0
    // Predicated region
    $region2: #{image_captioning_forward.1} parent=1 // pred_check
      _
    $region3: #{image_captioning_forward.1} parent=1 // pred_check_branch
      %18 = sbr.rel (0) target = $region5
    $region4: #{image_captioning_forward.1} parent=1 // pred_region
      _
    $region5: #{image_captioning_forward.1} parent=1 // pred_fallthru
      _
    // Predicated region
    $region6: #{image_captioning_forward.1} parent=1 // pred_check
      _
    $region7: #{image_captioning_forward.1} parent=1 // pred_check_branch
      %20 = sbr.rel (0) target = $region9
    $region8: #{image_captioning_forward.1} parent=1 // pred_region
      _
    $region9: #{image_captioning_forward.1} parent=1 // pred_fallthru
      _
    // Predicated region
    $region10: #{image_captioning_forward.1} parent=1 // pred_check
      _
    $region11: #{image_captioning_forward.1} parent=1 // pred_check_branch
      %22 = sbr.rel (0) target = $region13
    $region12: #{image_captioning_forward.1} parent=1 // pred_region
      _
    $region13: #{image_captioning_forward.1} parent=1 // pred_fallthru
      _
    // Predicated region
    $region14: #{image_captioning_forward.1} parent=1 // pred_check
      _
    $region15: #{image_captioning_forward.1} parent=1 // pred_check_branch
      %24 = sbr.rel (0) target = $region17
    $region16: #{image_captioning_forward.1} parent=1 // pred_region
      _
    $region17: #{image_captioning_forward.1} parent=1 // pred_fallthru
      _
    // Predicated region
    $region18: #{image_captioning_forward.1} parent=1 // pred_check
      _
    $region19: #{image_captioning_forward.1} parent=1 // pred_check_branch
      %26 = sbr.rel (0) target = $region21
    $region20: #{image_captioning_forward.1} parent=1 // pred_region
      _
    $region21: #{image_captioning_forward.1} parent=1 // pred_fallthru
      _
    // Predicated region
    $region22: #{image_captioning_forward.1} parent=1 // pred_check
      _
    $region23: #{image_captioning_forward.1} parent=1 // pred_check_branch
      %28 = sbr.rel (0) target = $region25
    $region24: #{image_captioning_forward.1} parent=1 // pred_region
      _
    $region25: #{image_captioning_forward.1} parent=1 // pred_fallthru
      _
    // Predicated region
    $region26: #{image_captioning_forward.1} parent=1 // pred_check
      _
    $region27: #{image_captioning_forward.1} parent=1 // pred_check_branch
      %30 = sbr.rel (0) target = $region29
    $region28: #{image_captioning_forward.1} parent=1 // pred_region
      _
    $region29: #{image_captioning_forward.1} parent=1 // pred_fallthru
      _
    // Predicated region
    $region30: #{image_captioning_forward.1} parent=1 // pred_check
      _
    $region31: #{image_captioning_forward.1} parent=1 // pred_check_branch
      %32 = sbr.rel (0) target = $region33
    $region32: #{image_captioning_forward.1} parent=1 // pred_region
      _
    $region33: #{image_captioning_forward.1} parent=1 // pred_fallthru
      _
    // Predicated region
    $region34: #{image_captioning_forward.1} parent=1 // pred_check
      _
    $region35: #{image_captioning_forward.1} parent=1 // pred_check_branch
      %34 = sbr.rel (0) target = $region37
    $region36: #{image_captioning_forward.1} parent=1 // pred_region
      _
    $region37: #{image_captioning_forward.1} parent=1 // pred_fallthru
      _
    // Predicated region
    $region38: #{image_captioning_forward.1} parent=1 // pred_check
      _
    $region39: #{image_captioning_forward.1} parent=1 // pred_check_branch
      %36 = sbr.rel (0) target = $region41
    $region40: #{image_captioning_forward.1} parent=1 // pred_region
      _
    $region41: #{image_captioning_forward.1} parent=1 // pred_fallthru
      _
    // Predicated region
    $region42: #{image_captioning_forward.1} parent=1 // pred_check
      _
    $region43: #{image_captioning_forward.1} parent=1 // pred_check_branch
      %38 = sbr.rel (0) target = $region45
    $region44: #{image_captioning_forward.1} parent=1 // pred_region
      _
    $region45: #{image_captioning_forward.1} parent=1 // pred_fallthru
      _
    %v39 = vld [vmem:[%s0] sm:$0xff]
    %v40 = vld [vmem:[%s0 + $0x8] sm:$0xff]
    %v41 = vld [vmem:[%s0 + $0x10] sm:$0xff]
    %v42 = vld [vmem:[%s0 + $0x18] sm:$0xff]
    %v43 = vpack.c.bf16 %v41, %v39
    %v44 = vpack.c.bf16 %v42, %v40
    %v45 = vld [vmem:[%s1] sm:$0xf]
    %v46 = vld [vmem:[%s1 + $0x4] sm:$0xf]
    %v47 = vld [vmem:[%s1 + $0x8] sm:$0xf]
    %v48 = vld [vmem:[%s1 + $0xc] sm:$0xf]
    %v49 = vld [vmem:[%s1 + $0x10] sm:$0xf]
    %v50 = vld [vmem:[%s1 + $0x14] sm:$0xf]
    %v51 = vld [vmem:[%s1 + $0x18] sm:$0xf]
    %v52 = vld [vmem:[%s1 + $0x1c] sm:$0xf]
    %v53 = vld [vmem:[%s1 + $0x20] sm:$0xf]
    %v54 = vld [vmem:[%s1 + $0x24] sm:$0xf]
    %v55 = vld [vmem:[%s1 + $0x28] sm:$0xf]
    %v56 = vld [vmem:[%s1 + $0x2c] sm:$0xf]
    %v57 = vld [vmem:[%s1 + $0x30] sm:$0xf]
    %v58 = vld [vmem:[%s1 + $0x34] sm:$0xf]
    %v59 = vld [vmem:[%s1 + $0x38] sm:$0xf]
    %v60 = vld [vmem:[%s1 + $0x3c] sm:$0xf]
    %v61 = vld [vmem:[%s1 + $0x40] sm:$0xf]
    %v62 = vld [vmem:[%s1 + $0x44] sm:$0xf]
    %v63 = vld [vmem:[%s1 + $0x48] sm:$0xf]
    %v64 = vld [vmem:[%s1 + $0x4c] sm:$0xf]
    %v65 = vld [vmem:[%s1 + $0x50] sm:$0xf]
    %v66 = vld [vmem:[%s1 + $0x54] sm:$0xf]
    %v67 = vld [vmem:[%s1 + $0x58] sm:$0xf]
    %v68 = vld [vmem:[%s1 + $0x5c] sm:$0xf]
    %v69 = vld [vmem:[%s1 + $0x60] sm:$0xf]
    %v70 = vld [vmem:[%s1 + $0x64] sm:$0xf]
    %v71 = vld [vmem:[%s1 + $0x68] sm:$0xf]
    %v72 = vld [vmem:[%s1 + $0x6c] sm:$0xf]
    %v73 = vld [vmem:[%s1 + $0x70] sm:$0xf]
    %v74 = vld [vmem:[%s1 + $0x74] sm:$0xf]
    %v75 = vld [vmem:[%s1 + $0x78] sm:$0xf]
    %v76 = vld [vmem:[%s1 + $0x7c] sm:$0xf]
    %v77 = vld [vmem:[%s2] sm:$0x1]
    %v79 = vperm.slane %v77, 0
    %v113 = vunpack.c.l.b16 %v45
    %v114 = vunpack.c.l.b16 %v46
    %v115 = vunpack.c.l.b16 %v47
    %v116 = vunpack.c.l.b16 %v48
    %v117 = vunpack.c.l.b16 %v49
    %v118 = vunpack.c.l.b16 %v50
    %v119 = vunpack.c.l.b16 %v51
    %v120 = vunpack.c.l.b16 %v52
    %v121 = vunpack.c.l.b16 %v53
    %v122 = vunpack.c.l.b16 %v54
    %v123 = vunpack.c.l.b16 %v55
    %v124 = vunpack.c.l.b16 %v56
    %v125 = vunpack.c.l.b16 %v57
    %v126 = vunpack.c.l.b16 %v58
    %v127 = vunpack.c.l.b16 %v59
    %v128 = vunpack.c.l.b16 %v60
    %v129 = vunpack.c.l.b16 %v61
    %v130 = vunpack.c.l.b16 %v62
    %v131 = vunpack.c.l.b16 %v63
    %v132 = vunpack.c.l.b16 %v64
    %v133 = vunpack.c.l.b16 %v65
    %v134 = vunpack.c.l.b16 %v66
    %v135 = vunpack.c.l.b16 %v67
    %v136 = vunpack.c.l.b16 %v68
    %v137 = vunpack.c.l.b16 %v69
    %v138 = vunpack.c.l.b16 %v70
    %v139 = vunpack.c.l.b16 %v71
    %v140 = vunpack.c.l.b16 %v72
    %v141 = vunpack.c.l.b16 %v73
    %v142 = vunpack.c.l.b16 %v74
    %v143 = vunpack.c.l.b16 %v75
    %v144 = vunpack.c.l.b16 %v76
    %v145 = vpack.c.b16 %v114, %v113
    %v146 = vpack.c.b16 %v116, %v115
    %v147 = vpack.c.b16 %v118, %v117
    %v148 = vpack.c.b16 %v120, %v119
    %v149 = vpack.c.b16 %v122, %v121
    %v150 = vpack.c.b16 %v124, %v123
    %v151 = vpack.c.b16 %v126, %v125
    %v152 = vpack.c.b16 %v128, %v127
    %v153 = vpack.c.b16 %v130, %v129
    %v154 = vpack.c.b16 %v132, %v131
    %v155 = vpack.c.b16 %v134, %v133
    %v156 = vpack.c.b16 %v136, %v135
    %v157 = vpack.c.b16 %v138, %v137
    %v158 = vpack.c.b16 %v140, %v139
    %v159 = vpack.c.b16 %v142, %v141
    %v160 = vpack.c.b16 %v144, %v143
    %177 = vmatpush.bf16.msra.mxu0 %v152
    %178 = vmatpush.bf16.msra.mxu0 %v151
    %179 = vmatpush.bf16.msra.mxu0 %v150
    %180 = vmatpush.bf16.msra.mxu0 %v149
    %181 = vmatpush.bf16.msra.mxu0 %v148
    %182 = vmatpush.bf16.msra.mxu0 %v147
    %183 = vmatpush.bf16.msra.mxu0 %v146
    %184 = vmatpush.bf16.msra.mxu0 %v145
    %185 = vmatmul.bf16.gmra.mxu0 %v43
    %v186 = vpop.f32.mrf.mxu0
    %v187 = vadd.f32 %v79, %v186
    %v188 = vpop.f32.mrf.mxu0
    %v189 = vadd.f32 %v79, %v188
    %190 = vdwg.mxu0
    %191 = vmatpush.bf16.msra.mxu0 %v160
    %192 = vmatpush.bf16.msra.mxu0 %v159
    %193 = vmatpush.bf16.msra.mxu0 %v158
    %194 = vmatpush.bf16.msra.mxu0 %v157
    %195 = vmatpush.bf16.msra.mxu0 %v156
    %196 = vmatpush.bf16.msra.mxu0 %v155
    %197 = vmatpush.bf16.msra.mxu0 %v154
    %198 = vmatpush.bf16.msra.mxu0 %v153
    %199 = vmatmul.bf16.gmra.mxu0 %v44
    %v200 = vpop.f32.mrf.mxu0
    %v201 = vadd.f32 %v187, %v200
    %v202 = vpop.f32.mrf.mxu0
    %v203 = vadd.f32 %v189, %v202
    %204 = vdwg.mxu0
    %v205 = vmax.f32 %v201, 0.0
    %v206 = vmax.f32 %v203, 0.0
    %v207 = vpack.c.bf16 %v205, %v205
    %v208 = vpack.c.bf16 %v206, %v206
    %v209 = vld [vmem:[%s3] sm:$0xf]
    %v210 = vld [vmem:[%s3 + $0x4] sm:$0xf]
    %v211 = vld [vmem:[%s3 + $0x8] sm:$0xf]
    %v212 = vld [vmem:[%s3 + $0xc] sm:$0xf]
    %v213 = vld [vmem:[%s3 + $0x10] sm:$0xf]
    %v214 = vld [vmem:[%s3 + $0x14] sm:$0xf]
    %v215 = vld [vmem:[%s3 + $0x18] sm:$0xf]
    %v216 = vld [vmem:[%s3 + $0x1c] sm:$0xf]
    %v217 = vld [vmem:[%s3 + $0x20] sm:$0xf]
    %v218 = vld [vmem:[%s3 + $0x24] sm:$0xf]
    %v219 = vld [vmem:[%s3 + $0x28] sm:$0xf]
    %v220 = vld [vmem:[%s3 + $0x2c] sm:$0xf]
    %v221 = vld [vmem:[%s3 + $0x30] sm:$0xf]
    %v222 = vld [vmem:[%s3 + $0x34] sm:$0xf]
    %v223 = vld [vmem:[%s3 + $0x38] sm:$0xf]
    %v224 = vld [vmem:[%s3 + $0x3c] sm:$0xf]
    %s225 = scalar_lea.vmem %s3, 64
    %v226 = vld [vmem:[%s225] sm:$0xf]
    %v227 = vld [vmem:[%s225 + $0x4] sm:$0xf]
    %v228 = vld [vmem:[%s225 + $0x8] sm:$0xf]
    %v229 = vld [vmem:[%s225 + $0xc] sm:$0xf]
    %v230 = vld [vmem:[%s225 + $0x10] sm:$0xf]
    %v231 = vld [vmem:[%s225 + $0x14] sm:$0xf]
    %v232 = vld [vmem:[%s225 + $0x18] sm:$0xf]
    %v233 = vld [vmem:[%s225 + $0x1c] sm:$0xf]
    %v234 = vld [vmem:[%s225 + $0x20] sm:$0xf]
    %v235 = vld [vmem:[%s225 + $0x24] sm:$0xf]
    %v236 = vld [vmem:[%s225 + $0x28] sm:$0xf]
    %v237 = vld [vmem:[%s225 + $0x2c] sm:$0xf]
    %v238 = vld [vmem:[%s225 + $0x30] sm:$0xf]
    %v239 = vld [vmem:[%s225 + $0x34] sm:$0xf]
    %v240 = vld [vmem:[%s225 + $0x38] sm:$0xf]
    %v241 = vld [vmem:[%s225 + $0x3c] sm:$0xf]
    %v244 = vunpack.c.l.b16 %v207
    %v245 = vunpack.c.l.b16 %v208
    %v246 = vrot.slane %v244, 1
    %vm247 = vcmask 1041409
    %v248 = vsel %vm247, %v245, %v246
    %v249 = vpack.c.b16 %v248, %v248
    %v267 = vunpack.c.l.b16 %v226
    %v268 = vunpack.c.l.b16 %v227
    %v269 = vunpack.c.l.b16 %v228
    %v270 = vunpack.c.l.b16 %v229
    %v271 = vunpack.c.l.b16 %v230
    %v272 = vunpack.c.l.b16 %v231
    %v273 = vunpack.c.l.b16 %v232
    %v274 = vunpack.c.l.b16 %v233
    %v275 = vunpack.c.l.b16 %v234
    %v276 = vunpack.c.l.b16 %v235
    %v277 = vunpack.c.l.b16 %v236
    %v278 = vunpack.c.l.b16 %v237
    %v279 = vunpack.c.l.b16 %v238
    %v280 = vunpack.c.l.b16 %v239
    %v281 = vunpack.c.l.b16 %v240
    %v282 = vunpack.c.l.b16 %v241
    %v283 = vpack.c.b16 %v268, %v267
    %v284 = vpack.c.b16 %v270, %v269
    %v285 = vpack.c.b16 %v272, %v271
    %v286 = vpack.c.b16 %v274, %v273
    %v287 = vpack.c.b16 %v276, %v275
    %v288 = vpack.c.b16 %v278, %v277
    %v289 = vpack.c.b16 %v280, %v279
    %v290 = vpack.c.b16 %v282, %v281
    %299 = vmatpush.bf16.msra.mxu0 %v290
    %300 = vmatpush.bf16.msra.mxu0 %v289
    %301 = vmatpush.bf16.msra.mxu0 %v288
    %302 = vmatpush.bf16.msra.mxu0 %v287
    %303 = vmatpush.bf16.msra.mxu0 %v286
    %304 = vmatpush.bf16.msra.mxu0 %v285
    %305 = vmatpush.bf16.msra.mxu0 %v284
    %306 = vmatpush.bf16.msra.mxu0 %v283
    %307 = vmatmul.bf16.gmra.mxu0 %v249
    %v308 = vpop.f32.mrf.mxu0
    %v309 = vadd.f32 0.0, %v308
    %v310 = vpop.f32.mrf.mxu0
    %311 = vdwg.mxu0
    %v312 = vrot.slane %v245, 7
    %v313 = vsel %vm247, %v312, %v244
    %v314 = vpack.c.b16 %v313, %v313
    %v332 = vunpack.c.l.b16 %v209
    %v333 = vunpack.c.l.b16 %v210
    %v334 = vunpack.c.l.b16 %v211
    %v335 = vunpack.c.l.b16 %v212
    %v336 = vunpack.c.l.b16 %v213
    %v337 = vunpack.c.l.b16 %v214
    %v338 = vunpack.c.l.b16 %v215
    %v339 = vunpack.c.l.b16 %v216
    %v340 = vunpack.c.l.b16 %v217
    %v341 = vunpack.c.l.b16 %v218
    %v342 = vunpack.c.l.b16 %v219
    %v343 = vunpack.c.l.b16 %v220
    %v344 = vunpack.c.l.b16 %v221
    %v345 = vunpack.c.l.b16 %v222
    %v346 = vunpack.c.l.b16 %v223
    %v347 = vunpack.c.l.b16 %v224
    %v348 = vpack.c.b16 %v333, %v332
    %v349 = vpack.c.b16 %v335, %v334
    %v350 = vpack.c.b16 %v337, %v336
    %v351 = vpack.c.b16 %v339, %v338
    %v352 = vpack.c.b16 %v341, %v340
    %v353 = vpack.c.b16 %v343, %v342
    %v354 = vpack.c.b16 %v345, %v344
    %v355 = vpack.c.b16 %v347, %v346
    %364 = vmatpush.bf16.msra.mxu0 %v355
    %365 = vmatpush.bf16.msra.mxu0 %v354
    %366 = vmatpush.bf16.msra.mxu0 %v353
    %367 = vmatpush.bf16.msra.mxu0 %v352
    %368 = vmatpush.bf16.msra.mxu0 %v351
    %369 = vmatpush.bf16.msra.mxu0 %v350
    %370 = vmatpush.bf16.msra.mxu0 %v349
    %371 = vmatpush.bf16.msra.mxu0 %v348
    %372 = vmatmul.bf16.gmra.mxu0 %v314
    %v373 = vpop.f32.mrf.mxu0
    %v374 = vadd.f32 %v309, %v373
    %v375 = vpop.f32.mrf.mxu0
    %376 = vdwg.mxu0
    %s377 = scalar_lea.vmem %s3, 128
    %v378 = vld [vmem:[%s377] sm:$0xf]
    %v379 = vld [vmem:[%s377 + $0x4] sm:$0xf]
    %v380 = vld [vmem:[%s377 + $0x8] sm:$0xf]
    %v381 = vld [vmem:[%s377 + $0xc] sm:$0xf]
    %v382 = vld [vmem:[%s377 + $0x10] sm:$0xf]
    %v383 = vld [vmem:[%s377 + $0x14] sm:$0xf]
    %v384 = vld [vmem:[%s377 + $0x18] sm:$0xf]
    %v385 = vld [vmem:[%s377 + $0x1c] sm:$0xf]
    %v386 = vld [vmem:[%s377 + $0x20] sm:$0xf]
    %v387 = vld [vmem:[%s377 + $0x24] sm:$0xf]
    %v388 = vld [vmem:[%s377 + $0x28] sm:$0xf]
    %v389 = vld [vmem:[%s377 + $0x2c] sm:$0xf]
    %v390 = vld [vmem:[%s377 + $0x30] sm:$0xf]
    %v391 = vld [vmem:[%s377 + $0x34] sm:$0xf]
    %v392 = vld [vmem:[%s377 + $0x38] sm:$0xf]
    %v393 = vld [vmem:[%s377 + $0x3c] sm:$0xf]
    %v394 = vrot.slane %v244, 2
    %v395 = vrot.slane %v245, 1
    %v396 = vsel %vm247, %v395, %v394
    %v397 = vpack.c.b16 %v396, %v396
    %v415 = vunpack.c.l.b16 %v378
    %v416 = vunpack.c.l.b16 %v379
    %v417 = vunpack.c.l.b16 %v380
    %v418 = vunpack.c.l.b16 %v381
    %v419 = vunpack.c.l.b16 %v382
    %v420 = vunpack.c.l.b16 %v383
    %v421 = vunpack.c.l.b16 %v384
    %v422 = vunpack.c.l.b16 %v385
    %v423 = vunpack.c.l.b16 %v386
    %v424 = vunpack.c.l.b16 %v387
    %v425 = vunpack.c.l.b16 %v388
    %v426 = vunpack.c.l.b16 %v389
    %v427 = vunpack.c.l.b16 %v390
    %v428 = vunpack.c.l.b16 %v391
    %v429 = vunpack.c.l.b16 %v392
    %v430 = vunpack.c.l.b16 %v393
    %v431 = vpack.c.b16 %v416, %v415
    %v432 = vpack.c.b16 %v418, %v417
    %v433 = vpack.c.b16 %v420, %v419
    %v434 = vpack.c.b16 %v422, %v421
    %v435 = vpack.c.b16 %v424, %v423
    %v436 = vpack.c.b16 %v426, %v425
    %v437 = vpack.c.b16 %v428, %v427
    %v438 = vpack.c.b16 %v430, %v429
    %447 = vmatpush.bf16.msra.mxu0 %v438
    %448 = vmatpush.bf16.msra.mxu0 %v437
    %449 = vmatpush.bf16.msra.mxu0 %v436
    %450 = vmatpush.bf16.msra.mxu0 %v435
    %451 = vmatpush.bf16.msra.mxu0 %v434
    %452 = vmatpush.bf16.msra.mxu0 %v433
    %453 = vmatpush.bf16.msra.mxu0 %v432
    %454 = vmatpush.bf16.msra.mxu0 %v431
    %455 = vmatmul.bf16.gmra.mxu0 %v397
    %v456 = vpop.f32.mrf.mxu0
    %v457 = vadd.f32 0.0, %v456
    %v458 = vpop.f32.mrf.mxu0
    %459 = vdwg.mxu0
    %v460 = vadd.f32 %v374, %v457
    %s461 = scalar_lea.vmem %s3, 192
    %v462 = vld [vmem:[%s461] sm:$0xf]
    %v463 = vld [vmem:[%s461 + $0x4] sm:$0xf]
    %v464 = vld [vmem:[%s461 + $0x8] sm:$0xf]
    %v465 = vld [vmem:[%s461 + $0xc] sm:$0xf]
    %v466 = vld [vmem:[%s461 + $0x10] sm:$0xf]
    %v467 = vld [vmem:[%s461 + $0x14] sm:$0xf]
    %v468 = vld [vmem:[%s461 + $0x18] sm:$0xf]
    %v469 = vld [vmem:[%s461 + $0x1c] sm:$0xf]
    %v470 = vld [vmem:[%s461 + $0x20] sm:$0xf]
    %v471 = vld [vmem:[%s461 + $0x24] sm:$0xf]
    %v472 = vld [vmem:[%s461 + $0x28] sm:$0xf]
    %v473 = vld [vmem:[%s461 + $0x2c] sm:$0xf]
    %v474 = vld [vmem:[%s461 + $0x30] sm:$0xf]
    %v475 = vld [vmem:[%s461 + $0x34] sm:$0xf]
    %v476 = vld [vmem:[%s461 + $0x38] sm:$0xf]
    %v477 = vld [vmem:[%s461 + $0x3c] sm:$0xf]
    %v478 = vrot.slane %v244, 3
    %v479 = vrot.slane %v245, 2
    %v480 = vsel %vm247, %v479, %v478
    %v481 = vpack.c.b16 %v480, %v480
    %v499 = vunpack.c.l.b16 %v462
    %v500 = vunpack.c.l.b16 %v463
    %v501 = vunpack.c.l.b16 %v464
    %v502 = vunpack.c.l.b16 %v465
    %v503 = vunpack.c.l.b16 %v466
    %v504 = vunpack.c.l.b16 %v467
    %v505 = vunpack.c.l.b16 %v468
    %v506 = vunpack.c.l.b16 %v469
    %v507 = vunpack.c.l.b16 %v470
    %v508 = vunpack.c.l.b16 %v471
    %v509 = vunpack.c.l.b16 %v472
    %v510 = vunpack.c.l.b16 %v473
    %v511 = vunpack.c.l.b16 %v474
    %v512 = vunpack.c.l.b16 %v475
    %v513 = vunpack.c.l.b16 %v476
    %v514 = vunpack.c.l.b16 %v477
    %v515 = vpack.c.b16 %v500, %v499
    %v516 = vpack.c.b16 %v502, %v501
    %v517 = vpack.c.b16 %v504, %v503
    %v518 = vpack.c.b16 %v506, %v505
    %v519 = vpack.c.b16 %v508, %v507
    %v520 = vpack.c.b16 %v510, %v509
    %v521 = vpack.c.b16 %v512, %v511
    %v522 = vpack.c.b16 %v514, %v513
    %531 = vmatpush.bf16.msra.mxu0 %v522
    %532 = vmatpush.bf16.msra.mxu0 %v521
    %533 = vmatpush.bf16.msra.mxu0 %v520
    %534 = vmatpush.bf16.msra.mxu0 %v519
    %535 = vmatpush.bf16.msra.mxu0 %v518
    %536 = vmatpush.bf16.msra.mxu0 %v517
    %537 = vmatpush.bf16.msra.mxu0 %v516
    %538 = vmatpush.bf16.msra.mxu0 %v515
    %539 = vmatmul.bf16.gmra.mxu0 %v481
    %v540 = vpop.f32.mrf.mxu0
    %v541 = vadd.f32 0.0, %v540
    %v542 = vpop.f32.mrf.mxu0
    %543 = vdwg.mxu0
    %v544 = vadd.f32 %v460, %v541
    %s545 = scalar_lea.vmem %s3, 256
    %v546 = vld [vmem:[%s545] sm:$0xf]
    %v547 = vld [vmem:[%s545 + $0x4] sm:$0xf]
    %v548 = vld [vmem:[%s545 + $0x8] sm:$0xf]
    %v549 = vld [vmem:[%s545 + $0xc] sm:$0xf]
    %v550 = vld [vmem:[%s545 + $0x10] sm:$0xf]
    %v551 = vld [vmem:[%s545 + $0x14] sm:$0xf]
    %v552 = vld [vmem:[%s545 + $0x18] sm:$0xf]
    %v553 = vld [vmem:[%s545 + $0x1c] sm:$0xf]
    %v554 = vld [vmem:[%s545 + $0x20] sm:$0xf]
    %v555 = vld [vmem:[%s545 + $0x24] sm:$0xf]
    %v556 = vld [vmem:[%s545 + $0x28] sm:$0xf]
    %v557 = vld [vmem:[%s545 + $0x2c] sm:$0xf]
    %v558 = vld [vmem:[%s545 + $0x30] sm:$0xf]
    %v559 = vld [vmem:[%s545 + $0x34] sm:$0xf]
    %v560 = vld [vmem:[%s545 + $0x38] sm:$0xf]
    %v561 = vld [vmem:[%s545 + $0x3c] sm:$0xf]
    %v562 = vrot.slane %v244, 4
    %v563 = vrot.slane %v245, 3
    %v564 = vsel %vm247, %v563, %v562
    %v565 = vpack.c.b16 %v564, %v564
    %v583 = vunpack.c.l.b16 %v546
    %v584 = vunpack.c.l.b16 %v547
    %v585 = vunpack.c.l.b16 %v548
    %v586 = vunpack.c.l.b16 %v549
    %v587 = vunpack.c.l.b16 %v550
    %v588 = vunpack.c.l.b16 %v551
    %v589 = vunpack.c.l.b16 %v552
    %v590 = vunpack.c.l.b16 %v553
    %v591 = vunpack.c.l.b16 %v554
    %v592 = vunpack.c.l.b16 %v555
    %v593 = vunpack.c.l.b16 %v556
    %v594 = vunpack.c.l.b16 %v557
    %v595 = vunpack.c.l.b16 %v558
    %v596 = vunpack.c.l.b16 %v559
    %v597 = vunpack.c.l.b16 %v560
    %v598 = vunpack.c.l.b16 %v561
    %v599 = vpack.c.b16 %v584, %v583
    %v600 = vpack.c.b16 %v586, %v585
    %v601 = vpack.c.b16 %v588, %v587
    %v602 = vpack.c.b16 %v590, %v589
    %v603 = vpack.c.b16 %v592, %v591
    %v604 = vpack.c.b16 %v594, %v593
    %v605 = vpack.c.b16 %v596, %v595
    %v606 = vpack.c.b16 %v598, %v597
    %615 = vmatpush.bf16.msra.mxu0 %v606
    %616 = vmatpush.bf16.msra.mxu0 %v605
    %617 = vmatpush.bf16.msra.mxu0 %v604
    %618 = vmatpush.bf16.msra.mxu0 %v603
    %619 = vmatpush.bf16.msra.mxu0 %v602
    %620 = vmatpush.bf16.msra.mxu0 %v601
    %621 = vmatpush.bf16.msra.mxu0 %v600
    %622 = vmatpush.bf16.msra.mxu0 %v599
    %623 = vmatmul.bf16.gmra.mxu0 %v565
    %v624 = vpop.f32.mrf.mxu0
    %v625 = vadd.f32 0.0, %v624
    %v626 = vpop.f32.mrf.mxu0
    %627 = vdwg.mxu0
    %v628 = vadd.f32 %v544, %v625
    %s629 = scalar_lea.vmem %s3, 320
    %v630 = vld [vmem:[%s629] sm:$0xf]
    %v631 = vld [vmem:[%s629 + $0x4] sm:$0xf]
    %v632 = vld [vmem:[%s629 + $0x8] sm:$0xf]
    %v633 = vld [vmem:[%s629 + $0xc] sm:$0xf]
    %v634 = vld [vmem:[%s629 + $0x10] sm:$0xf]
    %v635 = vld [vmem:[%s629 + $0x14] sm:$0xf]
    %v636 = vld [vmem:[%s629 + $0x18] sm:$0xf]
    %v637 = vld [vmem:[%s629 + $0x1c] sm:$0xf]
    %v638 = vld [vmem:[%s629 + $0x20] sm:$0xf]
    %v639 = vld [vmem:[%s629 + $0x24] sm:$0xf]
    %v640 = vld [vmem:[%s629 + $0x28] sm:$0xf]
    %v641 = vld [vmem:[%s629 + $0x2c] sm:$0xf]
    %v642 = vld [vmem:[%s629 + $0x30] sm:$0xf]
    %v643 = vld [vmem:[%s629 + $0x34] sm:$0xf]
    %v644 = vld [vmem:[%s629 + $0x38] sm:$0xf]
    %v645 = vld [vmem:[%s629 + $0x3c] sm:$0xf]
    %v646 = vrot.slane %v244, 5
    %v647 = vrot.slane %v245, 4
    %v648 = vsel %vm247, %v647, %v646
    %v649 = vpack.c.b16 %v648, %v648
    %v667 = vunpack.c.l.b16 %v630
    %v668 = vunpack.c.l.b16 %v631
    %v669 = vunpack.c.l.b16 %v632
    %v670 = vunpack.c.l.b16 %v633
    %v671 = vunpack.c.l.b16 %v634
    %v672 = vunpack.c.l.b16 %v635
    %v673 = vunpack.c.l.b16 %v636
    %v674 = vunpack.c.l.b16 %v637
    %v675 = vunpack.c.l.b16 %v638
    %v676 = vunpack.c.l.b16 %v639
    %v677 = vunpack.c.l.b16 %v640
    %v678 = vunpack.c.l.b16 %v641
    %v679 = vunpack.c.l.b16 %v642
    %v680 = vunpack.c.l.b16 %v643
    %v681 = vunpack.c.l.b16 %v644
    %v682 = vunpack.c.l.b16 %v645
    %v683 = vpack.c.b16 %v668, %v667
    %v684 = vpack.c.b16 %v670, %v669
    %v685 = vpack.c.b16 %v672, %v671
    %v686 = vpack.c.b16 %v674, %v673
    %v687 = vpack.c.b16 %v676, %v675
    %v688 = vpack.c.b16 %v678, %v677
    %v689 = vpack.c.b16 %v680, %v679
    %v690 = vpack.c.b16 %v682, %v681
    %699 = vmatpush.bf16.msra.mxu0 %v690
    %700 = vmatpush.bf16.msra.mxu0 %v689
    %701 = vmatpush.bf16.msra.mxu0 %v688
    %702 = vmatpush.bf16.msra.mxu0 %v687
    %703 = vmatpush.bf16.msra.mxu0 %v686
    %704 = vmatpush.bf16.msra.mxu0 %v685
    %705 = vmatpush.bf16.msra.mxu0 %v684
    %706 = vmatpush.bf16.msra.mxu0 %v683
    %707 = vmatmul.bf16.gmra.mxu0 %v649
    %v708 = vpop.f32.mrf.mxu0
    %v709 = vadd.f32 0.0, %v708
    %v710 = vpop.f32.mrf.mxu0
    %711 = vdwg.mxu0
    %v712 = vadd.f32 %v628, %v709
    %s713 = scalar_lea.vmem %s3, 384
    %v714 = vld [vmem:[%s713] sm:$0xf]
    %v715 = vld [vmem:[%s713 + $0x4] sm:$0xf]
    %v716 = vld [vmem:[%s713 + $0x8] sm:$0xf]
    %v717 = vld [vmem:[%s713 + $0xc] sm:$0xf]
    %v718 = vld [vmem:[%s713 + $0x10] sm:$0xf]
    %v719 = vld [vmem:[%s713 + $0x14] sm:$0xf]
    %v720 = vld [vmem:[%s713 + $0x18] sm:$0xf]
    %v721 = vld [vmem:[%s713 + $0x1c] sm:$0xf]
    %v722 = vld [vmem:[%s713 + $0x20] sm:$0xf]
    %v723 = vld [vmem:[%s713 + $0x24] sm:$0xf]
    %v724 = vld [vmem:[%s713 + $0x28] sm:$0xf]
    %v725 = vld [vmem:[%s713 + $0x2c] sm:$0xf]
    %v726 = vld [vmem:[%s713 + $0x30] sm:$0xf]
    %v727 = vld [vmem:[%s713 + $0x34] sm:$0xf]
    %v728 = vld [vmem:[%s713 + $0x38] sm:$0xf]
    %v729 = vld [vmem:[%s713 + $0x3c] sm:$0xf]
    %v730 = vrot.slane %v244, 6
    %v731 = vrot.slane %v245, 5
    %v732 = vsel %vm247, %v731, %v730
    %v733 = vpack.c.b16 %v732, %v732
    %v751 = vunpack.c.l.b16 %v714
    %v752 = vunpack.c.l.b16 %v715
    %v753 = vunpack.c.l.b16 %v716
    %v754 = vunpack.c.l.b16 %v717
    %v755 = vunpack.c.l.b16 %v718
    %v756 = vunpack.c.l.b16 %v719
    %v757 = vunpack.c.l.b16 %v720
    %v758 = vunpack.c.l.b16 %v721
    %v759 = vunpack.c.l.b16 %v722
    %v760 = vunpack.c.l.b16 %v723
    %v761 = vunpack.c.l.b16 %v724
    %v762 = vunpack.c.l.b16 %v725
    %v763 = vunpack.c.l.b16 %v726
    %v764 = vunpack.c.l.b16 %v727
    %v765 = vunpack.c.l.b16 %v728
    %v766 = vunpack.c.l.b16 %v729
    %v767 = vpack.c.b16 %v752, %v751
    %v768 = vpack.c.b16 %v754, %v753
    %v769 = vpack.c.b16 %v756, %v755
    %v770 = vpack.c.b16 %v758, %v757
    %v771 = vpack.c.b16 %v760, %v759
    %v772 = vpack.c.b16 %v762, %v761
    %v773 = vpack.c.b16 %v764, %v763
    %v774 = vpack.c.b16 %v766, %v765
    %783 = vmatpush.bf16.msra.mxu0 %v774
    %784 = vmatpush.bf16.msra.mxu0 %v773
    %785 = vmatpush.bf16.msra.mxu0 %v772
    %786 = vmatpush.bf16.msra.mxu0 %v771
    %787 = vmatpush.bf16.msra.mxu0 %v770
    %788 = vmatpush.bf16.msra.mxu0 %v769
    %789 = vmatpush.bf16.msra.mxu0 %v768
    %790 = vmatpush.bf16.msra.mxu0 %v767
    %791 = vmatmul.bf16.gmra.mxu0 %v733
    %v792 = vpop.f32.mrf.mxu0
    %v793 = vadd.f32 0.0, %v792
    %v794 = vpop.f32.mrf.mxu0
    %795 = vdwg.mxu0
    %v796 = vadd.f32 %v712, %v793
    %s797 = scalar_lea.vmem %s3, 448
    %v798 = vld [vmem:[%s797] sm:$0xf]
    %v799 = vld [vmem:[%s797 + $0x4] sm:$0xf]
    %v800 = vld [vmem:[%s797 + $0x8] sm:$0xf]
    %v801 = vld [vmem:[%s797 + $0xc] sm:$0xf]
    %v802 = vld [vmem:[%s797 + $0x10] sm:$0xf]
    %v803 = vld [vmem:[%s797 + $0x14] sm:$0xf]
    %v804 = vld [vmem:[%s797 + $0x18] sm:$0xf]
    %v805 = vld [vmem:[%s797 + $0x1c] sm:$0xf]
    %v806 = vld [vmem:[%s797 + $0x20] sm:$0xf]
    %v807 = vld [vmem:[%s797 + $0x24] sm:$0xf]
    %v808 = vld [vmem:[%s797 + $0x28] sm:$0xf]
    %v809 = vld [vmem:[%s797 + $0x2c] sm:$0xf]
    %v810 = vld [vmem:[%s797 + $0x30] sm:$0xf]
    %v811 = vld [vmem:[%s797 + $0x34] sm:$0xf]
    %v812 = vld [vmem:[%s797 + $0x38] sm:$0xf]
    %v813 = vld [vmem:[%s797 + $0x3c] sm:$0xf]
    %v814 = vrot.slane %v244, 7
    %v815 = vrot.slane %v245, 6
    %v816 = vsel %vm247, %v815, %v814
    %v817 = vpack.c.b16 %v816, %v816
    %v835 = vunpack.c.l.b16 %v798
    %v836 = vunpack.c.l.b16 %v799
    %v837 = vunpack.c.l.b16 %v800
    %v838 = vunpack.c.l.b16 %v801
    %v839 = vunpack.c.l.b16 %v802
    %v840 = vunpack.c.l.b16 %v803
    %v841 = vunpack.c.l.b16 %v804
    %v842 = vunpack.c.l.b16 %v805
    %v843 = vunpack.c.l.b16 %v806
    %v844 = vunpack.c.l.b16 %v807
    %v845 = vunpack.c.l.b16 %v808
    %v846 = vunpack.c.l.b16 %v809
    %v847 = vunpack.c.l.b16 %v810
    %v848 = vunpack.c.l.b16 %v811
    %v849 = vunpack.c.l.b16 %v812
    %v850 = vunpack.c.l.b16 %v813
    %v851 = vpack.c.b16 %v836, %v835
    %v852 = vpack.c.b16 %v838, %v837
    %v853 = vpack.c.b16 %v840, %v839
    %v854 = vpack.c.b16 %v842, %v841
    %v855 = vpack.c.b16 %v844, %v843
    %v856 = vpack.c.b16 %v846, %v845
    %v857 = vpack.c.b16 %v848, %v847
    %v858 = vpack.c.b16 %v850, %v849
    %867 = vmatpush.bf16.msra.mxu0 %v858
    %868 = vmatpush.bf16.msra.mxu0 %v857
    %869 = vmatpush.bf16.msra.mxu0 %v856
    %870 = vmatpush.bf16.msra.mxu0 %v855
    %871 = vmatpush.bf16.msra.mxu0 %v854
    %872 = vmatpush.bf16.msra.mxu0 %v853
    %873 = vmatpush.bf16.msra.mxu0 %v852
    %874 = vmatpush.bf16.msra.mxu0 %v851
    %875 = vmatmul.bf16.gmra.mxu0 %v817
    %v876 = vpop.f32.mrf.mxu0
    %v877 = vadd.f32 0.0, %v876
    %v878 = vpop.f32.mrf.mxu0
    %879 = vdwg.mxu0
    %v880 = vadd.f32 %v796, %v877
    %v881 = vld [vmem:[%s4] sm:$0x1]
    %v883 = vperm.slane %v881, 0
    %v885 = vadd.f32 %v880, %v883
    %v886 = vmax.f32 %v885, 0.0
    %v887 = vld [vmem:[%s5] sm:$0xff]
    %v888 = vld [vmem:[%s5 + $0x8] sm:$0xff]
    %v889 = vpack.c.bf16 %v888, %v887
    %v890 = vld [vmem:[%s6] sm:$0xff]
    %v891 = vld [vmem:[%s6 + $0x8] sm:$0xff]
    %v892 = vld [vmem:[%s6 + $0x10] sm:$0xff]
    %v893 = vld [vmem:[%s6 + $0x18] sm:$0xff]
    %v894 = vld [vmem:[%s6 + $0x20] sm:$0xff]
    %v895 = vld [vmem:[%s6 + $0x28] sm:$0xff]
    %v896 = vld [vmem:[%s6 + $0x30] sm:$0xff]
    %v897 = vld [vmem:[%s6 + $0x38] sm:$0xff]
    %v898 = vld [vmem:[%s6 + $0x40] sm:$0xff]
    %v899 = vld [vmem:[%s6 + $0x48] sm:$0xff]
    %v900 = vld [vmem:[%s6 + $0x50] sm:$0xff]
    %v901 = vld [vmem:[%s6 + $0x58] sm:$0xff]
    %v902 = vld [vmem:[%s6 + $0x60] sm:$0xff]
    %v903 = vld [vmem:[%s6 + $0x68] sm:$0xff]
    %v904 = vld [vmem:[%s6 + $0x70] sm:$0xff]
    %v905 = vld [vmem:[%s6 + $0x78] sm:$0xff]
    %v906 = vld [vmem:[%s6 + $0x80] sm:$0xff]
    %v907 = vld [vmem:[%s6 + $0x88] sm:$0xff]
    %v908 = vld [vmem:[%s6 + $0x90] sm:$0xff]
    %v909 = vld [vmem:[%s6 + $0x98] sm:$0xff]
    %v910 = vld [vmem:[%s6 + $0xa0] sm:$0xff]
    %v911 = vld [vmem:[%s6 + $0xa8] sm:$0xff]
    %v912 = vld [vmem:[%s6 + $0xb0] sm:$0xff]
    %v913 = vld [vmem:[%s6 + $0xb8] sm:$0xff]
    %v914 = vld [vmem:[%s6 + $0xc0] sm:$0xff]
    %v915 = vld [vmem:[%s6 + $0xc8] sm:$0xff]
    %v916 = vld [vmem:[%s6 + $0xd0] sm:$0xff]
    %v917 = vld [vmem:[%s6 + $0xd8] sm:$0xff]
    %v918 = vld [vmem:[%s6 + $0xe0] sm:$0xff]
    %v919 = vld [vmem:[%s6 + $0xe8] sm:$0xff]
    %v920 = vld [vmem:[%s6 + $0xf0] sm:$0xff]
    %v921 = vld [vmem:[%s6 + $0xf8] sm:$0xff]
    %v922 = vld [vmem:[%s7] sm:$0xf]
    %v924 = vperm.slane %v922, 0
    %v925 = vperm.slane %v922, 1
    %v926 = vperm.slane %v922, 2
    %v927 = vperm.slane %v922, 3
    %v964 = vunpack.c.l.b16 %v890
    %v965 = vunpack.c.h.b16 %v890
    %v966 = vunpack.c.l.b16 %v891
    %v967 = vunpack.c.h.b16 %v891
    %v968 = vunpack.c.l.b16 %v892
    %v969 = vunpack.c.h.b16 %v892
    %v970 = vunpack.c.l.b16 %v893
    %v971 = vunpack.c.h.b16 %v893
    %v972 = vunpack.c.l.b16 %v894
    %v973 = vunpack.c.h.b16 %v894
    %v974 = vunpack.c.l.b16 %v895
    %v975 = vunpack.c.h.b16 %v895
    %v976 = vunpack.c.l.b16 %v896
    %v977 = vunpack.c.h.b16 %v896
    %v978 = vunpack.c.l.b16 %v897
    %v979 = vunpack.c.h.b16 %v897
    %v980 = vunpack.c.l.b16 %v898
    %v981 = vunpack.c.h.b16 %v898
    %v982 = vunpack.c.l.b16 %v899
    %v983 = vunpack.c.h.b16 %v899
    %v984 = vunpack.c.l.b16 %v900
    %v985 = vunpack.c.h.b16 %v900
    %v986 = vunpack.c.l.b16 %v901
    %v987 = vunpack.c.h.b16 %v901
    %v988 = vunpack.c.l.b16 %v902
    %v989 = vunpack.c.h.b16 %v902
    %v990 = vunpack.c.l.b16 %v903
    %v991 = vunpack.c.h.b16 %v903
    %v992 = vunpack.c.l.b16 %v904
    %v993 = vunpack.c.h.b16 %v904
    %v994 = vunpack.c.l.b16 %v905
    %v995 = vunpack.c.h.b16 %v905
    %v996 = vunpack.c.l.b16 %v906
    %v997 = vunpack.c.h.b16 %v906
    %v998 = vunpack.c.l.b16 %v907
    %v999 = vunpack.c.h.b16 %v907
    %v1000 = vunpack.c.l.b16 %v908
    %v1001 = vunpack.c.h.b16 %v908
    %v1002 = vunpack.c.l.b16 %v909
    %v1003 = vunpack.c.h.b16 %v909
    %v1004 = vunpack.c.l.b16 %v910
    %v1005 = vunpack.c.h.b16 %v910
    %v1006 = vunpack.c.l.b16 %v911
    %v1007 = vunpack.c.h.b16 %v911
    %v1008 = vunpack.c.l.b16 %v912
    %v1009 = vunpack.c.h.b16 %v912
    %v1010 = vunpack.c.l.b16 %v913
    %v1011 = vunpack.c.h.b16 %v913
    %v1012 = vunpack.c.l.b16 %v914
    %v1013 = vunpack.c.h.b16 %v914
    %v1014 = vunpack.c.l.b16 %v915
    %v1015 = vunpack.c.h.b16 %v915
    %v1016 = vunpack.c.l.b16 %v916
    %v1017 = vunpack.c.h.b16 %v916
    %v1018 = vunpack.c.l.b16 %v917
    %v1019 = vunpack.c.h.b16 %v917
    %v1020 = vunpack.c.l.b16 %v918
    %v1021 = vunpack.c.h.b16 %v918
    %v1022 = vunpack.c.l.b16 %v919
    %v1023 = vunpack.c.h.b16 %v919
    %v1024 = vunpack.c.l.b16 %v920
    %v1025 = vunpack.c.h.b16 %v920
    %v1026 = vunpack.c.l.b16 %v921
    %v1027 = vunpack.c.h.b16 %v921
    %v1028 = vpack.c.b16 %v968, %v964
    %v1029 = vpack.c.b16 %v969, %v965
    %v1030 = vpack.c.b16 %v970, %v966
    %v1031 = vpack.c.b16 %v971, %v967
    %v1032 = vpack.c.b16 %v976, %v972
    %v1033 = vpack.c.b16 %v977, %v973
    %v1034 = vpack.c.b16 %v978, %v974
    %v1035 = vpack.c.b16 %v979, %v975
    %v1036 = vpack.c.b16 %v984, %v980
    %v1037 = vpack.c.b16 %v985, %v981
    %v1038 = vpack.c.b16 %v986, %v982
    %v1039 = vpack.c.b16 %v987, %v983
    %v1040 = vpack.c.b16 %v992, %v988
    %v1041 = vpack.c.b16 %v993, %v989
    %v1042 = vpack.c.b16 %v994, %v990
    %v1043 = vpack.c.b16 %v995, %v991
    %v1044 = vpack.c.b16 %v1000, %v996
    %v1045 = vpack.c.b16 %v1001, %v997
    %v1046 = vpack.c.b16 %v1002, %v998
    %v1047 = vpack.c.b16 %v1003, %v999
    %v1048 = vpack.c.b16 %v1008, %v1004
    %v1049 = vpack.c.b16 %v1009, %v1005
    %v1050 = vpack.c.b16 %v1010, %v1006
    %v1051 = vpack.c.b16 %v1011, %v1007
    %v1052 = vpack.c.b16 %v1016, %v1012
    %v1053 = vpack.c.b16 %v1017, %v1013
    %v1054 = vpack.c.b16 %v1018, %v1014
    %v1055 = vpack.c.b16 %v1019, %v1015
    %v1056 = vpack.c.b16 %v1024, %v1020
    %v1057 = vpack.c.b16 %v1025, %v1021
    %v1058 = vpack.c.b16 %v1026, %v1022
    %v1059 = vpack.c.b16 %v1027, %v1023
    %1092 = vmatpush.bf16.msra.mxu0 %v1056
    %1093 = vmatpush.bf16.msra.mxu0 %v1052
    %1094 = vmatpush.bf16.msra.mxu0 %v1048
    %1095 = vmatpush.bf16.msra.mxu0 %v1044
    %1096 = vmatpush.bf16.msra.mxu0 %v1040
    %1097 = vmatpush.bf16.msra.mxu0 %v1036
    %1098 = vmatpush.bf16.msra.mxu0 %v1032
    %1099 = vmatpush.bf16.msra.mxu0 %v1028
    %1100 = vmatmul.bf16.gmra.mxu0 %v889
    %v1101 = vpop.f32.mrf.mxu0
    %v1102 = vadd.f32 %v924, %v1101
    %v1103 = vpop.f32.mrf.mxu0
    %v1104 = vadd.f32 %v924, %v1103
    %1105 = vdwg.mxu0
    %1106 = vmatpush.bf16.msra.mxu0 %v1057
    %1107 = vmatpush.bf16.msra.mxu0 %v1053
    %1108 = vmatpush.bf16.msra.mxu0 %v1049
    %1109 = vmatpush.bf16.msra.mxu0 %v1045
    %1110 = vmatpush.bf16.msra.mxu0 %v1041
    %1111 = vmatpush.bf16.msra.mxu0 %v1037
    %1112 = vmatpush.bf16.msra.mxu0 %v1033
    %1113 = vmatpush.bf16.msra.mxu0 %v1029
    %1114 = vmatmul.bf16.gmra.mxu0 %v889
    %v1115 = vpop.f32.mrf.mxu0
    %v1116 = vadd.f32 %v925, %v1115
    %v1117 = vpop.f32.mrf.mxu0
    %v1118 = vadd.f32 %v925, %v1117
    %1119 = vdwg.mxu0
    %1120 = vmatpush.bf16.msra.mxu0 %v1058
    %1121 = vmatpush.bf16.msra.mxu0 %v1054
    %1122 = vmatpush.bf16.msra.mxu0 %v1050
    %1123 = vmatpush.bf16.msra.mxu0 %v1046
    %1124 = vmatpush.bf16.msra.mxu0 %v1042
    %1125 = vmatpush.bf16.msra.mxu0 %v1038
    %1126 = vmatpush.bf16.msra.mxu0 %v1034
    %1127 = vmatpush.bf16.msra.mxu0 %v1030
    %1128 = vmatmul.bf16.gmra.mxu0 %v889
    %v1129 = vpop.f32.mrf.mxu0
    %v1130 = vadd.f32 %v926, %v1129
    %v1131 = vpop.f32.mrf.mxu0
    %v1132 = vadd.f32 %v926, %v1131
    %1133 = vdwg.mxu0
    %1134 = vmatpush.bf16.msra.mxu0 %v1059
    %1135 = vmatpush.bf16.msra.mxu0 %v1055
    %1136 = vmatpush.bf16.msra.mxu0 %v1051
    %1137 = vmatpush.bf16.msra.mxu0 %v1047
    %1138 = vmatpush.bf16.msra.mxu0 %v1043
    %1139 = vmatpush.bf16.msra.mxu0 %v1039
    %1140 = vmatpush.bf16.msra.mxu0 %v1035
    %1141 = vmatpush.bf16.msra.mxu0 %v1031
    %1142 = vmatmul.bf16.gmra.mxu0 %v889
    %v1143 = vpop.f32.mrf.mxu0
    %v1144 = vadd.f32 %v927, %v1143
    %v1145 = vpop.f32.mrf.mxu0
    %v1146 = vadd.f32 %v927, %v1145
    %1147 = vdwg.mxu0
    %v1148 = vpack.c.bf16 %v886, %v886
    %v1149 = vld [vmem:[%s8] sm:$0xff]
    %v1150 = vld [vmem:[%s8 + $0x8] sm:$0xff]
    %v1151 = vld [vmem:[%s8 + $0x10] sm:$0xff]
    %v1152 = vld [vmem:[%s8 + $0x18] sm:$0xff]
    %v1153 = vld [vmem:[%s8 + $0x20] sm:$0xff]
    %v1154 = vld [vmem:[%s8 + $0x28] sm:$0xff]
    %v1155 = vld [vmem:[%s8 + $0x30] sm:$0xff]
    %v1156 = vld [vmem:[%s8 + $0x38] sm:$0xff]
    %v1157 = vld [vmem:[%s8 + $0x40] sm:$0xff]
    %v1158 = vld [vmem:[%s8 + $0x48] sm:$0xff]
    %v1159 = vld [vmem:[%s8 + $0x50] sm:$0xff]
    %v1160 = vld [vmem:[%s8 + $0x58] sm:$0xff]
    %v1161 = vld [vmem:[%s8 + $0x60] sm:$0xff]
    %v1162 = vld [vmem:[%s8 + $0x68] sm:$0xff]
    %v1163 = vld [vmem:[%s8 + $0x70] sm:$0xff]
    %v1164 = vld [vmem:[%s8 + $0x78] sm:$0xff]
    %v1165 = vld [vmem:[%s8 + $0x80] sm:$0xff]
    %v1166 = vld [vmem:[%s8 + $0x88] sm:$0xff]
    %v1167 = vld [vmem:[%s8 + $0x90] sm:$0xff]
    %v1168 = vld [vmem:[%s8 + $0x98] sm:$0xff]
    %v1169 = vld [vmem:[%s8 + $0xa0] sm:$0xff]
    %v1170 = vld [vmem:[%s8 + $0xa8] sm:$0xff]
    %v1171 = vld [vmem:[%s8 + $0xb0] sm:$0xff]
    %v1172 = vld [vmem:[%s8 + $0xb8] sm:$0xff]
    %v1173 = vld [vmem:[%s8 + $0xc0] sm:$0xff]
    %v1174 = vld [vmem:[%s8 + $0xc8] sm:$0xff]
    %v1175 = vld [vmem:[%s8 + $0xd0] sm:$0xff]
    %v1176 = vld [vmem:[%s8 + $0xd8] sm:$0xff]
    %v1177 = vld [vmem:[%s8 + $0xe0] sm:$0xff]
    %v1178 = vld [vmem:[%s8 + $0xe8] sm:$0xff]
    %v1179 = vld [vmem:[%s8 + $0xf0] sm:$0xff]
    %v1180 = vld [vmem:[%s8 + $0xf8] sm:$0xff]
    %v1213 = vunpack.c.l.b16 %v1149
    %v1214 = vunpack.c.h.b16 %v1149
    %v1215 = vunpack.c.l.b16 %v1150
    %v1216 = vunpack.c.h.b16 %v1150
    %v1217 = vunpack.c.l.b16 %v1151
    %v1218 = vunpack.c.h.b16 %v1151
    %v1219 = vunpack.c.l.b16 %v1152
    %v1220 = vunpack.c.h.b16 %v1152
    %v1221 = vunpack.c.l.b16 %v1153
    %v1222 = vunpack.c.h.b16 %v1153
    %v1223 = vunpack.c.l.b16 %v1154
    %v1224 = vunpack.c.h.b16 %v1154
    %v1225 = vunpack.c.l.b16 %v1155
    %v1226 = vunpack.c.h.b16 %v1155
    %v1227 = vunpack.c.l.b16 %v1156
    %v1228 = vunpack.c.h.b16 %v1156
    %v1229 = vunpack.c.l.b16 %v1157
    %v1230 = vunpack.c.h.b16 %v1157
    %v1231 = vunpack.c.l.b16 %v1158
    %v1232 = vunpack.c.h.b16 %v1158
    %v1233 = vunpack.c.l.b16 %v1159
    %v1234 = vunpack.c.h.b16 %v1159
    %v1235 = vunpack.c.l.b16 %v1160
    %v1236 = vunpack.c.h.b16 %v1160
    %v1237 = vunpack.c.l.b16 %v1161
    %v1238 = vunpack.c.h.b16 %v1161
    %v1239 = vunpack.c.l.b16 %v1162
    %v1240 = vunpack.c.h.b16 %v1162
    %v1241 = vunpack.c.l.b16 %v1163
    %v1242 = vunpack.c.h.b16 %v1163
    %v1243 = vunpack.c.l.b16 %v1164
    %v1244 = vunpack.c.h.b16 %v1164
    %v1245 = vunpack.c.l.b16 %v1165
    %v1246 = vunpack.c.h.b16 %v1165
    %v1247 = vunpack.c.l.b16 %v1166
    %v1248 = vunpack.c.h.b16 %v1166
    %v1249 = vunpack.c.l.b16 %v1167
    %v1250 = vunpack.c.h.b16 %v1167
    %v1251 = vunpack.c.l.b16 %v1168
    %v1252 = vunpack.c.h.b16 %v1168
    %v1253 = vunpack.c.l.b16 %v1169
    %v1254 = vunpack.c.h.b16 %v1169
    %v1255 = vunpack.c.l.b16 %v1170
    %v1256 = vunpack.c.h.b16 %v1170
    %v1257 = vunpack.c.l.b16 %v1171
    %v1258 = vunpack.c.h.b16 %v1171
    %v1259 = vunpack.c.l.b16 %v1172
    %v1260 = vunpack.c.h.b16 %v1172
    %v1261 = vunpack.c.l.b16 %v1173
    %v1262 = vunpack.c.h.b16 %v1173
    %v1263 = vunpack.c.l.b16 %v1174
    %v1264 = vunpack.c.h.b16 %v1174
    %v1265 = vunpack.c.l.b16 %v1175
    %v1266 = vunpack.c.h.b16 %v1175
    %v1267 = vunpack.c.l.b16 %v1176
    %v1268 = vunpack.c.h.b16 %v1176
    %v1269 = vunpack.c.l.b16 %v1177
    %v1270 = vunpack.c.h.b16 %v1177
    %v1271 = vunpack.c.l.b16 %v1178
    %v1272 = vunpack.c.h.b16 %v1178
    %v1273 = vunpack.c.l.b16 %v1179
    %v1274 = vunpack.c.h.b16 %v1179
    %v1275 = vunpack.c.l.b16 %v1180
    %v1276 = vunpack.c.h.b16 %v1180
    %v1277 = vpack.c.b16 %v1217, %v1213
    %v1278 = vpack.c.b16 %v1218, %v1214
    %v1279 = vpack.c.b16 %v1219, %v1215
    %v1280 = vpack.c.b16 %v1220, %v1216
    %v1281 = vpack.c.b16 %v1225, %v1221
    %v1282 = vpack.c.b16 %v1226, %v1222
    %v1283 = vpack.c.b16 %v1227, %v1223
    %v1284 = vpack.c.b16 %v1228, %v1224
    %v1285 = vpack.c.b16 %v1233, %v1229
    %v1286 = vpack.c.b16 %v1234, %v1230
    %v1287 = vpack.c.b16 %v1235, %v1231
    %v1288 = vpack.c.b16 %v1236, %v1232
    %v1289 = vpack.c.b16 %v1241, %v1237
    %v1290 = vpack.c.b16 %v1242, %v1238
    %v1291 = vpack.c.b16 %v1243, %v1239
    %v1292 = vpack.c.b16 %v1244, %v1240
    %v1293 = vpack.c.b16 %v1249, %v1245
    %v1294 = vpack.c.b16 %v1250, %v1246
    %v1295 = vpack.c.b16 %v1251, %v1247
    %v1296 = vpack.c.b16 %v1252, %v1248
    %v1297 = vpack.c.b16 %v1257, %v1253
    %v1298 = vpack.c.b16 %v1258, %v1254
    %v1299 = vpack.c.b16 %v1259, %v1255
    %v1300 = vpack.c.b16 %v1260, %v1256
    %v1301 = vpack.c.b16 %v1265, %v1261
    %v1302 = vpack.c.b16 %v1266, %v1262
    %v1303 = vpack.c.b16 %v1267, %v1263
    %v1304 = vpack.c.b16 %v1268, %v1264
    %v1305 = vpack.c.b16 %v1273, %v1269
    %v1306 = vpack.c.b16 %v1274, %v1270
    %v1307 = vpack.c.b16 %v1275, %v1271
    %v1308 = vpack.c.b16 %v1276, %v1272
    %1341 = vmatpush.bf16.msra.mxu0 %v1305
    %1342 = vmatpush.bf16.msra.mxu0 %v1301
    %1343 = vmatpush.bf16.msra.mxu0 %v1297
    %1344 = vmatpush.bf16.msra.mxu0 %v1293
    %1345 = vmatpush.bf16.msra.mxu0 %v1289
    %1346 = vmatpush.bf16.msra.mxu0 %v1285
    %1347 = vmatpush.bf16.msra.mxu0 %v1281
    %1348 = vmatpush.bf16.msra.mxu0 %v1277
    %1349 = vmatmul.bf16.gmra.mxu0 %v1148
    %v1350 = vpop.f32.mrf.mxu0
    %v1351 = vadd.f32 0.0, %v1350
    %v1352 = vpop.f32.mrf.mxu0
    %1353 = vdwg.mxu0
    %1354 = vmatpush.bf16.msra.mxu0 %v1306
    %1355 = vmatpush.bf16.msra.mxu0 %v1302
    %1356 = vmatpush.bf16.msra.mxu0 %v1298
    %1357 = vmatpush.bf16.msra.mxu0 %v1294
    %1358 = vmatpush.bf16.msra.mxu0 %v1290
    %1359 = vmatpush.bf16.msra.mxu0 %v1286
    %1360 = vmatpush.bf16.msra.mxu0 %v1282
    %1361 = vmatpush.bf16.msra.mxu0 %v1278
    %1362 = vmatmul.bf16.gmra.mxu0 %v1148
    %v1363 = vpop.f32.mrf.mxu0
    %v1364 = vadd.f32 0.0, %v1363
    %v1365 = vpop.f32.mrf.mxu0
    %1366 = vdwg.mxu0
    %1367 = vmatpush.bf16.msra.mxu0 %v1307
    %1368 = vmatpush.bf16.msra.mxu0 %v1303
    %1369 = vmatpush.bf16.msra.mxu0 %v1299
    %1370 = vmatpush.bf16.msra.mxu0 %v1295
    %1371 = vmatpush.bf16.msra.mxu0 %v1291
    %1372 = vmatpush.bf16.msra.mxu0 %v1287
    %1373 = vmatpush.bf16.msra.mxu0 %v1283
    %1374 = vmatpush.bf16.msra.mxu0 %v1279
    %1375 = vmatmul.bf16.gmra.mxu0 %v1148
    %v1376 = vpop.f32.mrf.mxu0
    %v1377 = vadd.f32 0.0, %v1376
    %v1378 = vpop.f32.mrf.mxu0
    %1379 = vdwg.mxu0
    %1380 = vmatpush.bf16.msra.mxu0 %v1308
    %1381 = vmatpush.bf16.msra.mxu0 %v1304
    %1382 = vmatpush.bf16.msra.mxu0 %v1300
    %1383 = vmatpush.bf16.msra.mxu0 %v1296
    %1384 = vmatpush.bf16.msra.mxu0 %v1292
    %1385 = vmatpush.bf16.msra.mxu0 %v1288
    %1386 = vmatpush.bf16.msra.mxu0 %v1284
    %1387 = vmatpush.bf16.msra.mxu0 %v1280
    %1388 = vmatmul.bf16.gmra.mxu0 %v1148
    %v1389 = vpop.f32.mrf.mxu0
    %v1390 = vadd.f32 0.0, %v1389
    %v1391 = vpop.f32.mrf.mxu0
    %1392 = vdwg.mxu0
    %v1393 = vadd.f32 %v1102, %v1351
    %v1394 = vadd.f32 %v1116, %v1364
    %v1395 = vadd.f32 %v1130, %v1377
    %v1396 = vadd.f32 %v1144, %v1390
    %v1397 = vxor.u32 %v1393, 2147483648
    %v1398 = vmul.f32 %v1397, 1.442695
    %v1399 = vpow.pop %v1398
    %v1400 = vadd.f32 %v1399, 1.0
    %v1401 = vrcp.pop %v1400
    %v1402 = vmul.f32 %v1400, %v1401
    %v1403 = vsub.f32 1.0, %v1402
    %v1404 = vmul.f32 %v1401, %v1403
    %v1405 = vadd.f32 %v1401, %v1404
    %vm1406 = vweird.f32 %v1400
    %vm1407 = vweird.f32 %v1401
    %vm1408 = vmor %vm1406, %vm1407
    %v1409 = vsel %vm1408, %v1401, %v1405
    %v1410 = vand.u32 2147483647, %v1400
    %vm1411 = vcmp.eq.f32.partialorder %v1410, 8.507059e+37
    %v1412 = vand.u32 %v1400, 2147483648
    %v1413 = vor.u32 1.1754944e-38, %v1412
    %v1414 = vsel %vm1411, %v1413, %v1409
    %v1415 = vmul.f32 1.0, %v1414
    %v1416 = vxor.u32 %v1394, 2147483648
    %v1417 = vmul.f32 %v1416, 1.442695
    %v1418 = vpow.pop %v1417
    %v1419 = vadd.f32 %v1418, 1.0
    %v1420 = vrcp.pop %v1419
    %v1421 = vmul.f32 %v1419, %v1420
    %v1422 = vsub.f32 1.0, %v1421
    %v1423 = vmul.f32 %v1420, %v1422
    %v1424 = vadd.f32 %v1420, %v1423
    %vm1425 = vweird.f32 %v1419
    %vm1426 = vweird.f32 %v1420
    %vm1427 = vmor %vm1425, %vm1426
    %v1428 = vsel %vm1427, %v1420, %v1424
    %v1429 = vand.u32 2147483647, %v1419
    %vm1430 = vcmp.eq.f32.partialorder %v1429, 8.507059e+37
    %v1431 = vand.u32 %v1419, 2147483648
    %v1432 = vor.u32 1.1754944e-38, %v1431
    %v1433 = vsel %vm1430, %v1432, %v1428
    %v1434 = vmul.f32 1.0, %v1433
    %v1435 = vtanh.pop %v1395
    %v1436 = vxor.u32 %v1396, 2147483648
    %v1437 = vmul.f32 %v1436, 1.442695
    %v1438 = vpow.pop %v1437
    %v1439 = vadd.f32 %v1438, 1.0
    %v1440 = vrcp.pop %v1439
    %v1441 = vmul.f32 %v1439, %v1440
    %v1442 = vsub.f32 1.0, %v1441
    %v1443 = vmul.f32 %v1440, %v1442
    %v1444 = vadd.f32 %v1440, %v1443
    %vm1445 = vweird.f32 %v1439
    %vm1446 = vweird.f32 %v1440
    %vm1447 = vmor %vm1445, %vm1446
    %v1448 = vsel %vm1447, %v1440, %v1444
    %v1449 = vand.u32 2147483647, %v1439
    %vm1450 = vcmp.eq.f32.partialorder %v1449, 8.507059e+37
    %v1451 = vand.u32 %v1439, 2147483648
    %v1452 = vor.u32 1.1754944e-38, %v1451
    %v1453 = vsel %vm1450, %v1452, %v1448
    %v1454 = vmul.f32 1.0, %v1453
    %v1455 = vmul.f32 %v1434, 0.0
    %v1456 = vmul.f32 %v1415, %v1435
    %v1457 = vadd.f32 %v1455, %v1456
    %v1458 = vtanh.pop %v1457
    %v1459 = vmul.f32 %v1454, %v1458
    %v1461 = vrot.slane %v1459, 1
    %1463 = vst [vmem:[#allocation2] sm:$0x1] %v1459
    %1464 = vst [vmem:[#allocation2 + $0x8] sm:$0x1] %v1461
    %v1465 = vpack.c.bf16 %v1459, %v1459
    %v1466 = vld [vmem:[%s8] sm:$0xff]
    %v1467 = vld [vmem:[%s8 + $0x8] sm:$0xff]
    %v1468 = vld [vmem:[%s8 + $0x10] sm:$0xff]
    %v1469 = vld [vmem:[%s8 + $0x18] sm:$0xff]
    %v1470 = vld [vmem:[%s8 + $0x20] sm:$0xff]
    %v1471 = vld [vmem:[%s8 + $0x28] sm:$0xff]
    %v1472 = vld [vmem:[%s8 + $0x30] sm:$0xff]
    %v1473 = vld [vmem:[%s8 + $0x38] sm:$0xff]
    %v1474 = vld [vmem:[%s8 + $0x40] sm:$0xff]
    %v1475 = vld [vmem:[%s8 + $0x48] sm:$0xff]
    %v1476 = vld [vmem:[%s8 + $0x50] sm:$0xff]
    %v1477 = vld [vmem:[%s8 + $0x58] sm:$0xff]
    %v1478 = vld [vmem:[%s8 + $0x60] sm:$0xff]
    %v1479 = vld [vmem:[%s8 + $0x68] sm:$0xff]
    %v1480 = vld [vmem:[%s8 + $0x70] sm:$0xff]
    %v1481 = vld [vmem:[%s8 + $0x78] sm:$0xff]
    %v1482 = vld [vmem:[%s8 + $0x80] sm:$0xff]
    %v1483 = vld [vmem:[%s8 + $0x88] sm:$0xff]
    %v1484 = vld [vmem:[%s8 + $0x90] sm:$0xff]
    %v1485 = vld [vmem:[%s8 + $0x98] sm:$0xff]
    %v1486 = vld [vmem:[%s8 + $0xa0] sm:$0xff]
    %v1487 = vld [vmem:[%s8 + $0xa8] sm:$0xff]
    %v1488 = vld [vmem:[%s8 + $0xb0] sm:$0xff]
    %v1489 = vld [vmem:[%s8 + $0xb8] sm:$0xff]
    %v1490 = vld [vmem:[%s8 + $0xc0] sm:$0xff]
    %v1491 = vld [vmem:[%s8 + $0xc8] sm:$0xff]
    %v1492 = vld [vmem:[%s8 + $0xd0] sm:$0xff]
    %v1493 = vld [vmem:[%s8 + $0xd8] sm:$0xff]
    %v1494 = vld [vmem:[%s8 + $0xe0] sm:$0xff]
    %v1495 = vld [vmem:[%s8 + $0xe8] sm:$0xff]
    %v1496 = vld [vmem:[%s8 + $0xf0] sm:$0xff]
    %v1497 = vld [vmem:[%s8 + $0xf8] sm:$0xff]
    %v1530 = vunpack.c.l.b16 %v1466
    %v1531 = vunpack.c.h.b16 %v1466
    %v1532 = vunpack.c.l.b16 %v1467
    %v1533 = vunpack.c.h.b16 %v1467
    %v1534 = vunpack.c.l.b16 %v1468
    %v1535 = vunpack.c.h.b16 %v1468
    %v1536 = vunpack.c.l.b16 %v1469
    %v1537 = vunpack.c.h.b16 %v1469
    %v1538 = vunpack.c.l.b16 %v1470
    %v1539 = vunpack.c.h.b16 %v1470
    %v1540 = vunpack.c.l.b16 %v1471
    %v1541 = vunpack.c.h.b16 %v1471
    %v1542 = vunpack.c.l.b16 %v1472
    %v1543 = vunpack.c.h.b16 %v1472
    %v1544 = vunpack.c.l.b16 %v1473
    %v1545 = vunpack.c.h.b16 %v1473
    %v1546 = vunpack.c.l.b16 %v1474
    %v1547 = vunpack.c.h.b16 %v1474
    %v1548 = vunpack.c.l.b16 %v1475
    %v1549 = vunpack.c.h.b16 %v1475
    %v1550 = vunpack.c.l.b16 %v1476
    %v1551 = vunpack.c.h.b16 %v1476
    %v1552 = vunpack.c.l.b16 %v1477
    %v1553 = vunpack.c.h.b16 %v1477
    %v1554 = vunpack.c.l.b16 %v1478
    %v1555 = vunpack.c.h.b16 %v1478
    %v1556 = vunpack.c.l.b16 %v1479
    %v1557 = vunpack.c.h.b16 %v1479
    %v1558 = vunpack.c.l.b16 %v1480
    %v1559 = vunpack.c.h.b16 %v1480
    %v1560 = vunpack.c.l.b16 %v1481
    %v1561 = vunpack.c.h.b16 %v1481
    %v1562 = vunpack.c.l.b16 %v1482
    %v1563 = vunpack.c.h.b16 %v1482
    %v1564 = vunpack.c.l.b16 %v1483
    %v1565 = vunpack.c.h.b16 %v1483
    %v1566 = vunpack.c.l.b16 %v1484
    %v1567 = vunpack.c.h.b16 %v1484
    %v1568 = vunpack.c.l.b16 %v1485
    %v1569 = vunpack.c.h.b16 %v1485
    %v1570 = vunpack.c.l.b16 %v1486
    %v1571 = vunpack.c.h.b16 %v1486
    %v1572 = vunpack.c.l.b16 %v1487
    %v1573 = vunpack.c.h.b16 %v1487
    %v1574 = vunpack.c.l.b16 %v1488
    %v1575 = vunpack.c.h.b16 %v1488
    %v1576 = vunpack.c.l.b16 %v1489
    %v1577 = vunpack.c.h.b16 %v1489
    %v1578 = vunpack.c.l.b16 %v1490
    %v1579 = vunpack.c.h.b16 %v1490
    %v1580 = vunpack.c.l.b16 %v1491
    %v1581 = vunpack.c.h.b16 %v1491
    %v1582 = vunpack.c.l.b16 %v1492
    %v1583 = vunpack.c.h.b16 %v1492
    %v1584 = vunpack.c.l.b16 %v1493
    %v1585 = vunpack.c.h.b16 %v1493
    %v1586 = vunpack.c.l.b16 %v1494
    %v1587 = vunpack.c.h.b16 %v1494
    %v1588 = vunpack.c.l.b16 %v1495
    %v1589 = vunpack.c.h.b16 %v1495
    %v1590 = vunpack.c.l.b16 %v1496
    %v1591 = vunpack.c.h.b16 %v1496
    %v1592 = vunpack.c.l.b16 %v1497
    %v1593 = vunpack.c.h.b16 %v1497
    %v1594 = vpack.c.b16 %v1534, %v1530
    %v1595 = vpack.c.b16 %v1535, %v1531
    %v1596 = vpack.c.b16 %v1536, %v1532
    %v1597 = vpack.c.b16 %v1537, %v1533
    %v1598 = vpack.c.b16 %v1542, %v1538
    %v1599 = vpack.c.b16 %v1543, %v1539
    %v1600 = vpack.c.b16 %v1544, %v1540
    %v1601 = vpack.c.b16 %v1545, %v1541
    %v1602 = vpack.c.b16 %v1550, %v1546
    %v1603 = vpack.c.b16 %v1551, %v1547
    %v1604 = vpack.c.b16 %v1552, %v1548
    %v1605 = vpack.c.b16 %v1553, %v1549
    %v1606 = vpack.c.b16 %v1558, %v1554
    %v1607 = vpack.c.b16 %v1559, %v1555
    %v1608 = vpack.c.b16 %v1560, %v1556
    %v1609 = vpack.c.b16 %v1561, %v1557
    %v1610 = vpack.c.b16 %v1566, %v1562
    %v1611 = vpack.c.b16 %v1567, %v1563
    %v1612 = vpack.c.b16 %v1568, %v1564
    %v1613 = vpack.c.b16 %v1569, %v1565
    %v1614 = vpack.c.b16 %v1574, %v1570
    %v1615 = vpack.c.b16 %v1575, %v1571
    %v1616 = vpack.c.b16 %v1576, %v1572
    %v1617 = vpack.c.b16 %v1577, %v1573
    %v1618 = vpack.c.b16 %v1582, %v1578
    %v1619 = vpack.c.b16 %v1583, %v1579
    %v1620 = vpack.c.b16 %v1584, %v1580
    %v1621 = vpack.c.b16 %v1585, %v1581
    %v1622 = vpack.c.b16 %v1590, %v1586
    %v1623 = vpack.c.b16 %v1591, %v1587
    %v1624 = vpack.c.b16 %v1592, %v1588
    %v1625 = vpack.c.b16 %v1593, %v1589
    %1658 = vmatpush.bf16.msra.mxu0 %v1622
    %1659 = vmatpush.bf16.msra.mxu0 %v1618
    %1660 = vmatpush.bf16.msra.mxu0 %v1614
    %1661 = vmatpush.bf16.msra.mxu0 %v1610
    %1662 = vmatpush.bf16.msra.mxu0 %v1606
    %1663 = vmatpush.bf16.msra.mxu0 %v1602
    %1664 = vmatpush.bf16.msra.mxu0 %v1598
    %1665 = vmatpush.bf16.msra.mxu0 %v1594
    %1666 = vmatmul.bf16.gmra.mxu0 %v1465
    %v1667 = vpop.f32.mrf.mxu0
    %v1668 = vadd.f32 0.0, %v1667
    %v1669 = vpop.f32.mrf.mxu0
    %1670 = vdwg.mxu0
    %1671 = vmatpush.bf16.msra.mxu0 %v1623
    %1672 = vmatpush.bf16.msra.mxu0 %v1619
    %1673 = vmatpush.bf16.msra.mxu0 %v1615
    %1674 = vmatpush.bf16.msra.mxu0 %v1611
    %1675 = vmatpush.bf16.msra.mxu0 %v1607
    %1676 = vmatpush.bf16.msra.mxu0 %v1603
    %1677 = vmatpush.bf16.msra.mxu0 %v1599
    %1678 = vmatpush.bf16.msra.mxu0 %v1595
    %1679 = vmatmul.bf16.gmra.mxu0 %v1465
    %v1680 = vpop.f32.mrf.mxu0
    %v1681 = vadd.f32 0.0, %v1680
    %v1682 = vpop.f32.mrf.mxu0
    %1683 = vdwg.mxu0
    %1684 = vmatpush.bf16.msra.mxu0 %v1624
    %1685 = vmatpush.bf16.msra.mxu0 %v1620
    %1686 = vmatpush.bf16.msra.mxu0 %v1616
    %1687 = vmatpush.bf16.msra.mxu0 %v1612
    %1688 = vmatpush.bf16.msra.mxu0 %v1608
    %1689 = vmatpush.bf16.msra.mxu0 %v1604
    %1690 = vmatpush.bf16.msra.mxu0 %v1600
    %1691 = vmatpush.bf16.msra.mxu0 %v1596
    %1692 = vmatmul.bf16.gmra.mxu0 %v1465
    %v1693 = vpop.f32.mrf.mxu0
    %v1694 = vadd.f32 0.0, %v1693
    %v1695 = vpop.f32.mrf.mxu0
    %1696 = vdwg.mxu0
    %1697 = vmatpush.bf16.msra.mxu0 %v1625
    %1698 = vmatpush.bf16.msra.mxu0 %v1621
    %1699 = vmatpush.bf16.msra.mxu0 %v1617
    %1700 = vmatpush.bf16.msra.mxu0 %v1613
    %1701 = vmatpush.bf16.msra.mxu0 %v1609
    %1702 = vmatpush.bf16.msra.mxu0 %v1605
    %1703 = vmatpush.bf16.msra.mxu0 %v1601
    %1704 = vmatpush.bf16.msra.mxu0 %v1597
    %1705 = vmatmul.bf16.gmra.mxu0 %v1465
    %v1706 = vpop.f32.mrf.mxu0
    %v1707 = vadd.f32 0.0, %v1706
    %v1708 = vpop.f32.mrf.mxu0
    %1709 = vdwg.mxu0
    %v1714 = vrot.slane %v1668, 6
    %v1715 = vrot.slane %v1681, 6
    %v1716 = vrot.slane %v1694, 6
    %v1717 = vrot.slane %v1707, 6
    %v1722 = vadd.f32 %v1102, %v1714
    %v1723 = vadd.f32 %v1116, %v1715
    %v1724 = vadd.f32 %v1130, %v1716
    %v1725 = vadd.f32 %v1144, %v1717
    %v1726 = vxor.u32 %v1722, 2147483648
    %v1727 = vmul.f32 %v1726, 1.442695
    %v1728 = vpow.pop %v1727
    %v1729 = vadd.f32 %v1728, 1.0
    %v1730 = vrcp.pop %v1729
    %v1731 = vmul.f32 %v1729, %v1730
    %v1732 = vsub.f32 1.0, %v1731
    %v1733 = vmul.f32 %v1730, %v1732
    %v1734 = vadd.f32 %v1730, %v1733
    %vm1735 = vweird.f32 %v1729
    %vm1736 = vweird.f32 %v1730
    %vm1737 = vmor %vm1735, %vm1736
    %v1738 = vsel %vm1737, %v1730, %v1734
    %v1739 = vand.u32 2147483647, %v1729
    %vm1740 = vcmp.eq.f32.partialorder %v1739, 8.507059e+37
    %v1741 = vand.u32 %v1729, 2147483648
    %v1742 = vor.u32 1.1754944e-38, %v1741
    %v1743 = vsel %vm1740, %v1742, %v1738
    %v1744 = vmul.f32 1.0, %v1743
    %v1745 = vxor.u32 %v1723, 2147483648
    %v1746 = vmul.f32 %v1745, 1.442695
    %v1747 = vpow.pop %v1746
    %v1748 = vadd.f32 %v1747, 1.0
    %v1749 = vrcp.pop %v1748
    %v1750 = vmul.f32 %v1748, %v1749
    %v1751 = vsub.f32 1.0, %v1750
    %v1752 = vmul.f32 %v1749, %v1751
    %v1753 = vadd.f32 %v1749, %v1752
    %vm1754 = vweird.f32 %v1748
    %vm1755 = vweird.f32 %v1749
    %vm1756 = vmor %vm1754, %vm1755
    %v1757 = vsel %vm1756, %v1749, %v1753
    %v1758 = vand.u32 2147483647, %v1748
    %vm1759 = vcmp.eq.f32.partialorder %v1758, 8.507059e+37
    %v1760 = vand.u32 %v1748, 2147483648
    %v1761 = vor.u32 1.1754944e-38, %v1760
    %v1762 = vsel %vm1759, %v1761, %v1757
    %v1763 = vmul.f32 1.0, %v1762
    %v1764 = vtanh.pop %v1724
    %v1765 = vxor.u32 %v1725, 2147483648
    %v1766 = vmul.f32 %v1765, 1.442695
    %v1767 = vpow.pop %v1766
    %v1768 = vadd.f32 %v1767, 1.0
    %v1769 = vrcp.pop %v1768
    %v1770 = vmul.f32 %v1768, %v1769
    %v1771 = vsub.f32 1.0, %v1770
    %v1772 = vmul.f32 %v1769, %v1771
    %v1773 = vadd.f32 %v1769, %v1772
    %vm1774 = vweird.f32 %v1768
    %vm1775 = vweird.f32 %v1769
    %vm1776 = vmor %vm1774, %vm1775
    %v1777 = vsel %vm1776, %v1769, %v1773
    %v1778 = vand.u32 2147483647, %v1768
    %vm1779 = vcmp.eq.f32.partialorder %v1778, 8.507059e+37
    %v1780 = vand.u32 %v1768, 2147483648
    %v1781 = vor.u32 1.1754944e-38, %v1780
    %v1782 = vsel %vm1779, %v1781, %v1777
    %v1783 = vmul.f32 1.0, %v1782
    %v1785 = vrot.slane %v1457, 6
    %v1787 = vmul.f32 %v1763, %v1785
    %v1788 = vmul.f32 %v1744, %v1764
    %v1789 = vadd.f32 %v1787, %v1788
    %v1790 = vtanh.pop %v1789
    %v1791 = vmul.f32 %v1783, %v1790
    %1793 = vst [vmem:[#allocation1] sm:$0xff] %v1791
    %s1794 = scalar_lea.vmem [#allocation1], 2
    %v1795 = vld [vmem:[%s1794] ss:$9 sm:$0xff]
    %s1796 = scalar_lea.vmem [#allocation1], 3
    %v1797 = vld [vmem:[%s1796] ss:$9 sm:$0xff]
    %1800 = vst [vmem:[#allocation2 + $0x1] sm:$0x1] %v1795
    %1801 = vst [vmem:[#allocation2 + $0x9] sm:$0x1] %v1797
    %v1802 = vpack.c.bf16 %v1791, %v1791
    %v1803 = vld [vmem:[%s8] sm:$0xff]
    %v1804 = vld [vmem:[%s8 + $0x8] sm:$0xff]
    %v1805 = vld [vmem:[%s8 + $0x10] sm:$0xff]
    %v1806 = vld [vmem:[%s8 + $0x18] sm:$0xff]
    %v1807 = vld [vmem:[%s8 + $0x20] sm:$0xff]
    %v1808 = vld [vmem:[%s8 + $0x28] sm:$0xff]
    %v1809 = vld [vmem:[%s8 + $0x30] sm:$0xff]
    %v1810 = vld [vmem:[%s8 + $0x38] sm:$0xff]
    %v1811 = vld [vmem:[%s8 + $0x40] sm:$0xff]
    %v1812 = vld [vmem:[%s8 + $0x48] sm:$0xff]
    %v1813 = vld [vmem:[%s8 + $0x50] sm:$0xff]
    %v1814 = vld [vmem:[%s8 + $0x58] sm:$0xff]
    %v1815 = vld [vmem:[%s8 + $0x60] sm:$0xff]
    %v1816 = vld [vmem:[%s8 + $0x68] sm:$0xff]
    %v1817 = vld [vmem:[%s8 + $0x70] sm:$0xff]
    %v1818 = vld [vmem:[%s8 + $0x78] sm:$0xff]
    %v1819 = vld [vmem:[%s8 + $0x80] sm:$0xff]
    %v1820 = vld [vmem:[%s8 + $0x88] sm:$0xff]
    %v1821 = vld [vmem:[%s8 + $0x90] sm:$0xff]
    %v1822 = vld [vmem:[%s8 + $0x98] sm:$0xff]
    %v1823 = vld [vmem:[%s8 + $0xa0] sm:$0xff]
    %v1824 = vld [vmem:[%s8 + $0xa8] sm:$0xff]
    %v1825 = vld [vmem:[%s8 + $0xb0] sm:$0xff]
    %v1826 = vld [vmem:[%s8 + $0xb8] sm:$0xff]
    %v1827 = vld [vmem:[%s8 + $0xc0] sm:$0xff]
    %v1828 = vld [vmem:[%s8 + $0xc8] sm:$0xff]
    %v1829 = vld [vmem:[%s8 + $0xd0] sm:$0xff]
    %v1830 = vld [vmem:[%s8 + $0xd8] sm:$0xff]
    %v1831 = vld [vmem:[%s8 + $0xe0] sm:$0xff]
    %v1832 = vld [vmem:[%s8 + $0xe8] sm:$0xff]
    %v1833 = vld [vmem:[%s8 + $0xf0] sm:$0xff]
    %v1834 = vld [vmem:[%s8 + $0xf8] sm:$0xff]
    %v1836 = vrot.slane %v1802, 1
    %v1870 = vunpack.c.l.b16 %v1803
    %v1871 = vunpack.c.h.b16 %v1803
    %v1872 = vunpack.c.l.b16 %v1804
    %v1873 = vunpack.c.h.b16 %v1804
    %v1874 = vunpack.c.l.b16 %v1805
    %v1875 = vunpack.c.h.b16 %v1805
    %v1876 = vunpack.c.l.b16 %v1806
    %v1877 = vunpack.c.h.b16 %v1806
    %v1878 = vunpack.c.l.b16 %v1807
    %v1879 = vunpack.c.h.b16 %v1807
    %v1880 = vunpack.c.l.b16 %v1808
    %v1881 = vunpack.c.h.b16 %v1808
    %v1882 = vunpack.c.l.b16 %v1809
    %v1883 = vunpack.c.h.b16 %v1809
    %v1884 = vunpack.c.l.b16 %v1810
    %v1885 = vunpack.c.h.b16 %v1810
    %v1886 = vunpack.c.l.b16 %v1811
    %v1887 = vunpack.c.h.b16 %v1811
    %v1888 = vunpack.c.l.b16 %v1812
    %v1889 = vunpack.c.h.b16 %v1812
    %v1890 = vunpack.c.l.b16 %v1813
    %v1891 = vunpack.c.h.b16 %v1813
    %v1892 = vunpack.c.l.b16 %v1814
    %v1893 = vunpack.c.h.b16 %v1814
    %v1894 = vunpack.c.l.b16 %v1815
    %v1895 = vunpack.c.h.b16 %v1815
    %v1896 = vunpack.c.l.b16 %v1816
    %v1897 = vunpack.c.h.b16 %v1816
    %v1898 = vunpack.c.l.b16 %v1817
    %v1899 = vunpack.c.h.b16 %v1817
    %v1900 = vunpack.c.l.b16 %v1818
    %v1901 = vunpack.c.h.b16 %v1818
    %v1902 = vunpack.c.l.b16 %v1819
    %v1903 = vunpack.c.h.b16 %v1819
    %v1904 = vunpack.c.l.b16 %v1820
    %v1905 = vunpack.c.h.b16 %v1820
    %v1906 = vunpack.c.l.b16 %v1821
    %v1907 = vunpack.c.h.b16 %v1821
    %v1908 = vunpack.c.l.b16 %v1822
    %v1909 = vunpack.c.h.b16 %v1822
    %v1910 = vunpack.c.l.b16 %v1823
    %v1911 = vunpack.c.h.b16 %v1823
    %v1912 = vunpack.c.l.b16 %v1824
    %v1913 = vunpack.c.h.b16 %v1824
    %v1914 = vunpack.c.l.b16 %v1825
    %v1915 = vunpack.c.h.b16 %v1825
    %v1916 = vunpack.c.l.b16 %v1826
    %v1917 = vunpack.c.h.b16 %v1826
    %v1918 = vunpack.c.l.b16 %v1827
    %v1919 = vunpack.c.h.b16 %v1827
    %v1920 = vunpack.c.l.b16 %v1828
    %v1921 = vunpack.c.h.b16 %v1828
    %v1922 = vunpack.c.l.b16 %v1829
    %v1923 = vunpack.c.h.b16 %v1829
    %v1924 = vunpack.c.l.b16 %v1830
    %v1925 = vunpack.c.h.b16 %v1830
    %v1926 = vunpack.c.l.b16 %v1831
    %v1927 = vunpack.c.h.b16 %v1831
    %v1928 = vunpack.c.l.b16 %v1832
    %v1929 = vunpack.c.h.b16 %v1832
    %v1930 = vunpack.c.l.b16 %v1833
    %v1931 = vunpack.c.h.b16 %v1833
    %v1932 = vunpack.c.l.b16 %v1834
    %v1933 = vunpack.c.h.b16 %v1834
    %v1934 = vpack.c.b16 %v1874, %v1870
    %v1935 = vpack.c.b16 %v1875, %v1871
    %v1936 = vpack.c.b16 %v1876, %v1872
    %v1937 = vpack.c.b16 %v1877, %v1873
    %v1938 = vpack.c.b16 %v1882, %v1878
    %v1939 = vpack.c.b16 %v1883, %v1879
    %v1940 = vpack.c.b16 %v1884, %v1880
    %v1941 = vpack.c.b16 %v1885, %v1881
    %v1942 = vpack.c.b16 %v1890, %v1886
    %v1943 = vpack.c.b16 %v1891, %v1887
    %v1944 = vpack.c.b16 %v1892, %v1888
    %v1945 = vpack.c.b16 %v1893, %v1889
    %v1946 = vpack.c.b16 %v1898, %v1894
    %v1947 = vpack.c.b16 %v1899, %v1895
    %v1948 = vpack.c.b16 %v1900, %v1896
    %v1949 = vpack.c.b16 %v1901, %v1897
    %v1950 = vpack.c.b16 %v1906, %v1902
    %v1951 = vpack.c.b16 %v1907, %v1903
    %v1952 = vpack.c.b16 %v1908, %v1904
    %v1953 = vpack.c.b16 %v1909, %v1905
    %v1954 = vpack.c.b16 %v1914, %v1910
    %v1955 = vpack.c.b16 %v1915, %v1911
    %v1956 = vpack.c.b16 %v1916, %v1912
    %v1957 = vpack.c.b16 %v1917, %v1913
    %v1958 = vpack.c.b16 %v1922, %v1918
    %v1959 = vpack.c.b16 %v1923, %v1919
    %v1960 = vpack.c.b16 %v1924, %v1920
    %v1961 = vpack.c.b16 %v1925, %v1921
    %v1962 = vpack.c.b16 %v1930, %v1926
    %v1963 = vpack.c.b16 %v1931, %v1927
    %v1964 = vpack.c.b16 %v1932, %v1928
    %v1965 = vpack.c.b16 %v1933, %v1929
    %1998 = vmatpush.bf16.msra.mxu0 %v1962
    %1999 = vmatpush.bf16.msra.mxu0 %v1958
    %2000 = vmatpush.bf16.msra.mxu0 %v1954
    %2001 = vmatpush.bf16.msra.mxu0 %v1950
    %2002 = vmatpush.bf16.msra.mxu0 %v1946
    %2003 = vmatpush.bf16.msra.mxu0 %v1942
    %2004 = vmatpush.bf16.msra.mxu0 %v1938
    %2005 = vmatpush.bf16.msra.mxu0 %v1934
    %2006 = vmatmul.bf16.gmra.mxu0 %v1836
    %v2007 = vpop.f32.mrf.mxu0
    %v2008 = vadd.f32 0.0, %v2007
    %v2009 = vpop.f32.mrf.mxu0
    %2010 = vdwg.mxu0
    %2011 = vmatpush.bf16.msra.mxu0 %v1963
    %2012 = vmatpush.bf16.msra.mxu0 %v1959
    %2013 = vmatpush.bf16.msra.mxu0 %v1955
    %2014 = vmatpush.bf16.msra.mxu0 %v1951
    %2015 = vmatpush.bf16.msra.mxu0 %v1947
    %2016 = vmatpush.bf16.msra.mxu0 %v1943
    %2017 = vmatpush.bf16.msra.mxu0 %v1939
    %2018 = vmatpush.bf16.msra.mxu0 %v1935
    %2019 = vmatmul.bf16.gmra.mxu0 %v1836
    %v2020 = vpop.f32.mrf.mxu0
    %v2021 = vadd.f32 0.0, %v2020
    %v2022 = vpop.f32.mrf.mxu0
    %2023 = vdwg.mxu0
    %2024 = vmatpush.bf16.msra.mxu0 %v1964
    %2025 = vmatpush.bf16.msra.mxu0 %v1960
    %2026 = vmatpush.bf16.msra.mxu0 %v1956
    %2027 = vmatpush.bf16.msra.mxu0 %v1952
    %2028 = vmatpush.bf16.msra.mxu0 %v1948
    %2029 = vmatpush.bf16.msra.mxu0 %v1944
    %2030 = vmatpush.bf16.msra.mxu0 %v1940
    %2031 = vmatpush.bf16.msra.mxu0 %v1936
    %2032 = vmatmul.bf16.gmra.mxu0 %v1836
    %v2033 = vpop.f32.mrf.mxu0
    %v2034 = vadd.f32 0.0, %v2033
    %v2035 = vpop.f32.mrf.mxu0
    %2036 = vdwg.mxu0
    %2037 = vmatpush.bf16.msra.mxu0 %v1965
    %2038 = vmatpush.bf16.msra.mxu0 %v1961
    %2039 = vmatpush.bf16.msra.mxu0 %v1957
    %2040 = vmatpush.bf16.msra.mxu0 %v1953
    %2041 = vmatpush.bf16.msra.mxu0 %v1949
    %2042 = vmatpush.bf16.msra.mxu0 %v1945
    %2043 = vmatpush.bf16.msra.mxu0 %v1941
    %2044 = vmatpush.bf16.msra.mxu0 %v1937
    %2045 = vmatmul.bf16.gmra.mxu0 %v1836
    %v2046 = vpop.f32.mrf.mxu0
    %v2047 = vadd.f32 0.0, %v2046
    %v2048 = vpop.f32.mrf.mxu0
    %2049 = vdwg.mxu0
    %v2054 = vrot.slane %v2008, 4
    %v2055 = vrot.slane %v2021, 4
    %v2056 = vrot.slane %v2034, 4
    %v2057 = vrot.slane %v2047, 4
    %v2062 = vadd.f32 %v1102, %v2054
    %v2063 = vadd.f32 %v1116, %v2055
    %v2064 = vadd.f32 %v1130, %v2056
    %v2065 = vadd.f32 %v1144, %v2057
    %v2066 = vxor.u32 %v2062, 2147483648
    %v2067 = vmul.f32 %v2066, 1.442695
    %v2068 = vpow.pop %v2067
    %v2069 = vadd.f32 %v2068, 1.0
    %v2070 = vrcp.pop %v2069
    %v2071 = vmul.f32 %v2069, %v2070
    %v2072 = vsub.f32 1.0, %v2071
    %v2073 = vmul.f32 %v2070, %v2072
    %v2074 = vadd.f32 %v2070, %v2073
    %vm2075 = vweird.f32 %v2069
    %vm2076 = vweird.f32 %v2070
    %vm2077 = vmor %vm2075, %vm2076
    %v2078 = vsel %vm2077, %v2070, %v2074
    %v2079 = vand.u32 2147483647, %v2069
    %vm2080 = vcmp.eq.f32.partialorder %v2079, 8.507059e+37
    %v2081 = vand.u32 %v2069, 2147483648
    %v2082 = vor.u32 1.1754944e-38, %v2081
    %v2083 = vsel %vm2080, %v2082, %v2078
    %v2084 = vmul.f32 1.0, %v2083
    %v2085 = vxor.u32 %v2063, 2147483648
    %v2086 = vmul.f32 %v2085, 1.442695
    %v2087 = vpow.pop %v2086
    %v2088 = vadd.f32 %v2087, 1.0
    %v2089 = vrcp.pop %v2088
    %v2090 = vmul.f32 %v2088, %v2089
    %v2091 = vsub.f32 1.0, %v2090
    %v2092 = vmul.f32 %v2089, %v2091
    %v2093 = vadd.f32 %v2089, %v2092
    %vm2094 = vweird.f32 %v2088
    %vm2095 = vweird.f32 %v2089
    %vm2096 = vmor %vm2094, %vm2095
    %v2097 = vsel %vm2096, %v2089, %v2093
    %v2098 = vand.u32 2147483647, %v2088
    %vm2099 = vcmp.eq.f32.partialorder %v2098, 8.507059e+37
    %v2100 = vand.u32 %v2088, 2147483648
    %v2101 = vor.u32 1.1754944e-38, %v2100
    %v2102 = vsel %vm2099, %v2101, %v2097
    %v2103 = vmul.f32 1.0, %v2102
    %v2104 = vtanh.pop %v2064
    %v2105 = vxor.u32 %v2065, 2147483648
    %v2106 = vmul.f32 %v2105, 1.442695
    %v2107 = vpow.pop %v2106
    %v2108 = vadd.f32 %v2107, 1.0
    %v2109 = vrcp.pop %v2108
    %v2110 = vmul.f32 %v2108, %v2109
    %v2111 = vsub.f32 1.0, %v2110
    %v2112 = vmul.f32 %v2109, %v2111
    %v2113 = vadd.f32 %v2109, %v2112
    %vm2114 = vweird.f32 %v2108
    %vm2115 = vweird.f32 %v2109
    %vm2116 = vmor %vm2114, %vm2115
    %v2117 = vsel %vm2116, %v2109, %v2113
    %v2118 = vand.u32 2147483647, %v2108
    %vm2119 = vcmp.eq.f32.partialorder %v2118, 8.507059e+37
    %v2120 = vand.u32 %v2108, 2147483648
    %v2121 = vor.u32 1.1754944e-38, %v2120
    %v2122 = vsel %vm2119, %v2121, %v2117
    %v2123 = vmul.f32 1.0, %v2122
    %v2125 = vrot.slane %v1789, 6
    %v2127 = vmul.f32 %v2103, %v2125
    %v2128 = vmul.f32 %v2084, %v2104
    %v2129 = vadd.f32 %v2127, %v2128
    %v2130 = vtanh.pop %v2129
    %v2131 = vmul.f32 %v2123, %v2130
    %2133 = vst [vmem:[#allocation1] sm:$0xff] %v2131
    %s2134 = scalar_lea.vmem [#allocation1], 4
    %v2135 = vld [vmem:[%s2134] ss:$9 sm:$0xff]
    %s2136 = scalar_lea.vmem [#allocation1], 5
    %v2137 = vld [vmem:[%s2136] ss:$9 sm:$0xff]
    %2140 = vst [vmem:[#allocation2 + $0x2] sm:$0x1] %v2135
    %2141 = vst [vmem:[#allocation2 + $0xa] sm:$0x1] %v2137
    %v2142 = vpack.c.bf16 %v2131, %v2131
    %v2143 = vld [vmem:[%s8] sm:$0xff]
    %v2144 = vld [vmem:[%s8 + $0x8] sm:$0xff]
    %v2145 = vld [vmem:[%s8 + $0x10] sm:$0xff]
    %v2146 = vld [vmem:[%s8 + $0x18] sm:$0xff]
    %v2147 = vld [vmem:[%s8 + $0x20] sm:$0xff]
    %v2148 = vld [vmem:[%s8 + $0x28] sm:$0xff]
    %v2149 = vld [vmem:[%s8 + $0x30] sm:$0xff]
    %v2150 = vld [vmem:[%s8 + $0x38] sm:$0xff]
    %v2151 = vld [vmem:[%s8 + $0x40] sm:$0xff]
    %v2152 = vld [vmem:[%s8 + $0x48] sm:$0xff]
    %v2153 = vld [vmem:[%s8 + $0x50] sm:$0xff]
    %v2154 = vld [vmem:[%s8 + $0x58] sm:$0xff]
    %v2155 = vld [vmem:[%s8 + $0x60] sm:$0xff]
    %v2156 = vld [vmem:[%s8 + $0x68] sm:$0xff]
    %v2157 = vld [vmem:[%s8 + $0x70] sm:$0xff]
    %v2158 = vld [vmem:[%s8 + $0x78] sm:$0xff]
    %v2159 = vld [vmem:[%s8 + $0x80] sm:$0xff]
    %v2160 = vld [vmem:[%s8 + $0x88] sm:$0xff]
    %v2161 = vld [vmem:[%s8 + $0x90] sm:$0xff]
    %v2162 = vld [vmem:[%s8 + $0x98] sm:$0xff]
    %v2163 = vld [vmem:[%s8 + $0xa0] sm:$0xff]
    %v2164 = vld [vmem:[%s8 + $0xa8] sm:$0xff]
    %v2165 = vld [vmem:[%s8 + $0xb0] sm:$0xff]
    %v2166 = vld [vmem:[%s8 + $0xb8] sm:$0xff]
    %v2167 = vld [vmem:[%s8 + $0xc0] sm:$0xff]
    %v2168 = vld [vmem:[%s8 + $0xc8] sm:$0xff]
    %v2169 = vld [vmem:[%s8 + $0xd0] sm:$0xff]
    %v2170 = vld [vmem:[%s8 + $0xd8] sm:$0xff]
    %v2171 = vld [vmem:[%s8 + $0xe0] sm:$0xff]
    %v2172 = vld [vmem:[%s8 + $0xe8] sm:$0xff]
    %v2173 = vld [vmem:[%s8 + $0xf0] sm:$0xff]
    %v2174 = vld [vmem:[%s8 + $0xf8] sm:$0xff]
    %v2176 = vrot.slane %v2142, 2
    %v2210 = vunpack.c.l.b16 %v2143
    %v2211 = vunpack.c.h.b16 %v2143
    %v2212 = vunpack.c.l.b16 %v2144
    %v2213 = vunpack.c.h.b16 %v2144
    %v2214 = vunpack.c.l.b16 %v2145
    %v2215 = vunpack.c.h.b16 %v2145
    %v2216 = vunpack.c.l.b16 %v2146
    %v2217 = vunpack.c.h.b16 %v2146
    %v2218 = vunpack.c.l.b16 %v2147
    %v2219 = vunpack.c.h.b16 %v2147
    %v2220 = vunpack.c.l.b16 %v2148
    %v2221 = vunpack.c.h.b16 %v2148
    %v2222 = vunpack.c.l.b16 %v2149
    %v2223 = vunpack.c.h.b16 %v2149
    %v2224 = vunpack.c.l.b16 %v2150
    %v2225 = vunpack.c.h.b16 %v2150
    %v2226 = vunpack.c.l.b16 %v2151
    %v2227 = vunpack.c.h.b16 %v2151
    %v2228 = vunpack.c.l.b16 %v2152
    %v2229 = vunpack.c.h.b16 %v2152
    %v2230 = vunpack.c.l.b16 %v2153
    %v2231 = vunpack.c.h.b16 %v2153
    %v2232 = vunpack.c.l.b16 %v2154
    %v2233 = vunpack.c.h.b16 %v2154
    %v2234 = vunpack.c.l.b16 %v2155
    %v2235 = vunpack.c.h.b16 %v2155
    %v2236 = vunpack.c.l.b16 %v2156
    %v2237 = vunpack.c.h.b16 %v2156
    %v2238 = vunpack.c.l.b16 %v2157
    %v2239 = vunpack.c.h.b16 %v2157
    %v2240 = vunpack.c.l.b16 %v2158
    %v2241 = vunpack.c.h.b16 %v2158
    %v2242 = vunpack.c.l.b16 %v2159
    %v2243 = vunpack.c.h.b16 %v2159
    %v2244 = vunpack.c.l.b16 %v2160
    %v2245 = vunpack.c.h.b16 %v2160
    %v2246 = vunpack.c.l.b16 %v2161
    %v2247 = vunpack.c.h.b16 %v2161
    %v2248 = vunpack.c.l.b16 %v2162
    %v2249 = vunpack.c.h.b16 %v2162
    %v2250 = vunpack.c.l.b16 %v2163
    %v2251 = vunpack.c.h.b16 %v2163
    %v2252 = vunpack.c.l.b16 %v2164
    %v2253 = vunpack.c.h.b16 %v2164
    %v2254 = vunpack.c.l.b16 %v2165
    %v2255 = vunpack.c.h.b16 %v2165
    %v2256 = vunpack.c.l.b16 %v2166
    %v2257 = vunpack.c.h.b16 %v2166
    %v2258 = vunpack.c.l.b16 %v2167
    %v2259 = vunpack.c.h.b16 %v2167
    %v2260 = vunpack.c.l.b16 %v2168
    %v2261 = vunpack.c.h.b16 %v2168
    %v2262 = vunpack.c.l.b16 %v2169
    %v2263 = vunpack.c.h.b16 %v2169
    %v2264 = vunpack.c.l.b16 %v2170
    %v2265 = vunpack.c.h.b16 %v2170
    %v2266 = vunpack.c.l.b16 %v2171
    %v2267 = vunpack.c.h.b16 %v2171
    %v2268 = vunpack.c.l.b16 %v2172
    %v2269 = vunpack.c.h.b16 %v2172
    %v2270 = vunpack.c.l.b16 %v2173
    %v2271 = vunpack.c.h.b16 %v2173
    %v2272 = vunpack.c.l.b16 %v2174
    %v2273 = vunpack.c.h.b16 %v2174
    %v2274 = vpack.c.b16 %v2214, %v2210
    %v2275 = vpack.c.b16 %v2215, %v2211
    %v2276 = vpack.c.b16 %v2216, %v2212
    %v2277 = vpack.c.b16 %v2217, %v2213
    %v2278 = vpack.c.b16 %v2222, %v2218
    %v2279 = vpack.c.b16 %v2223, %v2219
    %v2280 = vpack.c.b16 %v2224, %v2220
    %v2281 = vpack.c.b16 %v2225, %v2221
    %v2282 = vpack.c.b16 %v2230, %v2226
    %v2283 = vpack.c.b16 %v2231, %v2227
    %v2284 = vpack.c.b16 %v2232, %v2228
    %v2285 = vpack.c.b16 %v2233, %v2229
    %v2286 = vpack.c.b16 %v2238, %v2234
    %v2287 = vpack.c.b16 %v2239, %v2235
    %v2288 = vpack.c.b16 %v2240, %v2236
    %v2289 = vpack.c.b16 %v2241, %v2237
    %v2290 = vpack.c.b16 %v2246, %v2242
    %v2291 = vpack.c.b16 %v2247, %v2243
    %v2292 = vpack.c.b16 %v2248, %v2244
    %v2293 = vpack.c.b16 %v2249, %v2245
    %v2294 = vpack.c.b16 %v2254, %v2250
    %v2295 = vpack.c.b16 %v2255, %v2251
    %v2296 = vpack.c.b16 %v2256, %v2252
    %v2297 = vpack.c.b16 %v2257, %v2253
    %v2298 = vpack.c.b16 %v2262, %v2258
    %v2299 = vpack.c.b16 %v2263, %v2259
    %v2300 = vpack.c.b16 %v2264, %v2260
    %v2301 = vpack.c.b16 %v2265, %v2261
    %v2302 = vpack.c.b16 %v2270, %v2266
    %v2303 = vpack.c.b16 %v2271, %v2267
    %v2304 = vpack.c.b16 %v2272, %v2268
    %v2305 = vpack.c.b16 %v2273, %v2269
    %2338 = vmatpush.bf16.msra.mxu0 %v2302
    %2339 = vmatpush.bf16.msra.mxu0 %v2298
    %2340 = vmatpush.bf16.msra.mxu0 %v2294
    %2341 = vmatpush.bf16.msra.mxu0 %v2290
    %2342 = vmatpush.bf16.msra.mxu0 %v2286
    %2343 = vmatpush.bf16.msra.mxu0 %v2282
    %2344 = vmatpush.bf16.msra.mxu0 %v2278
    %2345 = vmatpush.bf16.msra.mxu0 %v2274
    %2346 = vmatmul.bf16.gmra.mxu0 %v2176
    %v2347 = vpop.f32.mrf.mxu0
    %v2348 = vadd.f32 0.0, %v2347
    %v2349 = vpop.f32.mrf.mxu0
    %2350 = vdwg.mxu0
    %2351 = vmatpush.bf16.msra.mxu0 %v2303
    %2352 = vmatpush.bf16.msra.mxu0 %v2299
    %2353 = vmatpush.bf16.msra.mxu0 %v2295
    %2354 = vmatpush.bf16.msra.mxu0 %v2291
    %2355 = vmatpush.bf16.msra.mxu0 %v2287
    %2356 = vmatpush.bf16.msra.mxu0 %v2283
    %2357 = vmatpush.bf16.msra.mxu0 %v2279
    %2358 = vmatpush.bf16.msra.mxu0 %v2275
    %2359 = vmatmul.bf16.gmra.mxu0 %v2176
    %v2360 = vpop.f32.mrf.mxu0
    %v2361 = vadd.f32 0.0, %v2360
    %v2362 = vpop.f32.mrf.mxu0
    %2363 = vdwg.mxu0
    %2364 = vmatpush.bf16.msra.mxu0 %v2304
    %2365 = vmatpush.bf16.msra.mxu0 %v2300
    %2366 = vmatpush.bf16.msra.mxu0 %v2296
    %2367 = vmatpush.bf16.msra.mxu0 %v2292
    %2368 = vmatpush.bf16.msra.mxu0 %v2288
    %2369 = vmatpush.bf16.msra.mxu0 %v2284
    %2370 = vmatpush.bf16.msra.mxu0 %v2280
    %2371 = vmatpush.bf16.msra.mxu0 %v2276
    %2372 = vmatmul.bf16.gmra.mxu0 %v2176
    %v2373 = vpop.f32.mrf.mxu0
    %v2374 = vadd.f32 0.0, %v2373
    %v2375 = vpop.f32.mrf.mxu0
    %2376 = vdwg.mxu0
    %2377 = vmatpush.bf16.msra.mxu0 %v2305
    %2378 = vmatpush.bf16.msra.mxu0 %v2301
    %2379 = vmatpush.bf16.msra.mxu0 %v2297
    %2380 = vmatpush.bf16.msra.mxu0 %v2293
    %2381 = vmatpush.bf16.msra.mxu0 %v2289
    %2382 = vmatpush.bf16.msra.mxu0 %v2285
    %2383 = vmatpush.bf16.msra.mxu0 %v2281
    %2384 = vmatpush.bf16.msra.mxu0 %v2277
    %2385 = vmatmul.bf16.gmra.mxu0 %v2176
    %v2386 = vpop.f32.mrf.mxu0
    %v2387 = vadd.f32 0.0, %v2386
    %v2388 = vpop.f32.mrf.mxu0
    %2389 = vdwg.mxu0
    %v2394 = vrot.slane %v2348, 2
    %v2395 = vrot.slane %v2361, 2
    %v2396 = vrot.slane %v2374, 2
    %v2397 = vrot.slane %v2387, 2
    %v2402 = vadd.f32 %v1102, %v2394
    %v2403 = vadd.f32 %v1116, %v2395
    %v2404 = vadd.f32 %v1130, %v2396
    %v2405 = vadd.f32 %v1144, %v2397
    %v2406 = vxor.u32 %v2402, 2147483648
    %v2407 = vmul.f32 %v2406, 1.442695
    %v2408 = vpow.pop %v2407
    %v2409 = vadd.f32 %v2408, 1.0
    %v2410 = vrcp.pop %v2409
    %v2411 = vmul.f32 %v2409, %v2410
    %v2412 = vsub.f32 1.0, %v2411
    %v2413 = vmul.f32 %v2410, %v2412
    %v2414 = vadd.f32 %v2410, %v2413
    %vm2415 = vweird.f32 %v2409
    %vm2416 = vweird.f32 %v2410
    %vm2417 = vmor %vm2415, %vm2416
    %v2418 = vsel %vm2417, %v2410, %v2414
    %v2419 = vand.u32 2147483647, %v2409
    %vm2420 = vcmp.eq.f32.partialorder %v2419, 8.507059e+37
    %v2421 = vand.u32 %v2409, 2147483648
    %v2422 = vor.u32 1.1754944e-38, %v2421
    %v2423 = vsel %vm2420, %v2422, %v2418
    %v2424 = vmul.f32 1.0, %v2423
    %v2425 = vxor.u32 %v2403, 2147483648
    %v2426 = vmul.f32 %v2425, 1.442695
    %v2427 = vpow.pop %v2426
    %v2428 = vadd.f32 %v2427, 1.0
    %v2429 = vrcp.pop %v2428
    %v2430 = vmul.f32 %v2428, %v2429
    %v2431 = vsub.f32 1.0, %v2430
    %v2432 = vmul.f32 %v2429, %v2431
    %v2433 = vadd.f32 %v2429, %v2432
    %vm2434 = vweird.f32 %v2428
    %vm2435 = vweird.f32 %v2429
    %vm2436 = vmor %vm2434, %vm2435
    %v2437 = vsel %vm2436, %v2429, %v2433
    %v2438 = vand.u32 2147483647, %v2428
    %vm2439 = vcmp.eq.f32.partialorder %v2438, 8.507059e+37
    %v2440 = vand.u32 %v2428, 2147483648
    %v2441 = vor.u32 1.1754944e-38, %v2440
    %v2442 = vsel %vm2439, %v2441, %v2437
    %v2443 = vmul.f32 1.0, %v2442
    %v2444 = vtanh.pop %v2404
    %v2445 = vxor.u32 %v2405, 2147483648
    %v2446 = vmul.f32 %v2445, 1.442695
    %v2447 = vpow.pop %v2446
    %v2448 = vadd.f32 %v2447, 1.0
    %v2449 = vrcp.pop %v2448
    %v2450 = vmul.f32 %v2448, %v2449
    %v2451 = vsub.f32 1.0, %v2450
    %v2452 = vmul.f32 %v2449, %v2451
    %v2453 = vadd.f32 %v2449, %v2452
    %vm2454 = vweird.f32 %v2448
    %vm2455 = vweird.f32 %v2449
    %vm2456 = vmor %vm2454, %vm2455
    %v2457 = vsel %vm2456, %v2449, %v2453
    %v2458 = vand.u32 2147483647, %v2448
    %vm2459 = vcmp.eq.f32.partialorder %v2458, 8.507059e+37
    %v2460 = vand.u32 %v2448, 2147483648
    %v2461 = vor.u32 1.1754944e-38, %v2460
    %v2462 = vsel %vm2459, %v2461, %v2457
    %v2463 = vmul.f32 1.0, %v2462
    %v2465 = vrot.slane %v2129, 6
    %v2467 = vmul.f32 %v2443, %v2465
    %v2468 = vmul.f32 %v2424, %v2444
    %v2469 = vadd.f32 %v2467, %v2468
    %v2470 = vtanh.pop %v2469
    %v2471 = vmul.f32 %v2463, %v2470
    %2473 = vst [vmem:[#allocation1] sm:$0xff] %v2471
    %s2474 = scalar_lea.vmem [#allocation1], 6
    %v2475 = vld [vmem:[%s2474] ss:$9 sm:$0xff]
    %s2476 = scalar_lea.vmem [#allocation1], 7
    %v2477 = vld [vmem:[%s2476] ss:$9 sm:$0xff]
    %2480 = vst [vmem:[#allocation2 + $0x3] sm:$0x1] %v2475
    %2481 = vst [vmem:[#allocation2 + $0xb] sm:$0x1] %v2477
    %v2482 = vpack.c.bf16 %v2471, %v2471
    %v2483 = vld [vmem:[%s8] sm:$0xff]
    %v2484 = vld [vmem:[%s8 + $0x8] sm:$0xff]
    %v2485 = vld [vmem:[%s8 + $0x10] sm:$0xff]
    %v2486 = vld [vmem:[%s8 + $0x18] sm:$0xff]
    %v2487 = vld [vmem:[%s8 + $0x20] sm:$0xff]
    %v2488 = vld [vmem:[%s8 + $0x28] sm:$0xff]
    %v2489 = vld [vmem:[%s8 + $0x30] sm:$0xff]
    %v2490 = vld [vmem:[%s8 + $0x38] sm:$0xff]
    %v2491 = vld [vmem:[%s8 + $0x40] sm:$0xff]
    %v2492 = vld [vmem:[%s8 + $0x48] sm:$0xff]
    %v2493 = vld [vmem:[%s8 + $0x50] sm:$0xff]
    %v2494 = vld [vmem:[%s8 + $0x58] sm:$0xff]
    %v2495 = vld [vmem:[%s8 + $0x60] sm:$0xff]
    %v2496 = vld [vmem:[%s8 + $0x68] sm:$0xff]
    %v2497 = vld [vmem:[%s8 + $0x70] sm:$0xff]
    %v2498 = vld [vmem:[%s8 + $0x78] sm:$0xff]
    %v2499 = vld [vmem:[%s8 + $0x80] sm:$0xff]
    %v2500 = vld [vmem:[%s8 + $0x88] sm:$0xff]
    %v2501 = vld [vmem:[%s8 + $0x90] sm:$0xff]
    %v2502 = vld [vmem:[%s8 + $0x98] sm:$0xff]
    %v2503 = vld [vmem:[%s8 + $0xa0] sm:$0xff]
    %v2504 = vld [vmem:[%s8 + $0xa8] sm:$0xff]
    %v2505 = vld [vmem:[%s8 + $0xb0] sm:$0xff]
    %v2506 = vld [vmem:[%s8 + $0xb8] sm:$0xff]
    %v2507 = vld [vmem:[%s8 + $0xc0] sm:$0xff]
    %v2508 = vld [vmem:[%s8 + $0xc8] sm:$0xff]
    %v2509 = vld [vmem:[%s8 + $0xd0] sm:$0xff]
    %v2510 = vld [vmem:[%s8 + $0xd8] sm:$0xff]
    %v2511 = vld [vmem:[%s8 + $0xe0] sm:$0xff]
    %v2512 = vld [vmem:[%s8 + $0xe8] sm:$0xff]
    %v2513 = vld [vmem:[%s8 + $0xf0] sm:$0xff]
    %v2514 = vld [vmem:[%s8 + $0xf8] sm:$0xff]
    %v2516 = vrot.slane %v2482, 3
    %v2550 = vunpack.c.l.b16 %v2483
    %v2551 = vunpack.c.h.b16 %v2483
    %v2552 = vunpack.c.l.b16 %v2484
    %v2553 = vunpack.c.h.b16 %v2484
    %v2554 = vunpack.c.l.b16 %v2485
    %v2555 = vunpack.c.h.b16 %v2485
    %v2556 = vunpack.c.l.b16 %v2486
    %v2557 = vunpack.c.h.b16 %v2486
    %v2558 = vunpack.c.l.b16 %v2487
    %v2559 = vunpack.c.h.b16 %v2487
    %v2560 = vunpack.c.l.b16 %v2488
    %v2561 = vunpack.c.h.b16 %v2488
    %v2562 = vunpack.c.l.b16 %v2489
    %v2563 = vunpack.c.h.b16 %v2489
    %v2564 = vunpack.c.l.b16 %v2490
    %v2565 = vunpack.c.h.b16 %v2490
    %v2566 = vunpack.c.l.b16 %v2491
    %v2567 = vunpack.c.h.b16 %v2491
    %v2568 = vunpack.c.l.b16 %v2492
    %v2569 = vunpack.c.h.b16 %v2492
    %v2570 = vunpack.c.l.b16 %v2493
    %v2571 = vunpack.c.h.b16 %v2493
    %v2572 = vunpack.c.l.b16 %v2494
    %v2573 = vunpack.c.h.b16 %v2494
    %v2574 = vunpack.c.l.b16 %v2495
    %v2575 = vunpack.c.h.b16 %v2495
    %v2576 = vunpack.c.l.b16 %v2496
    %v2577 = vunpack.c.h.b16 %v2496
    %v2578 = vunpack.c.l.b16 %v2497
    %v2579 = vunpack.c.h.b16 %v2497
    %v2580 = vunpack.c.l.b16 %v2498
    %v2581 = vunpack.c.h.b16 %v2498
    %v2582 = vunpack.c.l.b16 %v2499
    %v2583 = vunpack.c.h.b16 %v2499
    %v2584 = vunpack.c.l.b16 %v2500
    %v2585 = vunpack.c.h.b16 %v2500
    %v2586 = vunpack.c.l.b16 %v2501
    %v2587 = vunpack.c.h.b16 %v2501
    %v2588 = vunpack.c.l.b16 %v2502
    %v2589 = vunpack.c.h.b16 %v2502
    %v2590 = vunpack.c.l.b16 %v2503
    %v2591 = vunpack.c.h.b16 %v2503
    %v2592 = vunpack.c.l.b16 %v2504
    %v2593 = vunpack.c.h.b16 %v2504
    %v2594 = vunpack.c.l.b16 %v2505
    %v2595 = vunpack.c.h.b16 %v2505
    %v2596 = vunpack.c.l.b16 %v2506
    %v2597 = vunpack.c.h.b16 %v2506
    %v2598 = vunpack.c.l.b16 %v2507
    %v2599 = vunpack.c.h.b16 %v2507
    %v2600 = vunpack.c.l.b16 %v2508
    %v2601 = vunpack.c.h.b16 %v2508
    %v2602 = vunpack.c.l.b16 %v2509
    %v2603 = vunpack.c.h.b16 %v2509
    %v2604 = vunpack.c.l.b16 %v2510
    %v2605 = vunpack.c.h.b16 %v2510
    %v2606 = vunpack.c.l.b16 %v2511
    %v2607 = vunpack.c.h.b16 %v2511
    %v2608 = vunpack.c.l.b16 %v2512
    %v2609 = vunpack.c.h.b16 %v2512
    %v2610 = vunpack.c.l.b16 %v2513
    %v2611 = vunpack.c.h.b16 %v2513
    %v2612 = vunpack.c.l.b16 %v2514
    %v2613 = vunpack.c.h.b16 %v2514
    %v2614 = vpack.c.b16 %v2554, %v2550
    %v2615 = vpack.c.b16 %v2555, %v2551
    %v2616 = vpack.c.b16 %v2556, %v2552
    %v2617 = vpack.c.b16 %v2557, %v2553
    %v2618 = vpack.c.b16 %v2562, %v2558
    %v2619 = vpack.c.b16 %v2563, %v2559
    %v2620 = vpack.c.b16 %v2564, %v2560
    %v2621 = vpack.c.b16 %v2565, %v2561
    %v2622 = vpack.c.b16 %v2570, %v2566
    %v2623 = vpack.c.b16 %v2571, %v2567
    %v2624 = vpack.c.b16 %v2572, %v2568
    %v2625 = vpack.c.b16 %v2573, %v2569
    %v2626 = vpack.c.b16 %v2578, %v2574
    %v2627 = vpack.c.b16 %v2579, %v2575
    %v2628 = vpack.c.b16 %v2580, %v2576
    %v2629 = vpack.c.b16 %v2581, %v2577
    %v2630 = vpack.c.b16 %v2586, %v2582
    %v2631 = vpack.c.b16 %v2587, %v2583
    %v2632 = vpack.c.b16 %v2588, %v2584
    %v2633 = vpack.c.b16 %v2589, %v2585
    %v2634 = vpack.c.b16 %v2594, %v2590
    %v2635 = vpack.c.b16 %v2595, %v2591
    %v2636 = vpack.c.b16 %v2596, %v2592
    %v2637 = vpack.c.b16 %v2597, %v2593
    %v2638 = vpack.c.b16 %v2602, %v2598
    %v2639 = vpack.c.b16 %v2603, %v2599
    %v2640 = vpack.c.b16 %v2604, %v2600
    %v2641 = vpack.c.b16 %v2605, %v2601
    %v2642 = vpack.c.b16 %v2610, %v2606
    %v2643 = vpack.c.b16 %v2611, %v2607
    %v2644 = vpack.c.b16 %v2612, %v2608
    %v2645 = vpack.c.b16 %v2613, %v2609
    %2678 = vmatpush.bf16.msra.mxu0 %v2642
    %2679 = vmatpush.bf16.msra.mxu0 %v2638
    %2680 = vmatpush.bf16.msra.mxu0 %v2634
    %2681 = vmatpush.bf16.msra.mxu0 %v2630
    %2682 = vmatpush.bf16.msra.mxu0 %v2626
    %2683 = vmatpush.bf16.msra.mxu0 %v2622
    %2684 = vmatpush.bf16.msra.mxu0 %v2618
    %2685 = vmatpush.bf16.msra.mxu0 %v2614
    %2686 = vmatmul.bf16.gmra.mxu0 %v2516
    %v2687 = vpop.f32.mrf.mxu0
    %v2688 = vadd.f32 0.0, %v2687
    %v2689 = vpop.f32.mrf.mxu0
    %2690 = vdwg.mxu0
    %2691 = vmatpush.bf16.msra.mxu0 %v2643
    %2692 = vmatpush.bf16.msra.mxu0 %v2639
    %2693 = vmatpush.bf16.msra.mxu0 %v2635
    %2694 = vmatpush.bf16.msra.mxu0 %v2631
    %2695 = vmatpush.bf16.msra.mxu0 %v2627
    %2696 = vmatpush.bf16.msra.mxu0 %v2623
    %2697 = vmatpush.bf16.msra.mxu0 %v2619
    %2698 = vmatpush.bf16.msra.mxu0 %v2615
    %2699 = vmatmul.bf16.gmra.mxu0 %v2516
    %v2700 = vpop.f32.mrf.mxu0
    %v2701 = vadd.f32 0.0, %v2700
    %v2702 = vpop.f32.mrf.mxu0
    %2703 = vdwg.mxu0
    %2704 = vmatpush.bf16.msra.mxu0 %v2644
    %2705 = vmatpush.bf16.msra.mxu0 %v2640
    %2706 = vmatpush.bf16.msra.mxu0 %v2636
    %2707 = vmatpush.bf16.msra.mxu0 %v2632
    %2708 = vmatpush.bf16.msra.mxu0 %v2628
    %2709 = vmatpush.bf16.msra.mxu0 %v2624
    %2710 = vmatpush.bf16.msra.mxu0 %v2620
    %2711 = vmatpush.bf16.msra.mxu0 %v2616
    %2712 = vmatmul.bf16.gmra.mxu0 %v2516
    %v2713 = vpop.f32.mrf.mxu0
    %v2714 = vadd.f32 0.0, %v2713
    %v2715 = vpop.f32.mrf.mxu0
    %2716 = vdwg.mxu0
    %2717 = vmatpush.bf16.msra.mxu0 %v2645
    %2718 = vmatpush.bf16.msra.mxu0 %v2641
    %2719 = vmatpush.bf16.msra.mxu0 %v2637
    %2720 = vmatpush.bf16.msra.mxu0 %v2633
    %2721 = vmatpush.bf16.msra.mxu0 %v2629
    %2722 = vmatpush.bf16.msra.mxu0 %v2625
    %2723 = vmatpush.bf16.msra.mxu0 %v2621
    %2724 = vmatpush.bf16.msra.mxu0 %v2617
    %2725 = vmatmul.bf16.gmra.mxu0 %v2516
    %v2726 = vpop.f32.mrf.mxu0
    %v2727 = vadd.f32 0.0, %v2726
    %v2728 = vpop.f32.mrf.mxu0
    %2729 = vdwg.mxu0
    %v2730 = vadd.f32 %v1104, %v2688
    %v2731 = vadd.f32 %v1118, %v2701
    %v2732 = vadd.f32 %v1132, %v2714
    %v2733 = vadd.f32 %v1146, %v2727
    %v2734 = vxor.u32 %v2730, 2147483648
    %v2735 = vmul.f32 %v2734, 1.442695
    %v2736 = vpow.pop %v2735
    %v2737 = vadd.f32 %v2736, 1.0
    %v2738 = vrcp.pop %v2737
    %v2739 = vmul.f32 %v2737, %v2738
    %v2740 = vsub.f32 1.0, %v2739
    %v2741 = vmul.f32 %v2738, %v2740
    %v2742 = vadd.f32 %v2738, %v2741
    %vm2743 = vweird.f32 %v2737
    %vm2744 = vweird.f32 %v2738
    %vm2745 = vmor %vm2743, %vm2744
    %v2746 = vsel %vm2745, %v2738, %v2742
    %v2747 = vand.u32 2147483647, %v2737
    %vm2748 = vcmp.eq.f32.partialorder %v2747, 8.507059e+37
    %v2749 = vand.u32 %v2737, 2147483648
    %v2750 = vor.u32 1.1754944e-38, %v2749
    %v2751 = vsel %vm2748, %v2750, %v2746
    %v2752 = vmul.f32 1.0, %v2751
    %v2753 = vxor.u32 %v2731, 2147483648
    %v2754 = vmul.f32 %v2753, 1.442695
    %v2755 = vpow.pop %v2754
    %v2756 = vadd.f32 %v2755, 1.0
    %v2757 = vrcp.pop %v2756
    %v2758 = vmul.f32 %v2756, %v2757
    %v2759 = vsub.f32 1.0, %v2758
    %v2760 = vmul.f32 %v2757, %v2759
    %v2761 = vadd.f32 %v2757, %v2760
    %vm2762 = vweird.f32 %v2756
    %vm2763 = vweird.f32 %v2757
    %vm2764 = vmor %vm2762, %vm2763
    %v2765 = vsel %vm2764, %v2757, %v2761
    %v2766 = vand.u32 2147483647, %v2756
    %vm2767 = vcmp.eq.f32.partialorder %v2766, 8.507059e+37
    %v2768 = vand.u32 %v2756, 2147483648
    %v2769 = vor.u32 1.1754944e-38, %v2768
    %v2770 = vsel %vm2767, %v2769, %v2765
    %v2771 = vmul.f32 1.0, %v2770
    %v2772 = vtanh.pop %v2732
    %v2773 = vxor.u32 %v2733, 2147483648
    %v2774 = vmul.f32 %v2773, 1.442695
    %v2775 = vpow.pop %v2774
    %v2776 = vadd.f32 %v2775, 1.0
    %v2777 = vrcp.pop %v2776
    %v2778 = vmul.f32 %v2776, %v2777
    %v2779 = vsub.f32 1.0, %v2778
    %v2780 = vmul.f32 %v2777, %v2779
    %v2781 = vadd.f32 %v2777, %v2780
    %vm2782 = vweird.f32 %v2776
    %vm2783 = vweird.f32 %v2777
    %vm2784 = vmor %vm2782, %vm2783
    %v2785 = vsel %vm2784, %v2777, %v2781
    %v2786 = vand.u32 2147483647, %v2776
    %vm2787 = vcmp.eq.f32.partialorder %v2786, 8.507059e+37
    %v2788 = vand.u32 %v2776, 2147483648
    %v2789 = vor.u32 1.1754944e-38, %v2788
    %v2790 = vsel %vm2787, %v2789, %v2785
    %v2791 = vmul.f32 1.0, %v2790
    %v2793 = vrot.slane %v2469, 6
    %v2795 = vmul.f32 %v2771, %v2793
    %v2796 = vmul.f32 %v2752, %v2772
    %v2797 = vadd.f32 %v2795, %v2796
    %v2798 = vtanh.pop %v2797
    %v2799 = vmul.f32 %v2791, %v2798
    %v2801 = vrot.slane %v2799, 1
    %2803 = vst [vmem:[#allocation2 + $0x4] sm:$0x1] %v2799
    %2804 = vst [vmem:[#allocation2 + $0xc] sm:$0x1] %v2801
    %v2805 = vpack.c.bf16 %v2799, %v2799
    %v2806 = vld [vmem:[%s8] sm:$0xff]
    %v2807 = vld [vmem:[%s8 + $0x8] sm:$0xff]
    %v2808 = vld [vmem:[%s8 + $0x10] sm:$0xff]
    %v2809 = vld [vmem:[%s8 + $0x18] sm:$0xff]
    %v2810 = vld [vmem:[%s8 + $0x20] sm:$0xff]
    %v2811 = vld [vmem:[%s8 + $0x28] sm:$0xff]
    %v2812 = vld [vmem:[%s8 + $0x30] sm:$0xff]
    %v2813 = vld [vmem:[%s8 + $0x38] sm:$0xff]
    %v2814 = vld [vmem:[%s8 + $0x40] sm:$0xff]
    %v2815 = vld [vmem:[%s8 + $0x48] sm:$0xff]
    %v2816 = vld [vmem:[%s8 + $0x50] sm:$0xff]
    %v2817 = vld [vmem:[%s8 + $0x58] sm:$0xff]
    %v2818 = vld [vmem:[%s8 + $0x60] sm:$0xff]
    %v2819 = vld [vmem:[%s8 + $0x68] sm:$0xff]
    %v2820 = vld [vmem:[%s8 + $0x70] sm:$0xff]
    %v2821 = vld [vmem:[%s8 + $0x78] sm:$0xff]
    %v2822 = vld [vmem:[%s8 + $0x80] sm:$0xff]
    %v2823 = vld [vmem:[%s8 + $0x88] sm:$0xff]
    %v2824 = vld [vmem:[%s8 + $0x90] sm:$0xff]
    %v2825 = vld [vmem:[%s8 + $0x98] sm:$0xff]
    %v2826 = vld [vmem:[%s8 + $0xa0] sm:$0xff]
    %v2827 = vld [vmem:[%s8 + $0xa8] sm:$0xff]
    %v2828 = vld [vmem:[%s8 + $0xb0] sm:$0xff]
    %v2829 = vld [vmem:[%s8 + $0xb8] sm:$0xff]
    %v2830 = vld [vmem:[%s8 + $0xc0] sm:$0xff]
    %v2831 = vld [vmem:[%s8 + $0xc8] sm:$0xff]
    %v2832 = vld [vmem:[%s8 + $0xd0] sm:$0xff]
    %v2833 = vld [vmem:[%s8 + $0xd8] sm:$0xff]
    %v2834 = vld [vmem:[%s8 + $0xe0] sm:$0xff]
    %v2835 = vld [vmem:[%s8 + $0xe8] sm:$0xff]
    %v2836 = vld [vmem:[%s8 + $0xf0] sm:$0xff]
    %v2837 = vld [vmem:[%s8 + $0xf8] sm:$0xff]
    %v2870 = vunpack.c.l.b16 %v2806
    %v2871 = vunpack.c.h.b16 %v2806
    %v2872 = vunpack.c.l.b16 %v2807
    %v2873 = vunpack.c.h.b16 %v2807
    %v2874 = vunpack.c.l.b16 %v2808
    %v2875 = vunpack.c.h.b16 %v2808
    %v2876 = vunpack.c.l.b16 %v2809
    %v2877 = vunpack.c.h.b16 %v2809
    %v2878 = vunpack.c.l.b16 %v2810
    %v2879 = vunpack.c.h.b16 %v2810
    %v2880 = vunpack.c.l.b16 %v2811
    %v2881 = vunpack.c.h.b16 %v2811
    %v2882 = vunpack.c.l.b16 %v2812
    %v2883 = vunpack.c.h.b16 %v2812
    %v2884 = vunpack.c.l.b16 %v2813
    %v2885 = vunpack.c.h.b16 %v2813
    %v2886 = vunpack.c.l.b16 %v2814
    %v2887 = vunpack.c.h.b16 %v2814
    %v2888 = vunpack.c.l.b16 %v2815
    %v2889 = vunpack.c.h.b16 %v2815
    %v2890 = vunpack.c.l.b16 %v2816
    %v2891 = vunpack.c.h.b16 %v2816
    %v2892 = vunpack.c.l.b16 %v2817
    %v2893 = vunpack.c.h.b16 %v2817
    %v2894 = vunpack.c.l.b16 %v2818
    %v2895 = vunpack.c.h.b16 %v2818
    %v2896 = vunpack.c.l.b16 %v2819
    %v2897 = vunpack.c.h.b16 %v2819
    %v2898 = vunpack.c.l.b16 %v2820
    %v2899 = vunpack.c.h.b16 %v2820
    %v2900 = vunpack.c.l.b16 %v2821
    %v2901 = vunpack.c.h.b16 %v2821
    %v2902 = vunpack.c.l.b16 %v2822
    %v2903 = vunpack.c.h.b16 %v2822
    %v2904 = vunpack.c.l.b16 %v2823
    %v2905 = vunpack.c.h.b16 %v2823
    %v2906 = vunpack.c.l.b16 %v2824
    %v2907 = vunpack.c.h.b16 %v2824
    %v2908 = vunpack.c.l.b16 %v2825
    %v2909 = vunpack.c.h.b16 %v2825
    %v2910 = vunpack.c.l.b16 %v2826
    %v2911 = vunpack.c.h.b16 %v2826
    %v2912 = vunpack.c.l.b16 %v2827
    %v2913 = vunpack.c.h.b16 %v2827
    %v2914 = vunpack.c.l.b16 %v2828
    %v2915 = vunpack.c.h.b16 %v2828
    %v2916 = vunpack.c.l.b16 %v2829
    %v2917 = vunpack.c.h.b16 %v2829
    %v2918 = vunpack.c.l.b16 %v2830
    %v2919 = vunpack.c.h.b16 %v2830
    %v2920 = vunpack.c.l.b16 %v2831
    %v2921 = vunpack.c.h.b16 %v2831
    %v2922 = vunpack.c.l.b16 %v2832
    %v2923 = vunpack.c.h.b16 %v2832
    %v2924 = vunpack.c.l.b16 %v2833
    %v2925 = vunpack.c.h.b16 %v2833
    %v2926 = vunpack.c.l.b16 %v2834
    %v2927 = vunpack.c.h.b16 %v2834
    %v2928 = vunpack.c.l.b16 %v2835
    %v2929 = vunpack.c.h.b16 %v2835
    %v2930 = vunpack.c.l.b16 %v2836
    %v2931 = vunpack.c.h.b16 %v2836
    %v2932 = vunpack.c.l.b16 %v2837
    %v2933 = vunpack.c.h.b16 %v2837
    %v2934 = vpack.c.b16 %v2874, %v2870
    %v2935 = vpack.c.b16 %v2875, %v2871
    %v2936 = vpack.c.b16 %v2876, %v2872
    %v2937 = vpack.c.b16 %v2877, %v2873
    %v2938 = vpack.c.b16 %v2882, %v2878
    %v2939 = vpack.c.b16 %v2883, %v2879
    %v2940 = vpack.c.b16 %v2884, %v2880
    %v2941 = vpack.c.b16 %v2885, %v2881
    %v2942 = vpack.c.b16 %v2890, %v2886
    %v2943 = vpack.c.b16 %v2891, %v2887
    %v2944 = vpack.c.b16 %v2892, %v2888
    %v2945 = vpack.c.b16 %v2893, %v2889
    %v2946 = vpack.c.b16 %v2898, %v2894
    %v2947 = vpack.c.b16 %v2899, %v2895
    %v2948 = vpack.c.b16 %v2900, %v2896
    %v2949 = vpack.c.b16 %v2901, %v2897
    %v2950 = vpack.c.b16 %v2906, %v2902
    %v2951 = vpack.c.b16 %v2907, %v2903
    %v2952 = vpack.c.b16 %v2908, %v2904
    %v2953 = vpack.c.b16 %v2909, %v2905
    %v2954 = vpack.c.b16 %v2914, %v2910
    %v2955 = vpack.c.b16 %v2915, %v2911
    %v2956 = vpack.c.b16 %v2916, %v2912
    %v2957 = vpack.c.b16 %v2917, %v2913
    %v2958 = vpack.c.b16 %v2922, %v2918
    %v2959 = vpack.c.b16 %v2923, %v2919
    %v2960 = vpack.c.b16 %v2924, %v2920
    %v2961 = vpack.c.b16 %v2925, %v2921
    %v2962 = vpack.c.b16 %v2930, %v2926
    %v2963 = vpack.c.b16 %v2931, %v2927
    %v2964 = vpack.c.b16 %v2932, %v2928
    %v2965 = vpack.c.b16 %v2933, %v2929
    %2998 = vmatpush.bf16.msra.mxu0 %v2962
    %2999 = vmatpush.bf16.msra.mxu0 %v2958
    %3000 = vmatpush.bf16.msra.mxu0 %v2954
    %3001 = vmatpush.bf16.msra.mxu0 %v2950
    %3002 = vmatpush.bf16.msra.mxu0 %v2946
    %3003 = vmatpush.bf16.msra.mxu0 %v2942
    %3004 = vmatpush.bf16.msra.mxu0 %v2938
    %3005 = vmatpush.bf16.msra.mxu0 %v2934
    %3006 = vmatmul.bf16.gmra.mxu0 %v2805
    %v3007 = vpop.f32.mrf.mxu0
    %v3008 = vadd.f32 0.0, %v3007
    %v3009 = vpop.f32.mrf.mxu0
    %3010 = vdwg.mxu0
    %3011 = vmatpush.bf16.msra.mxu0 %v2963
    %3012 = vmatpush.bf16.msra.mxu0 %v2959
    %3013 = vmatpush.bf16.msra.mxu0 %v2955
    %3014 = vmatpush.bf16.msra.mxu0 %v2951
    %3015 = vmatpush.bf16.msra.mxu0 %v2947
    %3016 = vmatpush.bf16.msra.mxu0 %v2943
    %3017 = vmatpush.bf16.msra.mxu0 %v2939
    %3018 = vmatpush.bf16.msra.mxu0 %v2935
    %3019 = vmatmul.bf16.gmra.mxu0 %v2805
    %v3020 = vpop.f32.mrf.mxu0
    %v3021 = vadd.f32 0.0, %v3020
    %v3022 = vpop.f32.mrf.mxu0
    %3023 = vdwg.mxu0
    %3024 = vmatpush.bf16.msra.mxu0 %v2964
    %3025 = vmatpush.bf16.msra.mxu0 %v2960
    %3026 = vmatpush.bf16.msra.mxu0 %v2956
    %3027 = vmatpush.bf16.msra.mxu0 %v2952
    %3028 = vmatpush.bf16.msra.mxu0 %v2948
    %3029 = vmatpush.bf16.msra.mxu0 %v2944
    %3030 = vmatpush.bf16.msra.mxu0 %v2940
    %3031 = vmatpush.bf16.msra.mxu0 %v2936
    %3032 = vmatmul.bf16.gmra.mxu0 %v2805
    %v3033 = vpop.f32.mrf.mxu0
    %v3034 = vadd.f32 0.0, %v3033
    %v3035 = vpop.f32.mrf.mxu0
    %3036 = vdwg.mxu0
    %3037 = vmatpush.bf16.msra.mxu0 %v2965
    %3038 = vmatpush.bf16.msra.mxu0 %v2961
    %3039 = vmatpush.bf16.msra.mxu0 %v2957
    %3040 = vmatpush.bf16.msra.mxu0 %v2953
    %3041 = vmatpush.bf16.msra.mxu0 %v2949
    %3042 = vmatpush.bf16.msra.mxu0 %v2945
    %3043 = vmatpush.bf16.msra.mxu0 %v2941
    %3044 = vmatpush.bf16.msra.mxu0 %v2937
    %3045 = vmatmul.bf16.gmra.mxu0 %v2805
    %v3046 = vpop.f32.mrf.mxu0
    %v3047 = vadd.f32 0.0, %v3046
    %v3048 = vpop.f32.mrf.mxu0
    %3049 = vdwg.mxu0
    %v3054 = vrot.slane %v3008, 6
    %v3055 = vrot.slane %v3021, 6
    %v3056 = vrot.slane %v3034, 6
    %v3057 = vrot.slane %v3047, 6
    %v3062 = vadd.f32 %v1104, %v3054
    %v3063 = vadd.f32 %v1118, %v3055
    %v3064 = vadd.f32 %v1132, %v3056
    %v3065 = vadd.f32 %v1146, %v3057
    %v3066 = vxor.u32 %v3062, 2147483648
    %v3067 = vmul.f32 %v3066, 1.442695
    %v3068 = vpow.pop %v3067
    %v3069 = vadd.f32 %v3068, 1.0
    %v3070 = vrcp.pop %v3069
    %v3071 = vmul.f32 %v3069, %v3070
    %v3072 = vsub.f32 1.0, %v3071
    %v3073 = vmul.f32 %v3070, %v3072
    %v3074 = vadd.f32 %v3070, %v3073
    %vm3075 = vweird.f32 %v3069
    %vm3076 = vweird.f32 %v3070
    %vm3077 = vmor %vm3075, %vm3076
    %v3078 = vsel %vm3077, %v3070, %v3074
    %v3079 = vand.u32 2147483647, %v3069
    %vm3080 = vcmp.eq.f32.partialorder %v3079, 8.507059e+37
    %v3081 = vand.u32 %v3069, 2147483648
    %v3082 = vor.u32 1.1754944e-38, %v3081
    %v3083 = vsel %vm3080, %v3082, %v3078
    %v3084 = vmul.f32 1.0, %v3083
    %v3085 = vxor.u32 %v3063, 2147483648
    %v3086 = vmul.f32 %v3085, 1.442695
    %v3087 = vpow.pop %v3086
    %v3088 = vadd.f32 %v3087, 1.0
    %v3089 = vrcp.pop %v3088
    %v3090 = vmul.f32 %v3088, %v3089
    %v3091 = vsub.f32 1.0, %v3090
    %v3092 = vmul.f32 %v3089, %v3091
    %v3093 = vadd.f32 %v3089, %v3092
    %vm3094 = vweird.f32 %v3088
    %vm3095 = vweird.f32 %v3089
    %vm3096 = vmor %vm3094, %vm3095
    %v3097 = vsel %vm3096, %v3089, %v3093
    %v3098 = vand.u32 2147483647, %v3088
    %vm3099 = vcmp.eq.f32.partialorder %v3098, 8.507059e+37
    %v3100 = vand.u32 %v3088, 2147483648
    %v3101 = vor.u32 1.1754944e-38, %v3100
    %v3102 = vsel %vm3099, %v3101, %v3097
    %v3103 = vmul.f32 1.0, %v3102
    %v3104 = vtanh.pop %v3064
    %v3105 = vxor.u32 %v3065, 2147483648
    %v3106 = vmul.f32 %v3105, 1.442695
    %v3107 = vpow.pop %v3106
    %v3108 = vadd.f32 %v3107, 1.0
    %v3109 = vrcp.pop %v3108
    %v3110 = vmul.f32 %v3108, %v3109
    %v3111 = vsub.f32 1.0, %v3110
    %v3112 = vmul.f32 %v3109, %v3111
    %v3113 = vadd.f32 %v3109, %v3112
    %vm3114 = vweird.f32 %v3108
    %vm3115 = vweird.f32 %v3109
    %vm3116 = vmor %vm3114, %vm3115
    %v3117 = vsel %vm3116, %v3109, %v3113
    %v3118 = vand.u32 2147483647, %v3108
    %vm3119 = vcmp.eq.f32.partialorder %v3118, 8.507059e+37
    %v3120 = vand.u32 %v3108, 2147483648
    %v3121 = vor.u32 1.1754944e-38, %v3120
    %v3122 = vsel %vm3119, %v3121, %v3117
    %v3123 = vmul.f32 1.0, %v3122
    %v3125 = vrot.slane %v2797, 6
    %v3127 = vmul.f32 %v3103, %v3125
    %v3128 = vmul.f32 %v3084, %v3104
    %v3129 = vadd.f32 %v3127, %v3128
    %v3130 = vtanh.pop %v3129
    %v3131 = vmul.f32 %v3123, %v3130
    %3133 = vst [vmem:[#allocation1] sm:$0xff] %v3131
    %s3134 = scalar_lea.vmem [#allocation1], 2
    %v3135 = vld [vmem:[%s3134] ss:$9 sm:$0xff]
    %s3136 = scalar_lea.vmem [#allocation1], 3
    %v3137 = vld [vmem:[%s3136] ss:$9 sm:$0xff]
    %3140 = vst [vmem:[#allocation2 + $0x5] sm:$0x1] %v3135
    %3141 = vst [vmem:[#allocation2 + $0xd] sm:$0x1] %v3137
    %v3142 = vpack.c.bf16 %v3131, %v3131
    %v3143 = vld [vmem:[%s8] sm:$0xff]
    %v3144 = vld [vmem:[%s8 + $0x8] sm:$0xff]
    %v3145 = vld [vmem:[%s8 + $0x10] sm:$0xff]
    %v3146 = vld [vmem:[%s8 + $0x18] sm:$0xff]
    %v3147 = vld [vmem:[%s8 + $0x20] sm:$0xff]
    %v3148 = vld [vmem:[%s8 + $0x28] sm:$0xff]
    %v3149 = vld [vmem:[%s8 + $0x30] sm:$0xff]
    %v3150 = vld [vmem:[%s8 + $0x38] sm:$0xff]
    %v3151 = vld [vmem:[%s8 + $0x40] sm:$0xff]
    %v3152 = vld [vmem:[%s8 + $0x48] sm:$0xff]
    %v3153 = vld [vmem:[%s8 + $0x50] sm:$0xff]
    %v3154 = vld [vmem:[%s8 + $0x58] sm:$0xff]
    %v3155 = vld [vmem:[%s8 + $0x60] sm:$0xff]
    %v3156 = vld [vmem:[%s8 + $0x68] sm:$0xff]
    %v3157 = vld [vmem:[%s8 + $0x70] sm:$0xff]
    %v3158 = vld [vmem:[%s8 + $0x78] sm:$0xff]
    %v3159 = vld [vmem:[%s8 + $0x80] sm:$0xff]
    %v3160 = vld [vmem:[%s8 + $0x88] sm:$0xff]
    %v3161 = vld [vmem:[%s8 + $0x90] sm:$0xff]
    %v3162 = vld [vmem:[%s8 + $0x98] sm:$0xff]
    %v3163 = vld [vmem:[%s8 + $0xa0] sm:$0xff]
    %v3164 = vld [vmem:[%s8 + $0xa8] sm:$0xff]
    %v3165 = vld [vmem:[%s8 + $0xb0] sm:$0xff]
    %v3166 = vld [vmem:[%s8 + $0xb8] sm:$0xff]
    %v3167 = vld [vmem:[%s8 + $0xc0] sm:$0xff]
    %v3168 = vld [vmem:[%s8 + $0xc8] sm:$0xff]
    %v3169 = vld [vmem:[%s8 + $0xd0] sm:$0xff]
    %v3170 = vld [vmem:[%s8 + $0xd8] sm:$0xff]
    %v3171 = vld [vmem:[%s8 + $0xe0] sm:$0xff]
    %v3172 = vld [vmem:[%s8 + $0xe8] sm:$0xff]
    %v3173 = vld [vmem:[%s8 + $0xf0] sm:$0xff]
    %v3174 = vld [vmem:[%s8 + $0xf8] sm:$0xff]
    %v3176 = vrot.slane %v3142, 1
    %v3210 = vunpack.c.l.b16 %v3143
    %v3211 = vunpack.c.h.b16 %v3143
    %v3212 = vunpack.c.l.b16 %v3144
    %v3213 = vunpack.c.h.b16 %v3144
    %v3214 = vunpack.c.l.b16 %v3145
    %v3215 = vunpack.c.h.b16 %v3145
    %v3216 = vunpack.c.l.b16 %v3146
    %v3217 = vunpack.c.h.b16 %v3146
    %v3218 = vunpack.c.l.b16 %v3147
    %v3219 = vunpack.c.h.b16 %v3147
    %v3220 = vunpack.c.l.b16 %v3148
    %v3221 = vunpack.c.h.b16 %v3148
    %v3222 = vunpack.c.l.b16 %v3149
    %v3223 = vunpack.c.h.b16 %v3149
    %v3224 = vunpack.c.l.b16 %v3150
    %v3225 = vunpack.c.h.b16 %v3150
    %v3226 = vunpack.c.l.b16 %v3151
    %v3227 = vunpack.c.h.b16 %v3151
    %v3228 = vunpack.c.l.b16 %v3152
    %v3229 = vunpack.c.h.b16 %v3152
    %v3230 = vunpack.c.l.b16 %v3153
    %v3231 = vunpack.c.h.b16 %v3153
    %v3232 = vunpack.c.l.b16 %v3154
    %v3233 = vunpack.c.h.b16 %v3154
    %v3234 = vunpack.c.l.b16 %v3155
    %v3235 = vunpack.c.h.b16 %v3155
    %v3236 = vunpack.c.l.b16 %v3156
    %v3237 = vunpack.c.h.b16 %v3156
    %v3238 = vunpack.c.l.b16 %v3157
    %v3239 = vunpack.c.h.b16 %v3157
    %v3240 = vunpack.c.l.b16 %v3158
    %v3241 = vunpack.c.h.b16 %v3158
    %v3242 = vunpack.c.l.b16 %v3159
    %v3243 = vunpack.c.h.b16 %v3159
    %v3244 = vunpack.c.l.b16 %v3160
    %v3245 = vunpack.c.h.b16 %v3160
    %v3246 = vunpack.c.l.b16 %v3161
    %v3247 = vunpack.c.h.b16 %v3161
    %v3248 = vunpack.c.l.b16 %v3162
    %v3249 = vunpack.c.h.b16 %v3162
    %v3250 = vunpack.c.l.b16 %v3163
    %v3251 = vunpack.c.h.b16 %v3163
    %v3252 = vunpack.c.l.b16 %v3164
    %v3253 = vunpack.c.h.b16 %v3164
    %v3254 = vunpack.c.l.b16 %v3165
    %v3255 = vunpack.c.h.b16 %v3165
    %v3256 = vunpack.c.l.b16 %v3166
    %v3257 = vunpack.c.h.b16 %v3166
    %v3258 = vunpack.c.l.b16 %v3167
    %v3259 = vunpack.c.h.b16 %v3167
    %v3260 = vunpack.c.l.b16 %v3168
    %v3261 = vunpack.c.h.b16 %v3168
    %v3262 = vunpack.c.l.b16 %v3169
    %v3263 = vunpack.c.h.b16 %v3169
    %v3264 = vunpack.c.l.b16 %v3170
    %v3265 = vunpack.c.h.b16 %v3170
    %v3266 = vunpack.c.l.b16 %v3171
    %v3267 = vunpack.c.h.b16 %v3171
    %v3268 = vunpack.c.l.b16 %v3172
    %v3269 = vunpack.c.h.b16 %v3172
    %v3270 = vunpack.c.l.b16 %v3173
    %v3271 = vunpack.c.h.b16 %v3173
    %v3272 = vunpack.c.l.b16 %v3174
    %v3273 = vunpack.c.h.b16 %v3174
    %v3274 = vpack.c.b16 %v3214, %v3210
    %v3275 = vpack.c.b16 %v3215, %v3211
    %v3276 = vpack.c.b16 %v3216, %v3212
    %v3277 = vpack.c.b16 %v3217, %v3213
    %v3278 = vpack.c.b16 %v3222, %v3218
    %v3279 = vpack.c.b16 %v3223, %v3219
    %v3280 = vpack.c.b16 %v3224, %v3220
    %v3281 = vpack.c.b16 %v3225, %v3221
    %v3282 = vpack.c.b16 %v3230, %v3226
    %v3283 = vpack.c.b16 %v3231, %v3227
    %v3284 = vpack.c.b16 %v3232, %v3228
    %v3285 = vpack.c.b16 %v3233, %v3229
    %v3286 = vpack.c.b16 %v3238, %v3234
    %v3287 = vpack.c.b16 %v3239, %v3235
    %v3288 = vpack.c.b16 %v3240, %v3236
    %v3289 = vpack.c.b16 %v3241, %v3237
    %v3290 = vpack.c.b16 %v3246, %v3242
    %v3291 = vpack.c.b16 %v3247, %v3243
    %v3292 = vpack.c.b16 %v3248, %v3244
    %v3293 = vpack.c.b16 %v3249, %v3245
    %v3294 = vpack.c.b16 %v3254, %v3250
    %v3295 = vpack.c.b16 %v3255, %v3251
    %v3296 = vpack.c.b16 %v3256, %v3252
    %v3297 = vpack.c.b16 %v3257, %v3253
    %v3298 = vpack.c.b16 %v3262, %v3258
    %v3299 = vpack.c.b16 %v3263, %v3259
    %v3300 = vpack.c.b16 %v3264, %v3260
    %v3301 = vpack.c.b16 %v3265, %v3261
    %v3302 = vpack.c.b16 %v3270, %v3266
    %v3303 = vpack.c.b16 %v3271, %v3267
    %v3304 = vpack.c.b16 %v3272, %v3268
    %v3305 = vpack.c.b16 %v3273, %v3269
    %3338 = vmatpush.bf16.msra.mxu0 %v3302
    %3339 = vmatpush.bf16.msra.mxu0 %v3298
    %3340 = vmatpush.bf16.msra.mxu0 %v3294
    %3341 = vmatpush.bf16.msra.mxu0 %v3290
    %3342 = vmatpush.bf16.msra.mxu0 %v3286
    %3343 = vmatpush.bf16.msra.mxu0 %v3282
    %3344 = vmatpush.bf16.msra.mxu0 %v3278
    %3345 = vmatpush.bf16.msra.mxu0 %v3274
    %3346 = vmatmul.bf16.gmra.mxu0 %v3176
    %v3347 = vpop.f32.mrf.mxu0
    %v3348 = vadd.f32 0.0, %v3347
    %v3349 = vpop.f32.mrf.mxu0
    %3350 = vdwg.mxu0
    %3351 = vmatpush.bf16.msra.mxu0 %v3303
    %3352 = vmatpush.bf16.msra.mxu0 %v3299
    %3353 = vmatpush.bf16.msra.mxu0 %v3295
    %3354 = vmatpush.bf16.msra.mxu0 %v3291
    %3355 = vmatpush.bf16.msra.mxu0 %v3287
    %3356 = vmatpush.bf16.msra.mxu0 %v3283
    %3357 = vmatpush.bf16.msra.mxu0 %v3279
    %3358 = vmatpush.bf16.msra.mxu0 %v3275
    %3359 = vmatmul.bf16.gmra.mxu0 %v3176
    %v3360 = vpop.f32.mrf.mxu0
    %v3361 = vadd.f32 0.0, %v3360
    %v3362 = vpop.f32.mrf.mxu0
    %3363 = vdwg.mxu0
    %3364 = vmatpush.bf16.msra.mxu0 %v3304
    %3365 = vmatpush.bf16.msra.mxu0 %v3300
    %3366 = vmatpush.bf16.msra.mxu0 %v3296
    %3367 = vmatpush.bf16.msra.mxu0 %v3292
    %3368 = vmatpush.bf16.msra.mxu0 %v3288
    %3369 = vmatpush.bf16.msra.mxu0 %v3284
    %3370 = vmatpush.bf16.msra.mxu0 %v3280
    %3371 = vmatpush.bf16.msra.mxu0 %v3276
    %3372 = vmatmul.bf16.gmra.mxu0 %v3176
    %v3373 = vpop.f32.mrf.mxu0
    %v3374 = vadd.f32 0.0, %v3373
    %v3375 = vpop.f32.mrf.mxu0
    %3376 = vdwg.mxu0
    %3377 = vmatpush.bf16.msra.mxu0 %v3305
    %3378 = vmatpush.bf16.msra.mxu0 %v3301
    %3379 = vmatpush.bf16.msra.mxu0 %v3297
    %3380 = vmatpush.bf16.msra.mxu0 %v3293
    %3381 = vmatpush.bf16.msra.mxu0 %v3289
    %3382 = vmatpush.bf16.msra.mxu0 %v3285
    %3383 = vmatpush.bf16.msra.mxu0 %v3281
    %3384 = vmatpush.bf16.msra.mxu0 %v3277
    %3385 = vmatmul.bf16.gmra.mxu0 %v3176
    %v3386 = vpop.f32.mrf.mxu0
    %v3387 = vadd.f32 0.0, %v3386
    %v3388 = vpop.f32.mrf.mxu0
    %3389 = vdwg.mxu0
    %v3394 = vrot.slane %v3348, 4
    %v3395 = vrot.slane %v3361, 4
    %v3396 = vrot.slane %v3374, 4
    %v3397 = vrot.slane %v3387, 4
    %v3402 = vadd.f32 %v1104, %v3394
    %v3403 = vadd.f32 %v1118, %v3395
    %v3404 = vadd.f32 %v1132, %v3396
    %v3405 = vadd.f32 %v1146, %v3397
    %v3406 = vxor.u32 %v3402, 2147483648
    %v3407 = vmul.f32 %v3406, 1.442695
    %v3408 = vpow.pop %v3407
    %v3409 = vadd.f32 %v3408, 1.0
    %v3410 = vrcp.pop %v3409
    %v3411 = vmul.f32 %v3409, %v3410
    %v3412 = vsub.f32 1.0, %v3411
    %v3413 = vmul.f32 %v3410, %v3412
    %v3414 = vadd.f32 %v3410, %v3413
    %vm3415 = vweird.f32 %v3409
    %vm3416 = vweird.f32 %v3410
    %vm3417 = vmor %vm3415, %vm3416
    %v3418 = vsel %vm3417, %v3410, %v3414
    %v3419 = vand.u32 2147483647, %v3409
    %vm3420 = vcmp.eq.f32.partialorder %v3419, 8.507059e+37
    %v3421 = vand.u32 %v3409, 2147483648
    %v3422 = vor.u32 1.1754944e-38, %v3421
    %v3423 = vsel %vm3420, %v3422, %v3418
    %v3424 = vmul.f32 1.0, %v3423
    %v3425 = vxor.u32 %v3403, 2147483648
    %v3426 = vmul.f32 %v3425, 1.442695
    %v3427 = vpow.pop %v3426
    %v3428 = vadd.f32 %v3427, 1.0
    %v3429 = vrcp.pop %v3428
    %v3430 = vmul.f32 %v3428, %v3429
    %v3431 = vsub.f32 1.0, %v3430
    %v3432 = vmul.f32 %v3429, %v3431
    %v3433 = vadd.f32 %v3429, %v3432
    %vm3434 = vweird.f32 %v3428
    %vm3435 = vweird.f32 %v3429
    %vm3436 = vmor %vm3434, %vm3435
    %v3437 = vsel %vm3436, %v3429, %v3433
    %v3438 = vand.u32 2147483647, %v3428
    %vm3439 = vcmp.eq.f32.partialorder %v3438, 8.507059e+37
    %v3440 = vand.u32 %v3428, 2147483648
    %v3441 = vor.u32 1.1754944e-38, %v3440
    %v3442 = vsel %vm3439, %v3441, %v3437
    %v3443 = vmul.f32 1.0, %v3442
    %v3444 = vtanh.pop %v3404
    %v3445 = vxor.u32 %v3405, 2147483648
    %v3446 = vmul.f32 %v3445, 1.442695
    %v3447 = vpow.pop %v3446
    %v3448 = vadd.f32 %v3447, 1.0
    %v3449 = vrcp.pop %v3448
    %v3450 = vmul.f32 %v3448, %v3449
    %v3451 = vsub.f32 1.0, %v3450
    %v3452 = vmul.f32 %v3449, %v3451
    %v3453 = vadd.f32 %v3449, %v3452
    %vm3454 = vweird.f32 %v3448
    %vm3455 = vweird.f32 %v3449
    %vm3456 = vmor %vm3454, %vm3455
    %v3457 = vsel %vm3456, %v3449, %v3453
    %v3458 = vand.u32 2147483647, %v3448
    %vm3459 = vcmp.eq.f32.partialorder %v3458, 8.507059e+37
    %v3460 = vand.u32 %v3448, 2147483648
    %v3461 = vor.u32 1.1754944e-38, %v3460
    %v3462 = vsel %vm3459, %v3461, %v3457
    %v3463 = vmul.f32 1.0, %v3462
    %v3465 = vrot.slane %v3129, 6
    %v3467 = vmul.f32 %v3443, %v3465
    %v3468 = vmul.f32 %v3424, %v3444
    %v3469 = vadd.f32 %v3467, %v3468
    %v3470 = vtanh.pop %v3469
    %v3471 = vmul.f32 %v3463, %v3470
    %3473 = vst [vmem:[#allocation1] sm:$0xff] %v3471
    %s3474 = scalar_lea.vmem [#allocation1], 4
    %v3475 = vld [vmem:[%s3474] ss:$9 sm:$0xff]
    %s3476 = scalar_lea.vmem [#allocation1], 5
    %v3477 = vld [vmem:[%s3476] ss:$9 sm:$0xff]
    %3480 = vst [vmem:[#allocation2 + $0x6] sm:$0x1] %v3475
    %3481 = vst [vmem:[#allocation2 + $0xe] sm:$0x1] %v3477
    %v3482 = vpack.c.bf16 %v3471, %v3471
    %v3483 = vld [vmem:[%s8] sm:$0xff]
    %v3484 = vld [vmem:[%s8 + $0x8] sm:$0xff]
    %v3485 = vld [vmem:[%s8 + $0x10] sm:$0xff]
    %v3486 = vld [vmem:[%s8 + $0x18] sm:$0xff]
    %v3487 = vld [vmem:[%s8 + $0x20] sm:$0xff]
    %v3488 = vld [vmem:[%s8 + $0x28] sm:$0xff]
    %v3489 = vld [vmem:[%s8 + $0x30] sm:$0xff]
    %v3490 = vld [vmem:[%s8 + $0x38] sm:$0xff]
    %v3491 = vld [vmem:[%s8 + $0x40] sm:$0xff]
    %v3492 = vld [vmem:[%s8 + $0x48] sm:$0xff]
    %v3493 = vld [vmem:[%s8 + $0x50] sm:$0xff]
    %v3494 = vld [vmem:[%s8 + $0x58] sm:$0xff]
    %v3495 = vld [vmem:[%s8 + $0x60] sm:$0xff]
    %v3496 = vld [vmem:[%s8 + $0x68] sm:$0xff]
    %v3497 = vld [vmem:[%s8 + $0x70] sm:$0xff]
    %v3498 = vld [vmem:[%s8 + $0x78] sm:$0xff]
    %v3499 = vld [vmem:[%s8 + $0x80] sm:$0xff]
    %v3500 = vld [vmem:[%s8 + $0x88] sm:$0xff]
    %v3501 = vld [vmem:[%s8 + $0x90] sm:$0xff]
    %v3502 = vld [vmem:[%s8 + $0x98] sm:$0xff]
    %v3503 = vld [vmem:[%s8 + $0xa0] sm:$0xff]
    %v3504 = vld [vmem:[%s8 + $0xa8] sm:$0xff]
    %v3505 = vld [vmem:[%s8 + $0xb0] sm:$0xff]
    %v3506 = vld [vmem:[%s8 + $0xb8] sm:$0xff]
    %v3507 = vld [vmem:[%s8 + $0xc0] sm:$0xff]
    %v3508 = vld [vmem:[%s8 + $0xc8] sm:$0xff]
    %v3509 = vld [vmem:[%s8 + $0xd0] sm:$0xff]
    %v3510 = vld [vmem:[%s8 + $0xd8] sm:$0xff]
    %v3511 = vld [vmem:[%s8 + $0xe0] sm:$0xff]
    %v3512 = vld [vmem:[%s8 + $0xe8] sm:$0xff]
    %v3513 = vld [vmem:[%s8 + $0xf0] sm:$0xff]
    %v3514 = vld [vmem:[%s8 + $0xf8] sm:$0xff]
    %v3516 = vrot.slane %v3482, 2
    %v3550 = vunpack.c.l.b16 %v3483
    %v3551 = vunpack.c.h.b16 %v3483
    %v3552 = vunpack.c.l.b16 %v3484
    %v3553 = vunpack.c.h.b16 %v3484
    %v3554 = vunpack.c.l.b16 %v3485
    %v3555 = vunpack.c.h.b16 %v3485
    %v3556 = vunpack.c.l.b16 %v3486
    %v3557 = vunpack.c.h.b16 %v3486
    %v3558 = vunpack.c.l.b16 %v3487
    %v3559 = vunpack.c.h.b16 %v3487
    %v3560 = vunpack.c.l.b16 %v3488
    %v3561 = vunpack.c.h.b16 %v3488
    %v3562 = vunpack.c.l.b16 %v3489
    %v3563 = vunpack.c.h.b16 %v3489
    %v3564 = vunpack.c.l.b16 %v3490
    %v3565 = vunpack.c.h.b16 %v3490
    %v3566 = vunpack.c.l.b16 %v3491
    %v3567 = vunpack.c.h.b16 %v3491
    %v3568 = vunpack.c.l.b16 %v3492
    %v3569 = vunpack.c.h.b16 %v3492
    %v3570 = vunpack.c.l.b16 %v3493
    %v3571 = vunpack.c.h.b16 %v3493
    %v3572 = vunpack.c.l.b16 %v3494
    %v3573 = vunpack.c.h.b16 %v3494
    %v3574 = vunpack.c.l.b16 %v3495
    %v3575 = vunpack.c.h.b16 %v3495
    %v3576 = vunpack.c.l.b16 %v3496
    %v3577 = vunpack.c.h.b16 %v3496
    %v3578 = vunpack.c.l.b16 %v3497
    %v3579 = vunpack.c.h.b16 %v3497
    %v3580 = vunpack.c.l.b16 %v3498
    %v3581 = vunpack.c.h.b16 %v3498
    %v3582 = vunpack.c.l.b16 %v3499
    %v3583 = vunpack.c.h.b16 %v3499
    %v3584 = vunpack.c.l.b16 %v3500
    %v3585 = vunpack.c.h.b16 %v3500
    %v3586 = vunpack.c.l.b16 %v3501
    %v3587 = vunpack.c.h.b16 %v3501
    %v3588 = vunpack.c.l.b16 %v3502
    %v3589 = vunpack.c.h.b16 %v3502
    %v3590 = vunpack.c.l.b16 %v3503
    %v3591 = vunpack.c.h.b16 %v3503
    %v3592 = vunpack.c.l.b16 %v3504
    %v3593 = vunpack.c.h.b16 %v3504
    %v3594 = vunpack.c.l.b16 %v3505
    %v3595 = vunpack.c.h.b16 %v3505
    %v3596 = vunpack.c.l.b16 %v3506
    %v3597 = vunpack.c.h.b16 %v3506
    %v3598 = vunpack.c.l.b16 %v3507
    %v3599 = vunpack.c.h.b16 %v3507
    %v3600 = vunpack.c.l.b16 %v3508
    %v3601 = vunpack.c.h.b16 %v3508
    %v3602 = vunpack.c.l.b16 %v3509
    %v3603 = vunpack.c.h.b16 %v3509
    %v3604 = vunpack.c.l.b16 %v3510
    %v3605 = vunpack.c.h.b16 %v3510
    %v3606 = vunpack.c.l.b16 %v3511
    %v3607 = vunpack.c.h.b16 %v3511
    %v3608 = vunpack.c.l.b16 %v3512
    %v3609 = vunpack.c.h.b16 %v3512
    %v3610 = vunpack.c.l.b16 %v3513
    %v3611 = vunpack.c.h.b16 %v3513
    %v3612 = vunpack.c.l.b16 %v3514
    %v3613 = vunpack.c.h.b16 %v3514
    %v3614 = vpack.c.b16 %v3554, %v3550
    %v3615 = vpack.c.b16 %v3555, %v3551
    %v3616 = vpack.c.b16 %v3556, %v3552
    %v3617 = vpack.c.b16 %v3557, %v3553
    %v3618 = vpack.c.b16 %v3562, %v3558
    %v3619 = vpack.c.b16 %v3563, %v3559
    %v3620 = vpack.c.b16 %v3564, %v3560
    %v3621 = vpack.c.b16 %v3565, %v3561
    %v3622 = vpack.c.b16 %v3570, %v3566
    %v3623 = vpack.c.b16 %v3571, %v3567
    %v3624 = vpack.c.b16 %v3572, %v3568
    %v3625 = vpack.c.b16 %v3573, %v3569
    %v3626 = vpack.c.b16 %v3578, %v3574
    %v3627 = vpack.c.b16 %v3579, %v3575
    %v3628 = vpack.c.b16 %v3580, %v3576
    %v3629 = vpack.c.b16 %v3581, %v3577
    %v3630 = vpack.c.b16 %v3586, %v3582
    %v3631 = vpack.c.b16 %v3587, %v3583
    %v3632 = vpack.c.b16 %v3588, %v3584
    %v3633 = vpack.c.b16 %v3589, %v3585
    %v3634 = vpack.c.b16 %v3594, %v3590
    %v3635 = vpack.c.b16 %v3595, %v3591
    %v3636 = vpack.c.b16 %v3596, %v3592
    %v3637 = vpack.c.b16 %v3597, %v3593
    %v3638 = vpack.c.b16 %v3602, %v3598
    %v3639 = vpack.c.b16 %v3603, %v3599
    %v3640 = vpack.c.b16 %v3604, %v3600
    %v3641 = vpack.c.b16 %v3605, %v3601
    %v3642 = vpack.c.b16 %v3610, %v3606
    %v3643 = vpack.c.b16 %v3611, %v3607
    %v3644 = vpack.c.b16 %v3612, %v3608
    %v3645 = vpack.c.b16 %v3613, %v3609
    %3678 = vmatpush.bf16.msra.mxu0 %v3642
    %3679 = vmatpush.bf16.msra.mxu0 %v3638
    %3680 = vmatpush.bf16.msra.mxu0 %v3634
    %3681 = vmatpush.bf16.msra.mxu0 %v3630
    %3682 = vmatpush.bf16.msra.mxu0 %v3626
    %3683 = vmatpush.bf16.msra.mxu0 %v3622
    %3684 = vmatpush.bf16.msra.mxu0 %v3618
    %3685 = vmatpush.bf16.msra.mxu0 %v3614
    %3686 = vmatmul.bf16.gmra.mxu0 %v3516
    %v3687 = vpop.f32.mrf.mxu0
    %v3688 = vadd.f32 0.0, %v3687
    %v3689 = vpop.f32.mrf.mxu0
    %3690 = vdwg.mxu0
    %3691 = vmatpush.bf16.msra.mxu0 %v3643
    %3692 = vmatpush.bf16.msra.mxu0 %v3639
    %3693 = vmatpush.bf16.msra.mxu0 %v3635
    %3694 = vmatpush.bf16.msra.mxu0 %v3631
    %3695 = vmatpush.bf16.msra.mxu0 %v3627
    %3696 = vmatpush.bf16.msra.mxu0 %v3623
    %3697 = vmatpush.bf16.msra.mxu0 %v3619
    %3698 = vmatpush.bf16.msra.mxu0 %v3615
    %3699 = vmatmul.bf16.gmra.mxu0 %v3516
    %v3700 = vpop.f32.mrf.mxu0
    %v3701 = vadd.f32 0.0, %v3700
    %v3702 = vpop.f32.mrf.mxu0
    %3703 = vdwg.mxu0
    %3704 = vmatpush.bf16.msra.mxu0 %v3644
    %3705 = vmatpush.bf16.msra.mxu0 %v3640
    %3706 = vmatpush.bf16.msra.mxu0 %v3636
    %3707 = vmatpush.bf16.msra.mxu0 %v3632
    %3708 = vmatpush.bf16.msra.mxu0 %v3628
    %3709 = vmatpush.bf16.msra.mxu0 %v3624
    %3710 = vmatpush.bf16.msra.mxu0 %v3620
    %3711 = vmatpush.bf16.msra.mxu0 %v3616
    %3712 = vmatmul.bf16.gmra.mxu0 %v3516
    %v3713 = vpop.f32.mrf.mxu0
    %v3714 = vadd.f32 0.0, %v3713
    %v3715 = vpop.f32.mrf.mxu0
    %3716 = vdwg.mxu0
    %3717 = vmatpush.bf16.msra.mxu0 %v3645
    %3718 = vmatpush.bf16.msra.mxu0 %v3641
    %3719 = vmatpush.bf16.msra.mxu0 %v3637
    %3720 = vmatpush.bf16.msra.mxu0 %v3633
    %3721 = vmatpush.bf16.msra.mxu0 %v3629
    %3722 = vmatpush.bf16.msra.mxu0 %v3625
    %3723 = vmatpush.bf16.msra.mxu0 %v3621
    %3724 = vmatpush.bf16.msra.mxu0 %v3617
    %3725 = vmatmul.bf16.gmra.mxu0 %v3516
    %v3726 = vpop.f32.mrf.mxu0
    %v3727 = vadd.f32 0.0, %v3726
    %v3728 = vpop.f32.mrf.mxu0
    %3729 = vdwg.mxu0
    %v3734 = vrot.slane %v3688, 2
    %v3735 = vrot.slane %v3701, 2
    %v3736 = vrot.slane %v3714, 2
    %v3737 = vrot.slane %v3727, 2
    %v3742 = vadd.f32 %v1104, %v3734
    %v3743 = vadd.f32 %v1118, %v3735
    %v3744 = vadd.f32 %v1132, %v3736
    %v3745 = vadd.f32 %v1146, %v3737
    %v3746 = vxor.u32 %v3742, 2147483648
    %v3747 = vmul.f32 %v3746, 1.442695
    %v3748 = vpow.pop %v3747
    %v3749 = vadd.f32 %v3748, 1.0
    %v3750 = vrcp.pop %v3749
    %v3751 = vmul.f32 %v3749, %v3750
    %v3752 = vsub.f32 1.0, %v3751
    %v3753 = vmul.f32 %v3750, %v3752
    %v3754 = vadd.f32 %v3750, %v3753
    %vm3755 = vweird.f32 %v3749
    %vm3756 = vweird.f32 %v3750
    %vm3757 = vmor %vm3755, %vm3756
    %v3758 = vsel %vm3757, %v3750, %v3754
    %v3759 = vand.u32 2147483647, %v3749
    %vm3760 = vcmp.eq.f32.partialorder %v3759, 8.507059e+37
    %v3761 = vand.u32 %v3749, 2147483648
    %v3762 = vor.u32 1.1754944e-38, %v3761
    %v3763 = vsel %vm3760, %v3762, %v3758
    %v3764 = vmul.f32 1.0, %v3763
    %v3765 = vxor.u32 %v3743, 2147483648
    %v3766 = vmul.f32 %v3765, 1.442695
    %v3767 = vpow.pop %v3766
    %v3768 = vadd.f32 %v3767, 1.0
    %v3769 = vrcp.pop %v3768
    %v3770 = vmul.f32 %v3768, %v3769
    %v3771 = vsub.f32 1.0, %v3770
    %v3772 = vmul.f32 %v3769, %v3771
    %v3773 = vadd.f32 %v3769, %v3772
    %vm3774 = vweird.f32 %v3768
    %vm3775 = vweird.f32 %v3769
    %vm3776 = vmor %vm3774, %vm3775
    %v3777 = vsel %vm3776, %v3769, %v3773
    %v3778 = vand.u32 2147483647, %v3768
    %vm3779 = vcmp.eq.f32.partialorder %v3778, 8.507059e+37
    %v3780 = vand.u32 %v3768, 2147483648
    %v3781 = vor.u32 1.1754944e-38, %v3780
    %v3782 = vsel %vm3779, %v3781, %v3777
    %v3783 = vmul.f32 1.0, %v3782
    %v3784 = vtanh.pop %v3744
    %v3785 = vxor.u32 %v3745, 2147483648
    %v3786 = vmul.f32 %v3785, 1.442695
    %v3787 = vpow.pop %v3786
    %v3788 = vadd.f32 %v3787, 1.0
    %v3789 = vrcp.pop %v3788
    %v3790 = vmul.f32 %v3788, %v3789
    %v3791 = vsub.f32 1.0, %v3790
    %v3792 = vmul.f32 %v3789, %v3791
    %v3793 = vadd.f32 %v3789, %v3792
    %vm3794 = vweird.f32 %v3788
    %vm3795 = vweird.f32 %v3789
    %vm3796 = vmor %vm3794, %vm3795
    %v3797 = vsel %vm3796, %v3789, %v3793
    %v3798 = vand.u32 2147483647, %v3788
    %vm3799 = vcmp.eq.f32.partialorder %v3798, 8.507059e+37
    %v3800 = vand.u32 %v3788, 2147483648
    %v3801 = vor.u32 1.1754944e-38, %v3800
    %v3802 = vsel %vm3799, %v3801, %v3797
    %v3803 = vmul.f32 1.0, %v3802
    %v3805 = vrot.slane %v3469, 6
    %v3807 = vmul.f32 %v3783, %v3805
    %v3808 = vmul.f32 %v3764, %v3784
    %v3809 = vadd.f32 %v3807, %v3808
    %v3810 = vtanh.pop %v3809
    %v3811 = vmul.f32 %v3803, %v3810
    %3813 = vst [vmem:[#allocation1] sm:$0xff] %v3811
    %s3814 = scalar_lea.vmem [#allocation1], 6
    %v3815 = vld [vmem:[%s3814] ss:$9 sm:$0xff]
    %s3816 = scalar_lea.vmem [#allocation1], 7
    %v3817 = vld [vmem:[%s3816] ss:$9 sm:$0xff]
    %3820 = vst [vmem:[#allocation2 + $0x7] sm:$0x1] %v3815
    %3821 = vst [vmem:[#allocation2 + $0xf] sm:$0x1] %v3817
    %v3822 = vld [vmem:[#allocation2] sm:$0xff]
    %v3823 = vld [vmem:[#allocation2 + $0x8] sm:$0xff]
    %v3824 = vpack.c.bf16 %v3823, %v3822
    %v3825 = vld [vmem:[%s9] sm:$0xff]
    %v3826 = vld [vmem:[%s9 + $0x8] sm:$0xff]
    %v3827 = vld [vmem:[%s9 + $0x10] sm:$0xff]
    %v3828 = vld [vmem:[%s9 + $0x18] sm:$0xff]
    %v3829 = vld [vmem:[%s9 + $0x20] sm:$0xff]
    %v3830 = vld [vmem:[%s9 + $0x28] sm:$0xff]
    %v3831 = vld [vmem:[%s9 + $0x30] sm:$0xff]
    %v3832 = vld [vmem:[%s9 + $0x38] sm:$0xff]
    %v3833 = vld [vmem:[%s9 + $0x40] sm:$0xff]
    %v3834 = vld [vmem:[%s9 + $0x48] sm:$0xff]
    %v3835 = vld [vmem:[%s9 + $0x50] sm:$0xff]
    %v3836 = vld [vmem:[%s9 + $0x58] sm:$0xff]
    %v3837 = vld [vmem:[%s9 + $0x60] sm:$0xff]
    %v3838 = vld [vmem:[%s9 + $0x68] sm:$0xff]
    %v3839 = vld [vmem:[%s9 + $0x70] sm:$0xff]
    %v3840 = vld [vmem:[%s9 + $0x78] sm:$0xff]
    %v3841 = vld [vmem:[%s10] sm:$0x3]
    %v3843 = vperm.slane %v3841, 0
    %v3844 = vperm.slane %v3841, 1
    %v3863 = vunpack.c.l.b16 %v3825
    %v3864 = vunpack.c.h.b16 %v3825
    %v3865 = vunpack.c.l.b16 %v3826
    %v3866 = vunpack.c.h.b16 %v3826
    %v3867 = vunpack.c.l.b16 %v3827
    %v3868 = vunpack.c.h.b16 %v3827
    %v3869 = vunpack.c.l.b16 %v3828
    %v3870 = vunpack.c.h.b16 %v3828
    %v3871 = vunpack.c.l.b16 %v3829
    %v3872 = vunpack.c.h.b16 %v3829
    %v3873 = vunpack.c.l.b16 %v3830
    %v3874 = vunpack.c.h.b16 %v3830
    %v3875 = vunpack.c.l.b16 %v3831
    %v3876 = vunpack.c.h.b16 %v3831
    %v3877 = vunpack.c.l.b16 %v3832
    %v3878 = vunpack.c.h.b16 %v3832
    %v3879 = vunpack.c.l.b16 %v3833
    %v3880 = vunpack.c.h.b16 %v3833
    %v3881 = vunpack.c.l.b16 %v3834
    %v3882 = vunpack.c.h.b16 %v3834
    %v3883 = vunpack.c.l.b16 %v3835
    %v3884 = vunpack.c.h.b16 %v3835
    %v3885 = vunpack.c.l.b16 %v3836
    %v3886 = vunpack.c.h.b16 %v3836
    %v3887 = vunpack.c.l.b16 %v3837
    %v3888 = vunpack.c.h.b16 %v3837
    %v3889 = vunpack.c.l.b16 %v3838
    %v3890 = vunpack.c.h.b16 %v3838
    %v3891 = vunpack.c.l.b16 %v3839
    %v3892 = vunpack.c.h.b16 %v3839
    %v3893 = vunpack.c.l.b16 %v3840
    %v3894 = vunpack.c.h.b16 %v3840
    %v3895 = vpack.c.b16 %v3865, %v3863
    %v3896 = vpack.c.b16 %v3866, %v3864
    %v3897 = vpack.c.b16 %v3869, %v3867
    %v3898 = vpack.c.b16 %v3870, %v3868
    %v3899 = vpack.c.b16 %v3873, %v3871
    %v3900 = vpack.c.b16 %v3874, %v3872
    %v3901 = vpack.c.b16 %v3877, %v3875
    %v3902 = vpack.c.b16 %v3878, %v3876
    %v3903 = vpack.c.b16 %v3881, %v3879
    %v3904 = vpack.c.b16 %v3882, %v3880
    %v3905 = vpack.c.b16 %v3885, %v3883
    %v3906 = vpack.c.b16 %v3886, %v3884
    %v3907 = vpack.c.b16 %v3889, %v3887
    %v3908 = vpack.c.b16 %v3890, %v3888
    %v3909 = vpack.c.b16 %v3893, %v3891
    %v3910 = vpack.c.b16 %v3894, %v3892
    %3927 = vmatpush.bf16.msra.mxu0 %v3909
    %3928 = vmatpush.bf16.msra.mxu0 %v3907
    %3929 = vmatpush.bf16.msra.mxu0 %v3905
    %3930 = vmatpush.bf16.msra.mxu0 %v3903
    %3931 = vmatpush.bf16.msra.mxu0 %v3901
    %3932 = vmatpush.bf16.msra.mxu0 %v3899
    %3933 = vmatpush.bf16.msra.mxu0 %v3897
    %3934 = vmatpush.bf16.msra.mxu0 %v3895
    %3935 = vmatmul.bf16.gmra.mxu0 %v3824
    %v3936 = vpop.f32.mrf.mxu0
    %v3937 = vadd.f32 %v3843, %v3936
    %v3938 = vpop.f32.mrf.mxu0
    %v3939 = vadd.f32 %v3843, %v3938
    %3940 = vdwg.mxu0
    %3941 = vmatpush.bf16.msra.mxu0 %v3910
    %3942 = vmatpush.bf16.msra.mxu0 %v3908
    %3943 = vmatpush.bf16.msra.mxu0 %v3906
    %3944 = vmatpush.bf16.msra.mxu0 %v3904
    %3945 = vmatpush.bf16.msra.mxu0 %v3902
    %3946 = vmatpush.bf16.msra.mxu0 %v3900
    %3947 = vmatpush.bf16.msra.mxu0 %v3898
    %3948 = vmatpush.bf16.msra.mxu0 %v3896
    %3949 = vmatmul.bf16.gmra.mxu0 %v3824
    %v3950 = vpop.f32.mrf.mxu0
    %v3951 = vadd.f32 %v3844, %v3950
    %v3952 = vpop.f32.mrf.mxu0
    %v3953 = vadd.f32 %v3844, %v3952
    %3954 = vdwg.mxu0
    %3955 = vst [vmem:[#allocation3] sm:$0xff] %v3937
    %3956 = vst [vmem:[#allocation3 + $0x8] sm:$0xff] %v3951
    %3957 = vst [vmem:[#allocation3 + $0x10] sm:$0xff] %v3939
    %3958 = vst [vmem:[#allocation3 + $0x18] sm:$0xff] %v3953
    // Predicated region
    $region46: #{image_captioning_forward.1} parent=1 // pred_check
      _
    $region47: #{image_captioning_forward.1} parent=1 // pred_check_branch
      %3960 = sbr.rel (0) target = $region49
    $region48: #{image_captioning_forward.1} parent=1 // pred_region
      %3962 = vsyncadd [#allocation4], 0
      %s3963 = sshll.u32 [#allocation3], 4
      %s3964 = int_to_ptr.vmem [resolvable:$true] %s3963
      %s3965 = sshll.u32 %s11, 4
      %s3966 = int_to_ptr.hbm [resolvable:$true] %s3965
      %3971 = dma.vmem_to_hbm [thread:$0]  %s3964, 512, %s3966, [#allocation4], 256, 256, 16
    $region49: #{image_captioning_forward.1} parent=1 // pred_fallthru
      _
    // Predicated region
    $region50: #{image_captioning_forward.1} parent=1 // pred_check
      _
    $region51: #{image_captioning_forward.1} parent=1 // pred_check_branch
      %3973 = sbr.rel (0) target = $region53
    $region52: #{image_captioning_forward.1} parent=1 // pred_region
      %3975 = dma.done [#allocation4], 512
    $region53: #{image_captioning_forward.1} parent=1 // pred_fallthru
      _
    %3976 = vsyncpa [#allocation4], 1

</llo_original>
